<compile_context>
chip_gen: v7x
topology: tpu7x:2x2x1
jax: 0.10.0
libtpu: 0.0.40
codegen_flags: <defaults>
</compile_context>

<pallas_src>
import functools

import jax
import jax.numpy as jnp
import numpy as np
from jax import lax
from jax.experimental import pallas as pl
from jax.experimental.pallas import tpu as pltpu

EPS = 1e-5


# ----------------------------------------------------------------------------
# In-kernel helpers
# ----------------------------------------------------------------------------
def _channel_stats(v):
  """Per-channel [sum, sum_of_squares] over all leading dims. Returns (2, C)."""
  flat = v.reshape(-1, v.shape[-1])
  s = jnp.sum(flat, axis=0, keepdims=True)
  sq = jnp.sum(flat * flat, axis=0, keepdims=True)
  return jnp.concatenate([s, sq], axis=0)


def _shift2d(x, dh, dw):
  """y[h, w, c] = x[h+dh, w+dw, c], zero where out of range (static shifts)."""
  H, W, C = x.shape
  if dh > 0:
    x = jnp.concatenate([x[dh:, :, :], jnp.zeros((dh, W, C), x.dtype)], axis=0)
  elif dh < 0:
    x = jnp.concatenate([jnp.zeros((-dh, W, C), x.dtype), x[:H + dh, :, :]],
                        axis=0)
  if dw > 0:
    x = jnp.concatenate([x[:, dw:, :], jnp.zeros((H, dw, C), x.dtype)], axis=1)
  elif dw < 0:
    x = jnp.concatenate([jnp.zeros((H, -dw, C), x.dtype), x[:, :W + dw, :]],
                        axis=1)
  return x


def _depthwise3x3(x, w, dilation):
  """x: (H, W, C) f32, w: (3, 3, C); 'same' depthwise conv (padding=dilation)."""
  acc = x * w[1, 1, :]                                   # center tap, no shift
  for kh in range(3):
    for kw in range(3):
      if kh == 1 and kw == 1:
        continue
      tap = _shift2d(x, (kh - 1) * dilation, (kw - 1) * dilation)
      acc = acc + tap * w[kh, kw, :]
  return acc


# ----------------------------------------------------------------------------
# Kernels (one batch-image tile per grid step)
# ----------------------------------------------------------------------------
def _stage1_kernel(x_ref, dw_ref, wskip_ref,
                   dw_out_ref, dw_stats_ref, skip_out_ref, skip_stats_ref,
                   *, dilation):
  """ReLU -> depthwise3x3 (stage 1) and the skip 1x1 matmul, + partial stats."""
  H, W, Cin = x_ref.shape
  Cout = skip_out_ref.shape[-1]
  xr = jnp.maximum(x_ref[...], 0.0)                      # ReLU shared by both
  d = _depthwise3x3(xr, dw_ref[...], dilation)
  dw_out_ref[...] = d
  dw_stats_ref[...] = _channel_stats(d)
  sk = jnp.dot(xr.reshape(H * W, Cin).astype(jnp.bfloat16), wskip_ref[...],
               preferred_element_type=jnp.float32)
  skip_out_ref[...] = sk.reshape(H, W, Cout)
  skip_stats_ref[...] = _channel_stats(sk)


def _affine_relu_dw_kernel(x_ref, scale_ref, bias_ref, dw_ref,
                           out_ref, stats_ref, *, dilation):
  """(prev pointwise-BN affine) -> ReLU -> depthwise3x3, + partial stats."""
  y = jnp.maximum(x_ref[...] * scale_ref[0, :] + bias_ref[0, :], 0.0)
  d = _depthwise3x3(y, dw_ref[...], dilation)
  out_ref[...] = d
  stats_ref[...] = _channel_stats(d)


def _pointwise_kernel(h_ref, w_ref, b_ref, out_ref, stats_ref):
  """1x1 conv with the depthwise-BN folded into (w, b); bf16 MXU, f32 acc."""
  H, W, Cin = h_ref.shape
  Cout = out_ref.shape[-1]
  y = jnp.dot(h_ref[...].reshape(H * W, Cin).astype(jnp.bfloat16), w_ref[...],
              preferred_element_type=jnp.float32) + b_ref[0, :]
  out_ref[...] = y.reshape(H, W, Cout)
  stats_ref[...] = _channel_stats(y)


def _epilogue_kernel(y_ref, sk_ref, sy_ref, by_ref, ss_ref, bs_ref, out_ref):
  """Final pointwise-BN affine + skip-BN affine + residual add, per tile."""
  out_ref[...] = (y_ref[...] * sy_ref[0, :] + by_ref[0, :] +
                  sk_ref[...] * ss_ref[0, :] + bs_ref[0, :])


# ----------------------------------------------------------------------------
# Spec / compiler-param helpers
# ----------------------------------------------------------------------------
def _act_spec(H, W, C):
  return pl.BlockSpec((None, H, W, C), lambda n: (n, 0, 0, 0))


def _stats_spec(C):
  return pl.BlockSpec((None, 2, C), lambda n: (n, 0, 0))


def _bcast_spec(shape):
  nd = len(shape)
  return pl.BlockSpec(shape, lambda n: (0,) * nd)


def _nbytes(shape, dtype):
  return int(np.prod(shape)) * jnp.dtype(dtype).itemsize


def _cparams(step_bytes):
  # ~2x for the double-buffered auto pipeline + headroom for compiler temps,
  # clamped to a v7x-safe budget (64 MiB physical VMEM per TC on v7x).
  limit = int(min(max(2 * step_bytes + (8 << 20), 16 << 20), 48 << 20))
  return pltpu.CompilerParams(dimension_semantics=("parallel",),
                              vmem_limit_bytes=limit)


# ----------------------------------------------------------------------------
# Pass wrappers
# ----------------------------------------------------------------------------
def _run_stage1(x, dw_w, w_skip_bf16, dilation):
  N, H, W, Cin = x.shape
  Cout = w_skip_bf16.shape[1]
  step = (2 * _nbytes((H, W, Cin), jnp.float32)
          + _nbytes((H, W, Cout), jnp.float32)
          + _nbytes((3, 3, Cin), jnp.float32)
          + _nbytes((Cin, Cout), jnp.bfloat16)
          + _nbytes((2, Cin), jnp.float32) + _nbytes((2, Cout), jnp.float32))
  return pl.pallas_call(
      functools.partial(_stage1_kernel, dilation=dilation),
      grid=(N,),
      in_specs=[_act_spec(H, W, Cin), _bcast_spec((3, 3, Cin)),
                _bcast_spec((Cin, Cout))],
      out_specs=(_act_spec(H, W, Cin), _stats_spec(Cin),
                 _act_spec(H, W, Cout), _stats_spec(Cout)),
      out_shape=(jax.ShapeDtypeStruct((N, H, W, Cin), jnp.float32),
                 jax.ShapeDtypeStruct((N, 2, Cin), jnp.float32),
                 jax.ShapeDtypeStruct((N, H, W, Cout), jnp.float32),
                 jax.ShapeDtypeStruct((N, 2, Cout), jnp.float32)),
      compiler_params=_cparams(step),
  )(x, dw_w, w_skip_bf16)


def _run_affine_relu_dw(x, scale, bias, dw_w, dilation):
  N, H, W, C = x.shape
  step = (2 * _nbytes((H, W, C), jnp.float32)
          + _nbytes((3, 3, C), jnp.float32)
          + 2 * _nbytes((1, C), jnp.float32) + _nbytes((2, C), jnp.float32))
  return pl.pallas_call(
      functools.partial(_affine_relu_dw_kernel, dilation=dilation),
      grid=(N,),
      in_specs=[_act_spec(H, W, C), _bcast_spec((1, C)), _bcast_spec((1, C)),
                _bcast_spec((3, 3, C))],
      out_specs=(_act_spec(H, W, C), _stats_spec(C)),
      out_shape=(jax.ShapeDtypeStruct((N, H, W, C), jnp.float32),
                 jax.ShapeDtypeStruct((N, 2, C), jnp.float32)),
      compiler_params=_cparams(step),
  )(x, scale, bias, dw_w)


def _run_pointwise(h, w_bf16, bias):
  N, H, W, Cin = h.shape
  Cout = w_bf16.shape[1]
  step = (_nbytes((H, W, Cin), jnp.float32) + _nbytes((H, W, Cout), jnp.float32)
          + _nbytes((Cin, Cout), jnp.bfloat16)
          + _nbytes((1, Cout), jnp.float32) + _nbytes((2, Cout), jnp.float32))
  return pl.pallas_call(
      _pointwise_kernel,
      grid=(N,),
      in_specs=[_act_spec(H, W, Cin), _bcast_spec((Cin, Cout)),
                _bcast_spec((1, Cout))],
      out_specs=(_act_spec(H, W, Cout), _stats_spec(Cout)),
      out_shape=(jax.ShapeDtypeStruct((N, H, W, Cout), jnp.float32),
                 jax.ShapeDtypeStruct((N, 2, Cout), jnp.float32)),
      compiler_params=_cparams(step),
  )(h, w_bf16, bias)


def _run_epilogue(y, skip, sy, by, ss, bs):
  N, H, W, C = y.shape
  step = 3 * _nbytes((H, W, C), jnp.float32) + 4 * _nbytes((1, C), jnp.float32)
  return pl.pallas_call(
      _epilogue_kernel,
      grid=(N,),
      in_specs=[_act_spec(H, W, C), _act_spec(H, W, C),
                _bcast_spec((1, C)), _bcast_spec((1, C)),
                _bcast_spec((1, C)), _bcast_spec((1, C))],
      out_specs=_act_spec(H, W, C),
      out_shape=jax.ShapeDtypeStruct((N, H, W, C), jnp.float32),
      compiler_params=_cparams(step),
  )(y, skip, sy, by, ss, bs)


# ----------------------------------------------------------------------------
# Host-side (tiny per-channel) BatchNorm math
# ----------------------------------------------------------------------------
def _bn_scale_bias(stats_partial, bn, m):
  """Reduce per-tile partial stats -> training-mode BN as y = x*s + b."""
  tot = jnp.sum(stats_partial, axis=0)                 # (2, C)
  mean = tot[0] / m
  var = tot[1] / m - mean * mean                       # biased variance
  s = bn[0] * lax.rsqrt(var + EPS)
  b = bn[1] - mean * s
  return s, b


def _fold_bn_into_pw(stats_partial, bn_d, pw, m):
  """Fold the depthwise-BN normalize into the pointwise weight + a bias."""
  s, b = _bn_scale_bias(stats_partial, bn_d, m)
  w_f = (s[:, None] * pw).astype(jnp.bfloat16)         # (Cin, Cout) bf16
  bias = (b @ pw)[None, :].astype(jnp.float32)         # (1, Cout) f32
  return w_f, bias


# ----------------------------------------------------------------------------
# Forward
# ----------------------------------------------------------------------------
@functools.partial(jax.jit, static_argnames=("dilation",))
def _forward(x_nchw, params, dilation):
  N, _, H, W = x_nchw.shape
  m = float(N * H * W)
  x = jnp.transpose(x_nchw, (0, 2, 3, 1)).astype(jnp.float32)   # -> NHWC

  w_skip = params["w_skip"].astype(jnp.bfloat16)

  # ---- stage 1 (+ skip branch, computed once and parked in HBM) ----
  dw1, st_dw1, skip_raw, st_skip = _run_stage1(x, params["dw1"], w_skip,
                                               dilation)
  w1, b1 = _fold_bn_into_pw(st_dw1, params["bn_d1"], params["pw1"], m)
  pw1, st_pw1 = _run_pointwise(dw1, w1, b1)
  s1, c1 = _bn_scale_bias(st_pw1, params["bn_p1"], m)

  # ---- stage 2 ----
  dw2, st_dw2 = _run_affine_relu_dw(pw1, s1[None, :], c1[None, :],
                                    params["dw2"], dilation)
  w2, b2 = _fold_bn_into_pw(st_dw2, params["bn_d2"], params["pw2"], m)
  pw2, st_pw2 = _run_pointwise(dw2, w2, b2)
  s2, c2 = _bn_scale_bias(st_pw2, params["bn_p2"], m)

  # ---- stage 3 ----
  dw3, st_dw3 = _run_affine_relu_dw(pw2, s2[None, :], c2[None, :],
                                    params["dw3"], dilation)
  w3, b3 = _fold_bn_into_pw(st_dw3, params["bn_d3"], params["pw3"], m)
  pw3, st_pw3 = _run_pointwise(dw3, w3, b3)
  s3, c3 = _bn_scale_bias(st_pw3, params["bn_p3"], m)
  ss, cs = _bn_scale_bias(st_skip, params["bn_skip"], m)

  # ---- epilogue: final BN affines + residual add, per tile ----
  out = _run_epilogue(pw3, skip_raw, s3[None, :], c3[None, :],
                      ss[None, :], cs[None, :])
  return jnp.transpose(out, (0, 3, 1, 2))               # -> NCHW


def xception_block_forward(x_nchw, params, dilation=1):
  return _forward(x_nchw, params, dilation=dilation)


# ----------------------------------------------------------------------------
# Params + pure-JAX reference + test
# ----------------------------------------------------------------------------
def init_params(key, in_ch, out_ch):
  """Deterministic synthetic parameters (shapes follow the PyTorch __init__)."""
  ks = jax.random.split(key, 16)

  def conv_w(k, shape, fan_in):
    bound = 1.0 / np.sqrt(fan_in)
    return jax.random.uniform(k, shape, jnp.float32, -bound, bound)

  def bn_p(k, c):
    gamma = 1.0 + 0.1 * jax.random.normal(k, (c,), jnp.float32)
    beta = 0.1 * jax.random.normal(jax.random.fold_in(k, 1), (c,), jnp.float32)
    return jnp.stack([gamma, beta], axis=0)  # (2, C)

  return {
      "w_skip": conv_w(ks[0], (in_ch, out_ch), in_ch),
      "bn_skip": bn_p(ks[1], out_ch),
      "dw1": conv_w(ks[2], (3, 3, in_ch), 9),
      "bn_d1": bn_p(ks[3], in_ch),
      "pw1": conv_w(ks[4], (in_ch, out_ch), in_ch),
      "bn_p1": bn_p(ks[5], out_ch),
      "dw2": conv_w(ks[6], (3, 3, out_ch), 9),
      "bn_d2": bn_p(ks[7], out_ch),
      "pw2": conv_w(ks[8], (out_ch, out_ch), out_ch),
      "bn_p2": bn_p(ks[9], out_ch),
      "dw3": conv_w(ks[10], (3, 3, out_ch), 9),
      "bn_d3": bn_p(ks[11], out_ch),
      "pw3": conv_w(ks[12], (out_ch, out_ch), out_ch),
      "bn_p3": bn_p(ks[13], out_ch),
  }


def reference_forward(x_nchw, params, dilation=1):
  """Plain-JAX f32 reference (lax.conv) for a numerical sanity check."""
  x = jnp.transpose(x_nchw, (0, 2, 3, 1)).astype(jnp.float32)
  p = dilation

  def relu(v):
    return jnp.maximum(v, 0.0)

  def bn(v, bnp):
    mean = jnp.mean(v, axis=(0, 1, 2), keepdims=True)
    var = jnp.mean((v - mean) ** 2, axis=(0, 1, 2), keepdims=True)
    return (v - mean) * (bnp[0] * lax.rsqrt(var + EPS)) + bnp[1]

  def dwconv(v, w):
    c = v.shape[-1]
    return lax.conv_general_dilated(
        v, w.reshape(3, 3, 1, c), window_strides=(1, 1),
        padding=[(p, p), (p, p)], rhs_dilation=(dilation, dilation),
        dimension_numbers=("NHWC", "HWIO", "NHWC"), feature_group_count=c)

  def pwconv(v, w):
    return jnp.einsum("nhwc,cd->nhwd", v, w)

  def seq_conv_bn(v, dw, bnd, pw, bnp):
    h = bn(dwconv(v, dw), bnd)
    return bn(pwconv(h, pw), bnp)

  xr = relu(x)
  skip = bn(pwconv(xr, params["w_skip"]), params["bn_skip"])
  h = seq_conv_bn(xr, params["dw1"], params["bn_d1"],
                  params["pw1"], params["bn_p1"])
  h = seq_conv_bn(relu(h), params["dw2"], params["bn_d2"],
                  params["pw2"], params["bn_p2"])
  h = seq_conv_bn(relu(h), params["dw3"], params["bn_d3"],
                  params["pw3"], params["bn_p3"])
  return jnp.transpose(h + skip, (0, 3, 1, 2))


if __name__ == "__main__":
  key = jax.random.PRNGKey(0)
  in_ch, out_ch = 4, 8
  N, H, W = 2, 16, 16
  kx, kp = jax.random.split(key)
  x = jax.random.normal(kx, (N, in_ch, H, W), dtype=jnp.float32)
  params = init_params(kp, in_ch, out_ch)

  out = xception_block_forward(x, params, dilation=1)
  out = jax.block_until_ready(out)
  assert out.shape == (N, out_ch, H, W)

  ref = reference_forward(x, params, dilation=1)
  # Tolerance accounts for the bf16 MXU operands (f32 accumulation).
  np.testing.assert_allclose(np.asarray(out), np.asarray(ref),
                             rtol=2e-2, atol=2e-2)
  print("KERNEL_OK")
</pallas_src>

<mosaic_0001>
module attributes {stable_mosaic.version = 11 : i64} {
  func.func @_stage1_kernel(%arg0: i32, %arg1: memref<1x16x16x4xf32, #tpu.memory_space<vmem>>, %arg2: memref<3x3x4xf32, #tpu.memory_space<vmem>>, %arg3: memref<4x8xbf16, #tpu.memory_space<vmem>>, %arg4: memref<1x16x16x4xf32, #tpu.memory_space<vmem>>, %arg5: memref<1x2x4xf32, #tpu.memory_space<vmem>>, %arg6: memref<1x16x16x8xf32, #tpu.memory_space<vmem>>, %arg7: memref<1x2x8xf32, #tpu.memory_space<vmem>>) attributes {dimension_semantics = [#tpu.dimension_semantics<parallel>], iteration_bounds = array<i64: 2>, scalar_prefetch = 0 : i64, scratch_operands = 0 : i64, tpu.core_type = #tpu.core_type<tc>, window_params = [{transform_indices = @transform_0, window_bounds = array<i64: 1, 16, 16, 4>}, {pipeline_mode = #tpu.pipeline_mode<synchronous>, transform_indices = @transform_1, window_bounds = array<i64: 3, 3, 4>}, {pipeline_mode = #tpu.pipeline_mode<synchronous>, transform_indices = @transform_2, window_bounds = array<i64: 4, 8>}, {transform_indices = @transform_3, window_bounds = array<i64: 1, 16, 16, 4>}, {transform_indices = @transform_4, window_bounds = array<i64: 1, 2, 4>}, {transform_indices = @transform_5, window_bounds = array<i64: 1, 16, 16, 8>}, {transform_indices = @transform_6, window_bounds = array<i64: 1, 2, 8>}]} {
    %c0 = arith.constant 0 : index
    %c0_0 = arith.constant 0 : index
    %c0_1 = arith.constant 0 : index
    %c0_2 = arith.constant 0 : index
    %0 = vector.load %arg1[%c0, %c0_0, %c0_1, %c0_2] : memref<1x16x16x4xf32, #tpu.memory_space<vmem>>, vector<1x16x16x4xf32>
    %1 = vector.shape_cast %0 : vector<1x16x16x4xf32> to vector<16x16x4xf32>
    %cst = arith.constant 0.000000e+00 : f32
    %2 = vector.broadcast %cst : f32 to vector<16x16x4xf32>
    %3 = arith.maximumf %1, %2 : vector<16x16x4xf32>
    %c0_3 = arith.constant 0 : index
    %c0_4 = arith.constant 0 : index
    %c0_5 = arith.constant 0 : index
    %4 = vector.load %arg2[%c0_3, %c0_4, %c0_5] : memref<3x3x4xf32, #tpu.memory_space<vmem>>, vector<3x3x4xf32>
    %5 = vector.extract_strided_slice %4 {offsets = [1, 1, 0], sizes = [1, 1, 4], strides = [1, 1, 1]} : vector<3x3x4xf32> to vector<1x1x4xf32>
    %6 = vector.shape_cast %5 : vector<1x1x4xf32> to vector<4xf32>
    %7 = vector.shape_cast %6 : vector<4xf32> to vector<1x1x4xf32>
    %8 = vector.broadcast %7 : vector<1x1x4xf32> to vector<16x16x4xf32>
    %9 = arith.mulf %3, %8 : vector<16x16x4xf32>
    %cst_6 = arith.constant 0.000000e+00 : f32
    %10 = vector.broadcast %cst_6 : f32 to vector<1x16x4xf32>
    %11 = vector.extract_strided_slice %3 {offsets = [0, 0, 0], sizes = [15, 16, 4], strides = [1, 1, 1]} : vector<16x16x4xf32> to vector<15x16x4xf32>
    %12 = tpu.concatenate %10, %11 in 0 : vector<1x16x4xf32>, vector<15x16x4xf32> -> vector<16x16x4xf32>
    %cst_7 = arith.constant 0.000000e+00 : f32
    %13 = vector.broadcast %cst_7 : f32 to vector<16x1x4xf32>
    %14 = vector.extract_strided_slice %12 {offsets = [0, 0, 0], sizes = [16, 15, 4], strides = [1, 1, 1]} : vector<16x16x4xf32> to vector<16x15x4xf32>
    %15 = tpu.concatenate %13, %14 in 1 : vector<16x1x4xf32>, vector<16x15x4xf32> -> vector<16x16x4xf32>
    %16 = vector.extract_strided_slice %4 {offsets = [0, 0, 0], sizes = [1, 1, 4], strides = [1, 1, 1]} : vector<3x3x4xf32> to vector<1x1x4xf32>
    %17 = vector.shape_cast %16 : vector<1x1x4xf32> to vector<4xf32>
    %18 = vector.shape_cast %17 : vector<4xf32> to vector<1x1x4xf32>
    %19 = vector.broadcast %18 : vector<1x1x4xf32> to vector<16x16x4xf32>
    %20 = arith.mulf %15, %19 : vector<16x16x4xf32>
    %21 = arith.addf %9, %20 : vector<16x16x4xf32>
    %cst_8 = arith.constant 0.000000e+00 : f32
    %22 = vector.broadcast %cst_8 : f32 to vector<1x16x4xf32>
    %23 = vector.extract_strided_slice %3 {offsets = [0, 0, 0], sizes = [15, 16, 4], strides = [1, 1, 1]} : vector<16x16x4xf32> to vector<15x16x4xf32>
    %24 = tpu.concatenate %22, %23 in 0 : vector<1x16x4xf32>, vector<15x16x4xf32> -> vector<16x16x4xf32>
    %25 = vector.extract_strided_slice %4 {offsets = [0, 1, 0], sizes = [1, 1, 4], strides = [1, 1, 1]} : vector<3x3x4xf32> to vector<1x1x4xf32>
    %26 = vector.shape_cast %25 : vector<1x1x4xf32> to vector<4xf32>
    %27 = vector.shape_cast %26 : vector<4xf32> to vector<1x1x4xf32>
    %28 = vector.broadcast %27 : vector<1x1x4xf32> to vector<16x16x4xf32>
    %29 = arith.mulf %24, %28 : vector<16x16x4xf32>
    %30 = arith.addf %21, %29 : vector<16x16x4xf32>
    %cst_9 = arith.constant 0.000000e+00 : f32
    %31 = vector.broadcast %cst_9 : f32 to vector<1x16x4xf32>
    %32 = vector.extract_strided_slice %3 {offsets = [0, 0, 0], sizes = [15, 16, 4], strides = [1, 1, 1]} : vector<16x16x4xf32> to vector<15x16x4xf32>
    %33 = tpu.concatenate %31, %32 in 0 : vector<1x16x4xf32>, vector<15x16x4xf32> -> vector<16x16x4xf32>
    %34 = vector.extract_strided_slice %33 {offsets = [0, 1, 0], sizes = [16, 15, 4], strides = [1, 1, 1]} : vector<16x16x4xf32> to vector<16x15x4xf32>
    %cst_10 = arith.constant 0.000000e+00 : f32
    %35 = vector.broadcast %cst_10 : f32 to vector<16x1x4xf32>
    %36 = tpu.concatenate %34, %35 in 1 : vector<16x15x4xf32>, vector<16x1x4xf32> -> vector<16x16x4xf32>
    %37 = vector.extract_strided_slice %4 {offsets = [0, 2, 0], sizes = [1, 1, 4], strides = [1, 1, 1]} : vector<3x3x4xf32> to vector<1x1x4xf32>
    %38 = vector.shape_cast %37 : vector<1x1x4xf32> to vector<4xf32>
    %39 = vector.shape_cast %38 : vector<4xf32> to vector<1x1x4xf32>
    %40 = vector.broadcast %39 : vector<1x1x4xf32> to vector<16x16x4xf32>
    %41 = arith.mulf %36, %40 : vector<16x16x4xf32>
    %42 = arith.addf %30, %41 : vector<16x16x4xf32>
    %cst_11 = arith.constant 0.000000e+00 : f32
    %43 = vector.broadcast %cst_11 : f32 to vector<16x1x4xf32>
    %44 = vector.extract_strided_slice %3 {offsets = [0, 0, 0], sizes = [16, 15, 4], strides = [1, 1, 1]} : vector<16x16x4xf32> to vector<16x15x4xf32>
    %45 = tpu.concatenate %43, %44 in 1 : vector<16x1x4xf32>, vector<16x15x4xf32> -> vector<16x16x4xf32>
    %46 = vector.extract_strided_slice %4 {offsets = [1, 0, 0], sizes = [1, 1, 4], strides = [1, 1, 1]} : vector<3x3x4xf32> to vector<1x1x4xf32>
    %47 = vector.shape_cast %46 : vector<1x1x4xf32> to vector<4xf32>
    %48 = vector.shape_cast %47 : vector<4xf32> to vector<1x1x4xf32>
    %49 = vector.broadcast %48 : vector<1x1x4xf32> to vector<16x16x4xf32>
    %50 = arith.mulf %45, %49 : vector<16x16x4xf32>
    %51 = arith.addf %42, %50 : vector<16x16x4xf32>
    %52 = vector.extract_strided_slice %3 {offsets = [0, 1, 0], sizes = [16, 15, 4], strides = [1, 1, 1]} : vector<16x16x4xf32> to vector<16x15x4xf32>
    %cst_12 = arith.constant 0.000000e+00 : f32
    %53 = vector.broadcast %cst_12 : f32 to vector<16x1x4xf32>
    %54 = tpu.concatenate %52, %53 in 1 : vector<16x15x4xf32>, vector<16x1x4xf32> -> vector<16x16x4xf32>
    %55 = vector.extract_strided_slice %4 {offsets = [1, 2, 0], sizes = [1, 1, 4], strides = [1, 1, 1]} : vector<3x3x4xf32> to vector<1x1x4xf32>
    %56 = vector.shape_cast %55 : vector<1x1x4xf32> to vector<4xf32>
    %57 = vector.shape_cast %56 : vector<4xf32> to vector<1x1x4xf32>
    %58 = vector.broadcast %57 : vector<1x1x4xf32> to vector<16x16x4xf32>
    %59 = arith.mulf %54, %58 : vector<16x16x4xf32>
    %60 = arith.addf %51, %59 : vector<16x16x4xf32>
    %61 = vector.extract_strided_slice %3 {offsets = [1, 0, 0], sizes = [15, 16, 4], strides = [1, 1, 1]} : vector<16x16x4xf32> to vector<15x16x4xf32>
    %cst_13 = arith.constant 0.000000e+00 : f32
    %62 = vector.broadcast %cst_13 : f32 to vector<1x16x4xf32>
    %63 = tpu.concatenate %61, %62 in 0 : vector<15x16x4xf32>, vector<1x16x4xf32> -> vector<16x16x4xf32>
    %cst_14 = arith.constant 0.000000e+00 : f32
    %64 = vector.broadcast %cst_14 : f32 to vector<16x1x4xf32>
    %65 = vector.extract_strided_slice %63 {offsets = [0, 0, 0], sizes = [16, 15, 4], strides = [1, 1, 1]} : vector<16x16x4xf32> to vector<16x15x4xf32>
    %66 = tpu.concatenate %64, %65 in 1 : vector<16x1x4xf32>, vector<16x15x4xf32> -> vector<16x16x4xf32>
    %67 = vector.extract_strided_slice %4 {offsets = [2, 0, 0], sizes = [1, 1, 4], strides = [1, 1, 1]} : vector<3x3x4xf32> to vector<1x1x4xf32>
    %68 = vector.shape_cast %67 : vector<1x1x4xf32> to vector<4xf32>
    %69 = vector.shape_cast %68 : vector<4xf32> to vector<1x1x4xf32>
    %70 = vector.broadcast %69 : vector<1x1x4xf32> to vector<16x16x4xf32>
    %71 = arith.mulf %66, %70 : vector<16x16x4xf32>
    %72 = arith.addf %60, %71 : vector<16x16x4xf32>
    %73 = vector.extract_strided_slice %3 {offsets = [1, 0, 0], sizes = [15, 16, 4], strides = [1, 1, 1]} : vector<16x16x4xf32> to vector<15x16x4xf32>
    %cst_15 = arith.constant 0.000000e+00 : f32
    %74 = vector.broadcast %cst_15 : f32 to vector<1x16x4xf32>
    %75 = tpu.concatenate %73, %74 in 0 : vector<15x16x4xf32>, vector<1x16x4xf32> -> vector<16x16x4xf32>
    %76 = vector.extract_strided_slice %4 {offsets = [2, 1, 0], sizes = [1, 1, 4], strides = [1, 1, 1]} : vector<3x3x4xf32> to vector<1x1x4xf32>
    %77 = vector.shape_cast %76 : vector<1x1x4xf32> to vector<4xf32>
    %78 = vector.shape_cast %77 : vector<4xf32> to vector<1x1x4xf32>
    %79 = vector.broadcast %78 : vector<1x1x4xf32> to vector<16x16x4xf32>
    %80 = arith.mulf %75, %79 : vector<16x16x4xf32>
    %81 = arith.addf %72, %80 : vector<16x16x4xf32>
    %82 = vector.extract_strided_slice %3 {offsets = [1, 0, 0], sizes = [15, 16, 4], strides = [1, 1, 1]} : vector<16x16x4xf32> to vector<15x16x4xf32>
    %cst_16 = arith.constant 0.000000e+00 : f32
    %83 = vector.broadcast %cst_16 : f32 to vector<1x16x4xf32>
    %84 = tpu.concatenate %82, %83 in 0 : vector<15x16x4xf32>, vector<1x16x4xf32> -> vector<16x16x4xf32>
    %85 = vector.extract_strided_slice %84 {offsets = [0, 1, 0], sizes = [16, 15, 4], strides = [1, 1, 1]} : vector<16x16x4xf32> to vector<16x15x4xf32>
    %cst_17 = arith.constant 0.000000e+00 : f32
    %86 = vector.broadcast %cst_17 : f32 to vector<16x1x4xf32>
    %87 = tpu.concatenate %85, %86 in 1 : vector<16x15x4xf32>, vector<16x1x4xf32> -> vector<16x16x4xf32>
    %88 = vector.extract_strided_slice %4 {offsets = [2, 2, 0], sizes = [1, 1, 4], strides = [1, 1, 1]} : vector<3x3x4xf32> to vector<1x1x4xf32>
    %89 = vector.shape_cast %88 : vector<1x1x4xf32> to vector<4xf32>
    %90 = vector.shape_cast %89 : vector<4xf32> to vector<1x1x4xf32>
    %91 = vector.broadcast %90 : vector<1x1x4xf32> to vector<16x16x4xf32>
    %92 = arith.mulf %87, %91 : vector<16x16x4xf32>
    %93 = arith.addf %81, %92 : vector<16x16x4xf32>
    %c0_18 = arith.constant 0 : index
    %c0_19 = arith.constant 0 : index
    %c0_20 = arith.constant 0 : index
    %c0_21 = arith.constant 0 : index
    %94 = vector.load %arg4[%c0_18, %c0_19, %c0_20, %c0_21] : memref<1x16x16x4xf32, #tpu.memory_space<vmem>>, vector<1x16x16x4xf32>
    %95 = vector.shape_cast %94 : vector<1x16x16x4xf32> to vector<16x16x4xf32>
    %96 = vector.shape_cast %93 : vector<16x16x4xf32> to vector<1x16x16x4xf32>
    tpu.vector_store %arg4[%c0_18, %c0_19, %c0_20, %c0_21], %96 {strides = array<i32>} : memref<1x16x16x4xf32, #tpu.memory_space<vmem>>, vector<1x16x16x4xf32>,
    %97 = vector.shape_cast %93 : vector<16x16x4xf32> to vector<256x4xf32>
    %cst_22 = arith.constant dense<0.000000e+00> : vector<4xf32>
    %98 = vector.multi_reduction <add>, %97, %cst_22 [0] : vector<256x4xf32> to vector<4xf32>
    %99 = vector.shape_cast %98 : vector<4xf32> to vector<1x4xf32>
    %100 = arith.mulf %97, %97 : vector<256x4xf32>
    %cst_23 = arith.constant dense<0.000000e+00> : vector<4xf32>
    %101 = vector.multi_reduction <add>, %100, %cst_23 [0] : vector<256x4xf32> to vector<4xf32>
    %102 = vector.shape_cast %101 : vector<4xf32> to vector<1x4xf32>
    %103 = tpu.concatenate %99, %102 in 0 : vector<1x4xf32>, vector<1x4xf32> -> vector<2x4xf32>
    %c0_24 = arith.constant 0 : index
    %c0_25 = arith.constant 0 : index
    %c0_26 = arith.constant 0 : index
    %104 = vector.load %arg5[%c0_24, %c0_25, %c0_26] : memref<1x2x4xf32, #tpu.memory_space<vmem>>, vector<1x2x4xf32>
    %105 = vector.shape_cast %104 : vector<1x2x4xf32> to vector<2x4xf32>
    %106 = vector.shape_cast %103 : vector<2x4xf32> to vector<1x2x4xf32>
    tpu.vector_store %arg5[%c0_24, %c0_25, %c0_26], %106 {strides = array<i32>} : memref<1x2x4xf32, #tpu.memory_space<vmem>>, vector<1x2x4xf32>,
    %107 = vector.shape_cast %3 : vector<16x16x4xf32> to vector<256x4xf32>
    %108 = arith.truncf %107 : vector<256x4xf32> to vector<256x4xbf16>
    %c0_27 = arith.constant 0 : index
    %c0_28 = arith.constant 0 : index
    %109 = vector.load %arg3[%c0_27, %c0_28] : memref<4x8xbf16, #tpu.memory_space<vmem>>, vector<4x8xbf16>
    %cst_29 = arith.constant dense<0.000000e+00> : vector<256x8xf32>
    %110 = tpu.matmul %108, %109, %cst_29 {dimension_numbers = #tpu.dot_dimension_numbers<[1], [0], [0], [1], [0, 0, 1, 1], [], []>} : vector<256x4xbf16>, vector<4x8xbf16>, vector<256x8xf32> -> vector<256x8xf32>
    %111 = vector.shape_cast %110 : vector<256x8xf32> to vector<16x16x8xf32>
    %c0_30 = arith.constant 0 : index
    %c0_31 = arith.constant 0 : index
    %c0_32 = arith.constant 0 : index
    %c0_33 = arith.constant 0 : index
    %112 = vector.load %arg6[%c0_30, %c0_31, %c0_32, %c0_33] : memref<1x16x16x8xf32, #tpu.memory_space<vmem>>, vector<1x16x16x8xf32>
    %113 = vector.shape_cast %112 : vector<1x16x16x8xf32> to vector<16x16x8xf32>
    %114 = vector.shape_cast %111 : vector<16x16x8xf32> to vector<1x16x16x8xf32>
    tpu.vector_store %arg6[%c0_30, %c0_31, %c0_32, %c0_33], %114 {strides = array<i32>} : memref<1x16x16x8xf32, #tpu.memory_space<vmem>>, vector<1x16x16x8xf32>,
    %cst_34 = arith.constant dense<0.000000e+00> : vector<8xf32>
    %115 = vector.multi_reduction <add>, %110, %cst_34 [0] : vector<256x8xf32> to vector<8xf32>
    %116 = vector.shape_cast %115 : vector<8xf32> to vector<1x8xf32>
    %117 = arith.mulf %110, %110 : vector<256x8xf32>
    %cst_35 = arith.constant dense<0.000000e+00> : vector<8xf32>
    %118 = vector.multi_reduction <add>, %117, %cst_35 [0] : vector<256x8xf32> to vector<8xf32>
    %119 = vector.shape_cast %118 : vector<8xf32> to vector<1x8xf32>
    %120 = tpu.concatenate %116, %119 in 0 : vector<1x8xf32>, vector<1x8xf32> -> vector<2x8xf32>
    %c0_36 = arith.constant 0 : index
    %c0_37 = arith.constant 0 : index
    %c0_38 = arith.constant 0 : index
    %121 = vector.load %arg7[%c0_36, %c0_37, %c0_38] : memref<1x2x8xf32, #tpu.memory_space<vmem>>, vector<1x2x8xf32>
    %122 = vector.shape_cast %121 : vector<1x2x8xf32> to vector<2x8xf32>
    %123 = vector.shape_cast %120 : vector<2x8xf32> to vector<1x2x8xf32>
    tpu.vector_store %arg7[%c0_36, %c0_37, %c0_38], %123 {strides = array<i32>} : memref<1x2x8xf32, #tpu.memory_space<vmem>>, vector<1x2x8xf32>,
    return
  }
  func.func @transform_0(%arg0: i32) -> (i32, i32, i32, i32) {
    %c0_i32 = arith.constant 0 : i32
    %c0_i32_0 = arith.constant 0 : i32
    %c0_i32_1 = arith.constant 0 : i32
    %c0_i32_2 = arith.constant 0 : i32
    return %arg0, %c0_i32, %c0_i32_0, %c0_i32_1 : i32, i32, i32, i32
  }
  func.func @transform_1(%arg0: i32) -> (i32, i32, i32) {
    %c0_i32 = arith.constant 0 : i32
    %c0_i32_0 = arith.constant 0 : i32
    %c0_i32_1 = arith.constant 0 : i32
    %c0_i32_2 = arith.constant 0 : i32
    return %c0_i32, %c0_i32_0, %c0_i32_1 : i32, i32, i32
  }
  func.func @transform_2(%arg0: i32) -> (i32, i32) {
    %c0_i32 = arith.constant 0 : i32
    %c0_i32_0 = arith.constant 0 : i32
    %c0_i32_1 = arith.constant 0 : i32
    return %c0_i32, %c0_i32_0 : i32, i32
  }
  func.func @transform_3(%arg0: i32) -> (i32, i32, i32, i32) {
    %c0_i32 = arith.constant 0 : i32
    %c0_i32_0 = arith.constant 0 : i32
    %c0_i32_1 = arith.constant 0 : i32
    %c0_i32_2 = arith.constant 0 : i32
    return %arg0, %c0_i32, %c0_i32_0, %c0_i32_1 : i32, i32, i32, i32
  }
  func.func @transform_4(%arg0: i32) -> (i32, i32, i32) {
    %c0_i32 = arith.constant 0 : i32
    %c0_i32_0 = arith.constant 0 : i32
    %c0_i32_1 = arith.constant 0 : i32
    return %arg0, %c0_i32, %c0_i32_0 : i32, i32, i32
  }
  func.func @transform_5(%arg0: i32) -> (i32, i32, i32, i32) {
    %c0_i32 = arith.constant 0 : i32
    %c0_i32_0 = arith.constant 0 : i32
    %c0_i32_1 = arith.constant 0 : i32
    %c0_i32_2 = arith.constant 0 : i32
    return %arg0, %c0_i32, %c0_i32_0, %c0_i32_1 : i32, i32, i32, i32
  }
  func.func @transform_6(%arg0: i32) -> (i32, i32, i32) {
    %c0_i32 = arith.constant 0 : i32
    %c0_i32_0 = arith.constant 0 : i32
    %c0_i32_1 = arith.constant 0 : i32
    return %arg0, %c0_i32, %c0_i32_0 : i32, i32, i32
  }
}

module attributes {stable_mosaic.version = 11 : i64} {
  func.func @_pointwise_kernel(%arg0: i32, %arg1: memref<1x16x16x4xf32, #tpu.memory_space<vmem>>, %arg2: memref<4x8xbf16, #tpu.memory_space<vmem>>, %arg3: memref<1x8xf32, #tpu.memory_space<vmem>>, %arg4: memref<1x16x16x8xf32, #tpu.memory_space<vmem>>, %arg5: memref<1x2x8xf32, #tpu.memory_space<vmem>>) attributes {dimension_semantics = [#tpu.dimension_semantics<parallel>], iteration_bounds = array<i64: 2>, scalar_prefetch = 0 : i64, scratch_operands = 0 : i64, tpu.core_type = #tpu.core_type<tc>, window_params = [{transform_indices = @transform_0, window_bounds = array<i64: 1, 16, 16, 4>}, {pipeline_mode = #tpu.pipeline_mode<synchronous>, transform_indices = @transform_1, window_bounds = array<i64: 4, 8>}, {pipeline_mode = #tpu.pipeline_mode<synchronous>, transform_indices = @transform_2, window_bounds = array<i64: 1, 8>}, {transform_indices = @transform_3, window_bounds = array<i64: 1, 16, 16, 8>}, {transform_indices = @transform_4, window_bounds = array<i64: 1, 2, 8>}]} {
    %c0 = arith.constant 0 : index
    %c0_0 = arith.constant 0 : index
    %c0_1 = arith.constant 0 : index
    %c0_2 = arith.constant 0 : index
    %0 = vector.load %arg1[%c0, %c0_0, %c0_1, %c0_2] : memref<1x16x16x4xf32, #tpu.memory_space<vmem>>, vector<1x16x16x4xf32>
    %1 = vector.shape_cast %0 : vector<1x16x16x4xf32> to vector<16x16x4xf32>
    %2 = vector.shape_cast %1 : vector<16x16x4xf32> to vector<256x4xf32>
    %3 = arith.truncf %2 : vector<256x4xf32> to vector<256x4xbf16>
    %c0_3 = arith.constant 0 : index
    %c0_4 = arith.constant 0 : index
    %4 = vector.load %arg2[%c0_3, %c0_4] : memref<4x8xbf16, #tpu.memory_space<vmem>>, vector<4x8xbf16>
    %cst = arith.constant dense<0.000000e+00> : vector<256x8xf32>
    %5 = tpu.matmul %3, %4, %cst {dimension_numbers = #tpu.dot_dimension_numbers<[1], [0], [0], [1], [0, 0, 1, 1], [], []>} : vector<256x4xbf16>, vector<4x8xbf16>, vector<256x8xf32> -> vector<256x8xf32>
    %c0_5 = arith.constant 0 : index
    %c0_6 = arith.constant 0 : index
    %6 = vector.load %arg3[%c0_5, %c0_6] : memref<1x8xf32, #tpu.memory_space<vmem>>, vector<1x8xf32>
    %7 = vector.shape_cast %6 : vector<1x8xf32> to vector<8xf32>
    %8 = vector.shape_cast %7 : vector<8xf32> to vector<1x8xf32>
    %9 = vector.broadcast %8 : vector<1x8xf32> to vector<256x8xf32>
    %10 = arith.addf %5, %9 : vector<256x8xf32>
    %11 = vector.shape_cast %10 : vector<256x8xf32> to vector<16x16x8xf32>
    %c0_7 = arith.constant 0 : index
    %c0_8 = arith.constant 0 : index
    %c0_9 = arith.constant 0 : index
    %c0_10 = arith.constant 0 : index
    %12 = vector.load %arg4[%c0_7, %c0_8, %c0_9, %c0_10] : memref<1x16x16x8xf32, #tpu.memory_space<vmem>>, vector<1x16x16x8xf32>
    %13 = vector.shape_cast %12 : vector<1x16x16x8xf32> to vector<16x16x8xf32>
    %14 = vector.shape_cast %11 : vector<16x16x8xf32> to vector<1x16x16x8xf32>
    tpu.vector_store %arg4[%c0_7, %c0_8, %c0_9, %c0_10], %14 {strides = array<i32>} : memref<1x16x16x8xf32, #tpu.memory_space<vmem>>, vector<1x16x16x8xf32>,
    %cst_11 = arith.constant dense<0.000000e+00> : vector<8xf32>
    %15 = vector.multi_reduction <add>, %10, %cst_11 [0] : vector<256x8xf32> to vector<8xf32>
    %16 = vector.shape_cast %15 : vector<8xf32> to vector<1x8xf32>
    %17 = arith.mulf %10, %10 : vector<256x8xf32>
    %cst_12 = arith.constant dense<0.000000e+00> : vector<8xf32>
    %18 = vector.multi_reduction <add>, %17, %cst_12 [0] : vector<256x8xf32> to vector<8xf32>
    %19 = vector.shape_cast %18 : vector<8xf32> to vector<1x8xf32>
    %20 = tpu.concatenate %16, %19 in 0 : vector<1x8xf32>, vector<1x8xf32> -> vector<2x8xf32>
    %c0_13 = arith.constant 0 : index
    %c0_14 = arith.constant 0 : index
    %c0_15 = arith.constant 0 : index
    %21 = vector.load %arg5[%c0_13, %c0_14, %c0_15] : memref<1x2x8xf32, #tpu.memory_space<vmem>>, vector<1x2x8xf32>
    %22 = vector.shape_cast %21 : vector<1x2x8xf32> to vector<2x8xf32>
    %23 = vector.shape_cast %20 : vector<2x8xf32> to vector<1x2x8xf32>
    tpu.vector_store %arg5[%c0_13, %c0_14, %c0_15], %23 {strides = array<i32>} : memref<1x2x8xf32, #tpu.memory_space<vmem>>, vector<1x2x8xf32>,
    return
  }
  func.func @transform_0(%arg0: i32) -> (i32, i32, i32, i32) {
    %c0_i32 = arith.constant 0 : i32
    %c0_i32_0 = arith.constant 0 : i32
    %c0_i32_1 = arith.constant 0 : i32
    %c0_i32_2 = arith.constant 0 : i32
    return %arg0, %c0_i32, %c0_i32_0, %c0_i32_1 : i32, i32, i32, i32
  }
  func.func @transform_1(%arg0: i32) -> (i32, i32) {
    %c0_i32 = arith.constant 0 : i32
    %c0_i32_0 = arith.constant 0 : i32
    %c0_i32_1 = arith.constant 0 : i32
    return %c0_i32, %c0_i32_0 : i32, i32
  }
  func.func @transform_2(%arg0: i32) -> (i32, i32) {
    %c0_i32 = arith.constant 0 : i32
    %c0_i32_0 = arith.constant 0 : i32
    %c0_i32_1 = arith.constant 0 : i32
    return %c0_i32, %c0_i32_0 : i32, i32
  }
  func.func @transform_3(%arg0: i32) -> (i32, i32, i32, i32) {
    %c0_i32 = arith.constant 0 : i32
    %c0_i32_0 = arith.constant 0 : i32
    %c0_i32_1 = arith.constant 0 : i32
    %c0_i32_2 = arith.constant 0 : i32
    return %arg0, %c0_i32, %c0_i32_0, %c0_i32_1 : i32, i32, i32, i32
  }
  func.func @transform_4(%arg0: i32) -> (i32, i32, i32) {
    %c0_i32 = arith.constant 0 : i32
    %c0_i32_0 = arith.constant 0 : i32
    %c0_i32_1 = arith.constant 0 : i32
    return %arg0, %c0_i32, %c0_i32_0 : i32, i32, i32
  }
}

module attributes {stable_mosaic.version = 11 : i64} {
  func.func @_affine_relu_dw_kernel(%arg0: i32, %arg1: memref<1x16x16x8xf32, #tpu.memory_space<vmem>>, %arg2: memref<1x8xf32, #tpu.memory_space<vmem>>, %arg3: memref<1x8xf32, #tpu.memory_space<vmem>>, %arg4: memref<3x3x8xf32, #tpu.memory_space<vmem>>, %arg5: memref<1x16x16x8xf32, #tpu.memory_space<vmem>>, %arg6: memref<1x2x8xf32, #tpu.memory_space<vmem>>) attributes {dimension_semantics = [#tpu.dimension_semantics<parallel>], iteration_bounds = array<i64: 2>, scalar_prefetch = 0 : i64, scratch_operands = 0 : i64, tpu.core_type = #tpu.core_type<tc>, window_params = [{transform_indices = @transform_0, window_bounds = array<i64: 1, 16, 16, 8>}, {pipeline_mode = #tpu.pipeline_mode<synchronous>, transform_indices = @transform_1, window_bounds = array<i64: 1, 8>}, {pipeline_mode = #tpu.pipeline_mode<synchronous>, transform_indices = @transform_2, window_bounds = array<i64: 1, 8>}, {pipeline_mode = #tpu.pipeline_mode<synchronous>, transform_indices = @transform_3, window_bounds = array<i64: 3, 3, 8>}, {transform_indices = @transform_4, window_bounds = array<i64: 1, 16, 16, 8>}, {transform_indices = @transform_5, window_bounds = array<i64: 1, 2, 8>}]} {
    %c0 = arith.constant 0 : index
    %c0_0 = arith.constant 0 : index
    %c0_1 = arith.constant 0 : index
    %c0_2 = arith.constant 0 : index
    %0 = vector.load %arg1[%c0, %c0_0, %c0_1, %c0_2] : memref<1x16x16x8xf32, #tpu.memory_space<vmem>>, vector<1x16x16x8xf32>
    %1 = vector.shape_cast %0 : vector<1x16x16x8xf32> to vector<16x16x8xf32>
    %c0_3 = arith.constant 0 : index
    %c0_4 = arith.constant 0 : index
    %2 = vector.load %arg2[%c0_3, %c0_4] : memref<1x8xf32, #tpu.memory_space<vmem>>, vector<1x8xf32>
    %3 = vector.shape_cast %2 : vector<1x8xf32> to vector<8xf32>
    %4 = vector.shape_cast %3 : vector<8xf32> to vector<1x1x8xf32>
    %5 = vector.broadcast %4 : vector<1x1x8xf32> to vector<16x16x8xf32>
    %6 = arith.mulf %1, %5 : vector<16x16x8xf32>
    %c0_5 = arith.constant 0 : index
    %c0_6 = arith.constant 0 : index
    %7 = vector.load %arg3[%c0_5, %c0_6] : memref<1x8xf32, #tpu.memory_space<vmem>>, vector<1x8xf32>
    %8 = vector.shape_cast %7 : vector<1x8xf32> to vector<8xf32>
    %9 = vector.shape_cast %8 : vector<8xf32> to vector<1x1x8xf32>
    %10 = vector.broadcast %9 : vector<1x1x8xf32> to vector<16x16x8xf32>
    %11 = arith.addf %6, %10 : vector<16x16x8xf32>
    %cst = arith.constant 0.000000e+00 : f32
    %12 = vector.broadcast %cst : f32 to vector<16x16x8xf32>
    %13 = arith.maximumf %11, %12 : vector<16x16x8xf32>
    %c0_7 = arith.constant 0 : index
    %c0_8 = arith.constant 0 : index
    %c0_9 = arith.constant 0 : index
    %14 = vector.load %arg4[%c0_7, %c0_8, %c0_9] : memref<3x3x8xf32, #tpu.memory_space<vmem>>, vector<3x3x8xf32>
    %15 = vector.extract_strided_slice %14 {offsets = [1, 1, 0], sizes = [1, 1, 8], strides = [1, 1, 1]} : vector<3x3x8xf32> to vector<1x1x8xf32>
    %16 = vector.shape_cast %15 : vector<1x1x8xf32> to vector<8xf32>
    %17 = vector.shape_cast %16 : vector<8xf32> to vector<1x1x8xf32>
    %18 = vector.broadcast %17 : vector<1x1x8xf32> to vector<16x16x8xf32>
    %19 = arith.mulf %13, %18 : vector<16x16x8xf32>
    %cst_10 = arith.constant 0.000000e+00 : f32
    %20 = vector.broadcast %cst_10 : f32 to vector<1x16x8xf32>
    %21 = vector.extract_strided_slice %13 {offsets = [0, 0, 0], sizes = [15, 16, 8], strides = [1, 1, 1]} : vector<16x16x8xf32> to vector<15x16x8xf32>
    %22 = tpu.concatenate %20, %21 in 0 : vector<1x16x8xf32>, vector<15x16x8xf32> -> vector<16x16x8xf32>
    %cst_11 = arith.constant 0.000000e+00 : f32
    %23 = vector.broadcast %cst_11 : f32 to vector<16x1x8xf32>
    %24 = vector.extract_strided_slice %22 {offsets = [0, 0, 0], sizes = [16, 15, 8], strides = [1, 1, 1]} : vector<16x16x8xf32> to vector<16x15x8xf32>
    %25 = tpu.concatenate %23, %24 in 1 : vector<16x1x8xf32>, vector<16x15x8xf32> -> vector<16x16x8xf32>
    %26 = vector.extract_strided_slice %14 {offsets = [0, 0, 0], sizes = [1, 1, 8], strides = [1, 1, 1]} : vector<3x3x8xf32> to vector<1x1x8xf32>
    %27 = vector.shape_cast %26 : vector<1x1x8xf32> to vector<8xf32>
    %28 = vector.shape_cast %27 : vector<8xf32> to vector<1x1x8xf32>
    %29 = vector.broadcast %28 : vector<1x1x8xf32> to vector<16x16x8xf32>
    %30 = arith.mulf %25, %29 : vector<16x16x8xf32>
    %31 = arith.addf %19, %30 : vector<16x16x8xf32>
    %cst_12 = arith.constant 0.000000e+00 : f32
    %32 = vector.broadcast %cst_12 : f32 to vector<1x16x8xf32>
    %33 = vector.extract_strided_slice %13 {offsets = [0, 0, 0], sizes = [15, 16, 8], strides = [1, 1, 1]} : vector<16x16x8xf32> to vector<15x16x8xf32>
    %34 = tpu.concatenate %32, %33 in 0 : vector<1x16x8xf32>, vector<15x16x8xf32> -> vector<16x16x8xf32>
    %35 = vector.extract_strided_slice %14 {offsets = [0, 1, 0], sizes = [1, 1, 8], strides = [1, 1, 1]} : vector<3x3x8xf32> to vector<1x1x8xf32>
    %36 = vector.shape_cast %35 : vector<1x1x8xf32> to vector<8xf32>
    %37 = vector.shape_cast %36 : vector<8xf32> to vector<1x1x8xf32>
    %38 = vector.broadcast %37 : vector<1x1x8xf32> to vector<16x16x8xf32>
    %39 = arith.mulf %34, %38 : vector<16x16x8xf32>
    %40 = arith.addf %31, %39 : vector<16x16x8xf32>
    %cst_13 = arith.constant 0.000000e+00 : f32
    %41 = vector.broadcast %cst_13 : f32 to vector<1x16x8xf32>
    %42 = vector.extract_strided_slice %13 {offsets = [0, 0, 0], sizes = [15, 16, 8], strides = [1, 1, 1]} : vector<16x16x8xf32> to vector<15x16x8xf32>
    %43 = tpu.concatenate %41, %42 in 0 : vector<1x16x8xf32>, vector<15x16x8xf32> -> vector<16x16x8xf32>
    %44 = vector.extract_strided_slice %43 {offsets = [0, 1, 0], sizes = [16, 15, 8], strides = [1, 1, 1]} : vector<16x16x8xf32> to vector<16x15x8xf32>
    %cst_14 = arith.constant 0.000000e+00 : f32
    %45 = vector.broadcast %cst_14 : f32 to vector<16x1x8xf32>
    %46 = tpu.concatenate %44, %45 in 1 : vector<16x15x8xf32>, vector<16x1x8xf32> -> vector<16x16x8xf32>
    %47 = vector.extract_strided_slice %14 {offsets = [0, 2, 0], sizes = [1, 1, 8], strides = [1, 1, 1]} : vector<3x3x8xf32> to vector<1x1x8xf32>
    %48 = vector.shape_cast %47 : vector<1x1x8xf32> to vector<8xf32>
    %49 = vector.shape_cast %48 : vector<8xf32> to vector<1x1x8xf32>
    %50 = vector.broadcast %49 : vector<1x1x8xf32> to vector<16x16x8xf32>
    %51 = arith.mulf %46, %50 : vector<16x16x8xf32>
    %52 = arith.addf %40, %51 : vector<16x16x8xf32>
    %cst_15 = arith.constant 0.000000e+00 : f32
    %53 = vector.broadcast %cst_15 : f32 to vector<16x1x8xf32>
    %54 = vector.extract_strided_slice %13 {offsets = [0, 0, 0], sizes = [16, 15, 8], strides = [1, 1, 1]} : vector<16x16x8xf32> to vector<16x15x8xf32>
    %55 = tpu.concatenate %53, %54 in 1 : vector<16x1x8xf32>, vector<16x15x8xf32> -> vector<16x16x8xf32>
    %56 = vector.extract_strided_slice %14 {offsets = [1, 0, 0], sizes = [1, 1, 8], strides = [1, 1, 1]} : vector<3x3x8xf32> to vector<1x1x8xf32>
    %57 = vector.shape_cast %56 : vector<1x1x8xf32> to vector<8xf32>
    %58 = vector.shape_cast %57 : vector<8xf32> to vector<1x1x8xf32>
    %59 = vector.broadcast %58 : vector<1x1x8xf32> to vector<16x16x8xf32>
    %60 = arith.mulf %55, %59 : vector<16x16x8xf32>
    %61 = arith.addf %52, %60 : vector<16x16x8xf32>
    %62 = vector.extract_strided_slice %13 {offsets = [0, 1, 0], sizes = [16, 15, 8], strides = [1, 1, 1]} : vector<16x16x8xf32> to vector<16x15x8xf32>
    %cst_16 = arith.constant 0.000000e+00 : f32
    %63 = vector.broadcast %cst_16 : f32 to vector<16x1x8xf32>
    %64 = tpu.concatenate %62, %63 in 1 : vector<16x15x8xf32>, vector<16x1x8xf32> -> vector<16x16x8xf32>
    %65 = vector.extract_strided_slice %14 {offsets = [1, 2, 0], sizes = [1, 1, 8], strides = [1, 1, 1]} : vector<3x3x8xf32> to vector<1x1x8xf32>
    %66 = vector.shape_cast %65 : vector<1x1x8xf32> to vector<8xf32>
    %67 = vector.shape_cast %66 : vector<8xf32> to vector<1x1x8xf32>
    %68 = vector.broadcast %67 : vector<1x1x8xf32> to vector<16x16x8xf32>
    %69 = arith.mulf %64, %68 : vector<16x16x8xf32>
    %70 = arith.addf %61, %69 : vector<16x16x8xf32>
    %71 = vector.extract_strided_slice %13 {offsets = [1, 0, 0], sizes = [15, 16, 8], strides = [1, 1, 1]} : vector<16x16x8xf32> to vector<15x16x8xf32>
    %cst_17 = arith.constant 0.000000e+00 : f32
    %72 = vector.broadcast %cst_17 : f32 to vector<1x16x8xf32>
    %73 = tpu.concatenate %71, %72 in 0 : vector<15x16x8xf32>, vector<1x16x8xf32> -> vector<16x16x8xf32>
    %cst_18 = arith.constant 0.000000e+00 : f32
    %74 = vector.broadcast %cst_18 : f32 to vector<16x1x8xf32>
    %75 = vector.extract_strided_slice %73 {offsets = [0, 0, 0], sizes = [16, 15, 8], strides = [1, 1, 1]} : vector<16x16x8xf32> to vector<16x15x8xf32>
    %76 = tpu.concatenate %74, %75 in 1 : vector<16x1x8xf32>, vector<16x15x8xf32> -> vector<16x16x8xf32>
    %77 = vector.extract_strided_slice %14 {offsets = [2, 0, 0], sizes = [1, 1, 8], strides = [1, 1, 1]} : vector<3x3x8xf32> to vector<1x1x8xf32>
    %78 = vector.shape_cast %77 : vector<1x1x8xf32> to vector<8xf32>
    %79 = vector.shape_cast %78 : vector<8xf32> to vector<1x1x8xf32>
    %80 = vector.broadcast %79 : vector<1x1x8xf32> to vector<16x16x8xf32>
    %81 = arith.mulf %76, %80 : vector<16x16x8xf32>
    %82 = arith.addf %70, %81 : vector<16x16x8xf32>
    %83 = vector.extract_strided_slice %13 {offsets = [1, 0, 0], sizes = [15, 16, 8], strides = [1, 1, 1]} : vector<16x16x8xf32> to vector<15x16x8xf32>
    %cst_19 = arith.constant 0.000000e+00 : f32
    %84 = vector.broadcast %cst_19 : f32 to vector<1x16x8xf32>
    %85 = tpu.concatenate %83, %84 in 0 : vector<15x16x8xf32>, vector<1x16x8xf32> -> vector<16x16x8xf32>
    %86 = vector.extract_strided_slice %14 {offsets = [2, 1, 0], sizes = [1, 1, 8], strides = [1, 1, 1]} : vector<3x3x8xf32> to vector<1x1x8xf32>
    %87 = vector.shape_cast %86 : vector<1x1x8xf32> to vector<8xf32>
    %88 = vector.shape_cast %87 : vector<8xf32> to vector<1x1x8xf32>
    %89 = vector.broadcast %88 : vector<1x1x8xf32> to vector<16x16x8xf32>
    %90 = arith.mulf %85, %89 : vector<16x16x8xf32>
    %91 = arith.addf %82, %90 : vector<16x16x8xf32>
    %92 = vector.extract_strided_slice %13 {offsets = [1, 0, 0], sizes = [15, 16, 8], strides = [1, 1, 1]} : vector<16x16x8xf32> to vector<15x16x8xf32>
    %cst_20 = arith.constant 0.000000e+00 : f32
    %93 = vector.broadcast %cst_20 : f32 to vector<1x16x8xf32>
    %94 = tpu.concatenate %92, %93 in 0 : vector<15x16x8xf32>, vector<1x16x8xf32> -> vector<16x16x8xf32>
    %95 = vector.extract_strided_slice %94 {offsets = [0, 1, 0], sizes = [16, 15, 8], strides = [1, 1, 1]} : vector<16x16x8xf32> to vector<16x15x8xf32>
    %cst_21 = arith.constant 0.000000e+00 : f32
    %96 = vector.broadcast %cst_21 : f32 to vector<16x1x8xf32>
    %97 = tpu.concatenate %95, %96 in 1 : vector<16x15x8xf32>, vector<16x1x8xf32> -> vector<16x16x8xf32>
    %98 = vector.extract_strided_slice %14 {offsets = [2, 2, 0], sizes = [1, 1, 8], strides = [1, 1, 1]} : vector<3x3x8xf32> to vector<1x1x8xf32>
    %99 = vector.shape_cast %98 : vector<1x1x8xf32> to vector<8xf32>
    %100 = vector.shape_cast %99 : vector<8xf32> to vector<1x1x8xf32>
    %101 = vector.broadcast %100 : vector<1x1x8xf32> to vector<16x16x8xf32>
    %102 = arith.mulf %97, %101 : vector<16x16x8xf32>
    %103 = arith.addf %91, %102 : vector<16x16x8xf32>
    %c0_22 = arith.constant 0 : index
    %c0_23 = arith.constant 0 : index
    %c0_24 = arith.constant 0 : index
    %c0_25 = arith.constant 0 : index
    %104 = vector.load %arg5[%c0_22, %c0_23, %c0_24, %c0_25] : memref<1x16x16x8xf32, #tpu.memory_space<vmem>>, vector<1x16x16x8xf32>
    %105 = vector.shape_cast %104 : vector<1x16x16x8xf32> to vector<16x16x8xf32>
    %106 = vector.shape_cast %103 : vector<16x16x8xf32> to vector<1x16x16x8xf32>
    tpu.vector_store %arg5[%c0_22, %c0_23, %c0_24, %c0_25], %106 {strides = array<i32>} : memref<1x16x16x8xf32, #tpu.memory_space<vmem>>, vector<1x16x16x8xf32>,
    %107 = vector.shape_cast %103 : vector<16x16x8xf32> to vector<256x8xf32>
    %cst_26 = arith.constant dense<0.000000e+00> : vector<8xf32>
    %108 = vector.multi_reduction <add>, %107, %cst_26 [0] : vector<256x8xf32> to vector<8xf32>
    %109 = vector.shape_cast %108 : vector<8xf32> to vector<1x8xf32>
    %110 = arith.mulf %107, %107 : vector<256x8xf32>
    %cst_27 = arith.constant dense<0.000000e+00> : vector<8xf32>
    %111 = vector.multi_reduction <add>, %110, %cst_27 [0] : vector<256x8xf32> to vector<8xf32>
    %112 = vector.shape_cast %111 : vector<8xf32> to vector<1x8xf32>
    %113 = tpu.concatenate %109, %112 in 0 : vector<1x8xf32>, vector<1x8xf32> -> vector<2x8xf32>
    %c0_28 = arith.constant 0 : index
    %c0_29 = arith.constant 0 : index
    %c0_30 = arith.constant 0 : index
    %114 = vector.load %arg6[%c0_28, %c0_29, %c0_30] : memref<1x2x8xf32, #tpu.memory_space<vmem>>, vector<1x2x8xf32>
    %115 = vector.shape_cast %114 : vector<1x2x8xf32> to vector<2x8xf32>
    %116 = vector.shape_cast %113 : vector<2x8xf32> to vector<1x2x8xf32>
    tpu.vector_store %arg6[%c0_28, %c0_29, %c0_30], %116 {strides = array<i32>} : memref<1x2x8xf32, #tpu.memory_space<vmem>>, vector<1x2x8xf32>,
    return
  }
  func.func @transform_0(%arg0: i32) -> (i32, i32, i32, i32) {
    %c0_i32 = arith.constant 0 : i32
    %c0_i32_0 = arith.constant 0 : i32
    %c0_i32_1 = arith.constant 0 : i32
    %c0_i32_2 = arith.constant 0 : i32
    return %arg0, %c0_i32, %c0_i32_0, %c0_i32_1 : i32, i32, i32, i32
  }
  func.func @transform_1(%arg0: i32) -> (i32, i32) {
    %c0_i32 = arith.constant 0 : i32
    %c0_i32_0 = arith.constant 0 : i32
    %c0_i32_1 = arith.constant 0 : i32
    return %c0_i32, %c0_i32_0 : i32, i32
  }
  func.func @transform_2(%arg0: i32) -> (i32, i32) {
    %c0_i32 = arith.constant 0 : i32
    %c0_i32_0 = arith.constant 0 : i32
    %c0_i32_1 = arith.constant 0 : i32
    return %c0_i32, %c0_i32_0 : i32, i32
  }
  func.func @transform_3(%arg0: i32) -> (i32, i32, i32) {
    %c0_i32 = arith.constant 0 : i32
    %c0_i32_0 = arith.constant 0 : i32
    %c0_i32_1 = arith.constant 0 : i32
    %c0_i32_2 = arith.constant 0 : i32
    return %c0_i32, %c0_i32_0, %c0_i32_1 : i32, i32, i32
  }
  func.func @transform_4(%arg0: i32) -> (i32, i32, i32, i32) {
    %c0_i32 = arith.constant 0 : i32
    %c0_i32_0 = arith.constant 0 : i32
    %c0_i32_1 = arith.constant 0 : i32
    %c0_i32_2 = arith.constant 0 : i32
    return %arg0, %c0_i32, %c0_i32_0, %c0_i32_1 : i32, i32, i32, i32
  }
  func.func @transform_5(%arg0: i32) -> (i32, i32, i32) {
    %c0_i32 = arith.constant 0 : i32
    %c0_i32_0 = arith.constant 0 : i32
    %c0_i32_1 = arith.constant 0 : i32
    return %arg0, %c0_i32, %c0_i32_0 : i32, i32, i32
  }
}

module attributes {stable_mosaic.version = 11 : i64} {
  func.func @_pointwise_kernel(%arg0: i32, %arg1: memref<1x16x16x8xf32, #tpu.memory_space<vmem>>, %arg2: memref<8x8xbf16, #tpu.memory_space<vmem>>, %arg3: memref<1x8xf32, #tpu.memory_space<vmem>>, %arg4: memref<1x16x16x8xf32, #tpu.memory_space<vmem>>, %arg5: memref<1x2x8xf32, #tpu.memory_space<vmem>>) attributes {dimension_semantics = [#tpu.dimension_semantics<parallel>], iteration_bounds = array<i64: 2>, scalar_prefetch = 0 : i64, scratch_operands = 0 : i64, tpu.core_type = #tpu.core_type<tc>, window_params = [{transform_indices = @transform_0, window_bounds = array<i64: 1, 16, 16, 8>}, {pipeline_mode = #tpu.pipeline_mode<synchronous>, transform_indices = @transform_1, window_bounds = array<i64: 8, 8>}, {pipeline_mode = #tpu.pipeline_mode<synchronous>, transform_indices = @transform_2, window_bounds = array<i64: 1, 8>}, {transform_indices = @transform_3, window_bounds = array<i64: 1, 16, 16, 8>}, {transform_indices = @transform_4, window_bounds = array<i64: 1, 2, 8>}]} {
    %c0 = arith.constant 0 : index
    %c0_0 = arith.constant 0 : index
    %c0_1 = arith.constant 0 : index
    %c0_2 = arith.constant 0 : index
    %0 = vector.load %arg1[%c0, %c0_0, %c0_1, %c0_2] : memref<1x16x16x8xf32, #tpu.memory_space<vmem>>, vector<1x16x16x8xf32>
    %1 = vector.shape_cast %0 : vector<1x16x16x8xf32> to vector<16x16x8xf32>
    %2 = vector.shape_cast %1 : vector<16x16x8xf32> to vector<256x8xf32>
    %3 = arith.truncf %2 : vector<256x8xf32> to vector<256x8xbf16>
    %c0_3 = arith.constant 0 : index
    %c0_4 = arith.constant 0 : index
    %4 = vector.load %arg2[%c0_3, %c0_4] : memref<8x8xbf16, #tpu.memory_space<vmem>>, vector<8x8xbf16>
    %cst = arith.constant dense<0.000000e+00> : vector<256x8xf32>
    %5 = tpu.matmul %3, %4, %cst {dimension_numbers = #tpu.dot_dimension_numbers<[1], [0], [0], [1], [0, 0, 1, 1], [], []>} : vector<256x8xbf16>, vector<8x8xbf16>, vector<256x8xf32> -> vector<256x8xf32>
    %c0_5 = arith.constant 0 : index
    %c0_6 = arith.constant 0 : index
    %6 = vector.load %arg3[%c0_5, %c0_6] : memref<1x8xf32, #tpu.memory_space<vmem>>, vector<1x8xf32>
    %7 = vector.shape_cast %6 : vector<1x8xf32> to vector<8xf32>
    %8 = vector.shape_cast %7 : vector<8xf32> to vector<1x8xf32>
    %9 = vector.broadcast %8 : vector<1x8xf32> to vector<256x8xf32>
    %10 = arith.addf %5, %9 : vector<256x8xf32>
    %11 = vector.shape_cast %10 : vector<256x8xf32> to vector<16x16x8xf32>
    %c0_7 = arith.constant 0 : index
    %c0_8 = arith.constant 0 : index
    %c0_9 = arith.constant 0 : index
    %c0_10 = arith.constant 0 : index
    %12 = vector.load %arg4[%c0_7, %c0_8, %c0_9, %c0_10] : memref<1x16x16x8xf32, #tpu.memory_space<vmem>>, vector<1x16x16x8xf32>
    %13 = vector.shape_cast %12 : vector<1x16x16x8xf32> to vector<16x16x8xf32>
    %14 = vector.shape_cast %11 : vector<16x16x8xf32> to vector<1x16x16x8xf32>
    tpu.vector_store %arg4[%c0_7, %c0_8, %c0_9, %c0_10], %14 {strides = array<i32>} : memref<1x16x16x8xf32, #tpu.memory_space<vmem>>, vector<1x16x16x8xf32>,
    %cst_11 = arith.constant dense<0.000000e+00> : vector<8xf32>
    %15 = vector.multi_reduction <add>, %10, %cst_11 [0] : vector<256x8xf32> to vector<8xf32>
    %16 = vector.shape_cast %15 : vector<8xf32> to vector<1x8xf32>
    %17 = arith.mulf %10, %10 : vector<256x8xf32>
    %cst_12 = arith.constant dense<0.000000e+00> : vector<8xf32>
    %18 = vector.multi_reduction <add>, %17, %cst_12 [0] : vector<256x8xf32> to vector<8xf32>
    %19 = vector.shape_cast %18 : vector<8xf32> to vector<1x8xf32>
    %20 = tpu.concatenate %16, %19 in 0 : vector<1x8xf32>, vector<1x8xf32> -> vector<2x8xf32>
    %c0_13 = arith.constant 0 : index
    %c0_14 = arith.constant 0 : index
    %c0_15 = arith.constant 0 : index
    %21 = vector.load %arg5[%c0_13, %c0_14, %c0_15] : memref<1x2x8xf32, #tpu.memory_space<vmem>>, vector<1x2x8xf32>
    %22 = vector.shape_cast %21 : vector<1x2x8xf32> to vector<2x8xf32>
    %23 = vector.shape_cast %20 : vector<2x8xf32> to vector<1x2x8xf32>
    tpu.vector_store %arg5[%c0_13, %c0_14, %c0_15], %23 {strides = array<i32>} : memref<1x2x8xf32, #tpu.memory_space<vmem>>, vector<1x2x8xf32>,
    return
  }
  func.func @transform_0(%arg0: i32) -> (i32, i32, i32, i32) {
    %c0_i32 = arith.constant 0 : i32
    %c0_i32_0 = arith.constant 0 : i32
    %c0_i32_1 = arith.constant 0 : i32
    %c0_i32_2 = arith.constant 0 : i32
    return %arg0, %c0_i32, %c0_i32_0, %c0_i32_1 : i32, i32, i32, i32
  }
  func.func @transform_1(%arg0: i32) -> (i32, i32) {
    %c0_i32 = arith.constant 0 : i32
    %c0_i32_0 = arith.constant 0 : i32
    %c0_i32_1 = arith.constant 0 : i32
    return %c0_i32, %c0_i32_0 : i32, i32
  }
  func.func @transform_2(%arg0: i32) -> (i32, i32) {
    %c0_i32 = arith.constant 0 : i32
    %c0_i32_0 = arith.constant 0 : i32
    %c0_i32_1 = arith.constant 0 : i32
    return %c0_i32, %c0_i32_0 : i32, i32
  }
  func.func @transform_3(%arg0: i32) -> (i32, i32, i32, i32) {
    %c0_i32 = arith.constant 0 : i32
    %c0_i32_0 = arith.constant 0 : i32
    %c0_i32_1 = arith.constant 0 : i32
    %c0_i32_2 = arith.constant 0 : i32
    return %arg0, %c0_i32, %c0_i32_0, %c0_i32_1 : i32, i32, i32, i32
  }
  func.func @transform_4(%arg0: i32) -> (i32, i32, i32) {
    %c0_i32 = arith.constant 0 : i32
    %c0_i32_0 = arith.constant 0 : i32
    %c0_i32_1 = arith.constant 0 : i32
    return %arg0, %c0_i32, %c0_i32_0 : i32, i32, i32
  }
}

module attributes {stable_mosaic.version = 11 : i64} {
  func.func @_epilogue_kernel(%arg0: i32, %arg1: memref<1x16x16x8xf32, #tpu.memory_space<vmem>>, %arg2: memref<1x16x16x8xf32, #tpu.memory_space<vmem>>, %arg3: memref<1x8xf32, #tpu.memory_space<vmem>>, %arg4: memref<1x8xf32, #tpu.memory_space<vmem>>, %arg5: memref<1x8xf32, #tpu.memory_space<vmem>>, %arg6: memref<1x8xf32, #tpu.memory_space<vmem>>, %arg7: memref<1x16x16x8xf32, #tpu.memory_space<vmem>>) attributes {dimension_semantics = [#tpu.dimension_semantics<parallel>], iteration_bounds = array<i64: 2>, scalar_prefetch = 0 : i64, scratch_operands = 0 : i64, tpu.core_type = #tpu.core_type<tc>, window_params = [{transform_indices = @transform_0, window_bounds = array<i64: 1, 16, 16, 8>}, {transform_indices = @transform_1, window_bounds = array<i64: 1, 16, 16, 8>}, {pipeline_mode = #tpu.pipeline_mode<synchronous>, transform_indices = @transform_2, window_bounds = array<i64: 1, 8>}, {pipeline_mode = #tpu.pipeline_mode<synchronous>, transform_indices = @transform_3, window_bounds = array<i64: 1, 8>}, {pipeline_mode = #tpu.pipeline_mode<synchronous>, transform_indices = @transform_4, window_bounds = array<i64: 1, 8>}, {pipeline_mode = #tpu.pipeline_mode<synchronous>, transform_indices = @transform_5, window_bounds = array<i64: 1, 8>}, {transform_indices = @transform_6, window_bounds = array<i64: 1, 16, 16, 8>}]} {
    %c0 = arith.constant 0 : index
    %c0_0 = arith.constant 0 : index
    %c0_1 = arith.constant 0 : index
    %c0_2 = arith.constant 0 : index
    %0 = vector.load %arg1[%c0, %c0_0, %c0_1, %c0_2] : memref<1x16x16x8xf32, #tpu.memory_space<vmem>>, vector<1x16x16x8xf32>
    %1 = vector.shape_cast %0 : vector<1x16x16x8xf32> to vector<16x16x8xf32>
    %c0_3 = arith.constant 0 : index
    %c0_4 = arith.constant 0 : index
    %2 = vector.load %arg3[%c0_3, %c0_4] : memref<1x8xf32, #tpu.memory_space<vmem>>, vector<1x8xf32>
    %3 = vector.shape_cast %2 : vector<1x8xf32> to vector<8xf32>
    %4 = vector.shape_cast %3 : vector<8xf32> to vector<1x1x8xf32>
    %5 = vector.broadcast %4 : vector<1x1x8xf32> to vector<16x16x8xf32>
    %6 = arith.mulf %1, %5 : vector<16x16x8xf32>
    %c0_5 = arith.constant 0 : index
    %c0_6 = arith.constant 0 : index
    %7 = vector.load %arg4[%c0_5, %c0_6] : memref<1x8xf32, #tpu.memory_space<vmem>>, vector<1x8xf32>
    %8 = vector.shape_cast %7 : vector<1x8xf32> to vector<8xf32>
    %9 = vector.shape_cast %8 : vector<8xf32> to vector<1x1x8xf32>
    %10 = vector.broadcast %9 : vector<1x1x8xf32> to vector<16x16x8xf32>
    %11 = arith.addf %6, %10 : vector<16x16x8xf32>
    %c0_7 = arith.constant 0 : index
    %c0_8 = arith.constant 0 : index
    %c0_9 = arith.constant 0 : index
    %c0_10 = arith.constant 0 : index
    %12 = vector.load %arg2[%c0_7, %c0_8, %c0_9, %c0_10] : memref<1x16x16x8xf32, #tpu.memory_space<vmem>>, vector<1x16x16x8xf32>
    %13 = vector.shape_cast %12 : vector<1x16x16x8xf32> to vector<16x16x8xf32>
    %c0_11 = arith.constant 0 : index
    %c0_12 = arith.constant 0 : index
    %14 = vector.load %arg5[%c0_11, %c0_12] : memref<1x8xf32, #tpu.memory_space<vmem>>, vector<1x8xf32>
    %15 = vector.shape_cast %14 : vector<1x8xf32> to vector<8xf32>
    %16 = vector.shape_cast %15 : vector<8xf32> to vector<1x1x8xf32>
    %17 = vector.broadcast %16 : vector<1x1x8xf32> to vector<16x16x8xf32>
    %18 = arith.mulf %13, %17 : vector<16x16x8xf32>
    %19 = arith.addf %11, %18 : vector<16x16x8xf32>
    %c0_13 = arith.constant 0 : index
    %c0_14 = arith.constant 0 : index
    %20 = vector.load %arg6[%c0_13, %c0_14] : memref<1x8xf32, #tpu.memory_space<vmem>>, vector<1x8xf32>
    %21 = vector.shape_cast %20 : vector<1x8xf32> to vector<8xf32>
    %22 = vector.shape_cast %21 : vector<8xf32> to vector<1x1x8xf32>
    %23 = vector.broadcast %22 : vector<1x1x8xf32> to vector<16x16x8xf32>
    %24 = arith.addf %19, %23 : vector<16x16x8xf32>
    %c0_15 = arith.constant 0 : index
    %c0_16 = arith.constant 0 : index
    %c0_17 = arith.constant 0 : index
    %c0_18 = arith.constant 0 : index
    %25 = vector.load %arg7[%c0_15, %c0_16, %c0_17, %c0_18] : memref<1x16x16x8xf32, #tpu.memory_space<vmem>>, vector<1x16x16x8xf32>
    %26 = vector.shape_cast %25 : vector<1x16x16x8xf32> to vector<16x16x8xf32>
    %27 = vector.shape_cast %24 : vector<16x16x8xf32> to vector<1x16x16x8xf32>
    tpu.vector_store %arg7[%c0_15, %c0_16, %c0_17, %c0_18], %27 {strides = array<i32>} : memref<1x16x16x8xf32, #tpu.memory_space<vmem>>, vector<1x16x16x8xf32>,
    return
  }
  func.func @transform_0(%arg0: i32) -> (i32, i32, i32, i32) {
    %c0_i32 = arith.constant 0 : i32
    %c0_i32_0 = arith.constant 0 : i32
    %c0_i32_1 = arith.constant 0 : i32
    %c0_i32_2 = arith.constant 0 : i32
    return %arg0, %c0_i32, %c0_i32_0, %c0_i32_1 : i32, i32, i32, i32
  }
  func.func @transform_1(%arg0: i32) -> (i32, i32, i32, i32) {
    %c0_i32 = arith.constant 0 : i32
    %c0_i32_0 = arith.constant 0 : i32
    %c0_i32_1 = arith.constant 0 : i32
    %c0_i32_2 = arith.constant 0 : i32
    return %arg0, %c0_i32, %c0_i32_0, %c0_i32_1 : i32, i32, i32, i32
  }
  func.func @transform_2(%arg0: i32) -> (i32, i32) {
    %c0_i32 = arith.constant 0 : i32
    %c0_i32_0 = arith.constant 0 : i32
    %c0_i32_1 = arith.constant 0 : i32
    return %c0_i32, %c0_i32_0 : i32, i32
  }
  func.func @transform_3(%arg0: i32) -> (i32, i32) {
    %c0_i32 = arith.constant 0 : i32
    %c0_i32_0 = arith.constant 0 : i32
    %c0_i32_1 = arith.constant 0 : i32
    return %c0_i32, %c0_i32_0 : i32, i32
  }
  func.func @transform_4(%arg0: i32) -> (i32, i32) {
    %c0_i32 = arith.constant 0 : i32
    %c0_i32_0 = arith.constant 0 : i32
    %c0_i32_1 = arith.constant 0 : i32
    return %c0_i32, %c0_i32_0 : i32, i32
  }
  func.func @transform_5(%arg0: i32) -> (i32, i32) {
    %c0_i32 = arith.constant 0 : i32
    %c0_i32_0 = arith.constant 0 : i32
    %c0_i32_1 = arith.constant 0 : i32
    return %c0_i32, %c0_i32_0 : i32, i32
  }
  func.func @transform_6(%arg0: i32) -> (i32, i32, i32, i32) {
    %c0_i32 = arith.constant 0 : i32
    %c0_i32_0 = arith.constant 0 : i32
    %c0_i32_1 = arith.constant 0 : i32
    %c0_i32_2 = arith.constant 0 : i32
    return %arg0, %c0_i32, %c0_i32_0, %c0_i32_1 : i32, i32, i32, i32
  }
}

</mosaic_0001>

<llo_original>
// kernel: _forward.8
$region0: #{_forward.8}
  #allocation0 [shape = 'u32[]', space=smem, size = 0x4, offset = 0x4, fixed_abs, tag = 'smem constant byte address 0x4 - core index']
  #allocation1 [shape = 'u32[144,128]{1,0:T(1,128)}', space=vmem, size = 0x12000, scoped, tag = 'internal scratch']
  %s0 = inlined_call_operand.vmem [shape: f32[2,16,16,4], index: 0, kind: input, shape index: {}]
  %s1 = inlined_call_operand.vmem [shape: bf16[4,8], index: 1, kind: input, shape index: {}]
  %s2 = inlined_call_operand.vmem [shape: f32[1,8], index: 2, kind: input, shape index: {}]
  %s3 = inlined_call_operand.vmem [shape: f32[2,16,16,8], index: 3, kind: output, shape index: {0}]
  %s4 = inlined_call_operand.vmem [shape: f32[2,2,8], index: 4, kind: output, shape index: {1}]
  %5 = xla_tuple %s3, %s4
  %s6 = sld [smem:[#allocation0]]
  $region53: #{_forward.8} parent=0
    _
  %s8 = ssub.s32 1, %s6
  %s9 = scalar_select 0, %s8, %s6
  loop: start=0, step=1, limit=4
  $region2: #{_forward.8} parent=0 // loop_pre_header
    _
  $region3: #{_forward.8} parent=0 // loop_header
    %s11 = sphi 0, %s15
    %p12 = scmp.ge.s32.totalorder %s11, 4
    %s21 = sphi 0, %s23
    %s24 = sphi 0, %s21
    %s25 = sphi 0, %s24
    %s41 = sphi 0, %s25
    %s45 = sphi 0, %s45
    %s47 = sphi 0, %s45
    %s48 = sphi 0, %s47
    %s62 = sphi 0, %s48
    %s66 = sphi 0, %s66
    %s68 = sphi 0, %s66
    %s69 = sphi 0, %s68
    %s83 = sphi 0, %s69
    %s89 = sphi 0, %s91
    %s92 = sphi 0, %s89
    %s93 = sphi 0, %s92
    %s109 = sphi 0, %s93
    %s115 = sphi 0, %s117
    %s118 = sphi 0, %s115
    %s119 = sphi 0, %s118
    %s135 = sphi 0, %s119
  $region4: #{_forward.8} parent=0 // loop_header_branch
    %14 = sbr.rel (%p12) target = $region8
  $region5: #{_forward.8} parent=0 // loop_body
    %s16 = ssub.s32 %s11, 1
    %s17 = ssub.s32 %s11, 2
    %s18 = sadd.s32 %s11, 1
    %s19 = ssub.s32 %s11, %s18
    %p20 = scmp.eq.s32.totalorder %s19, 0
    %s22 = sadd.s32 %s21, 1
    %s23 = scalar_select %p20, %s21, %s22
    %p26 = pneg %p20
    %p27 = scmp.eq.s32.totalorder %s11, 1
    %p28 = por %p26, %p27
    %p29 = scmp.ne.s32.totalorder %s21, %s24
    %p30 = scmp.eq.s32.totalorder %s11, 0
    %p31 = por %p29, %p30
    %p32 = scmp.ne.s32.totalorder %s21, %s24
    %p33 = scmp.eq.s32.totalorder %s16, 1
    %p34 = por %p32, %p33
    %p35 = scmp.ne.s32.totalorder %s24, %s25
    %p36 = scmp.eq.s32.totalorder %s16, 0
    %p37 = por %p35, %p36
    %p38 = scmp.ne.s32.totalorder %s24, %s25
    %p39 = scmp.eq.s32.totalorder %s17, 1
    %p40 = por %p38, %p39
    %p42 = scmp.ne.s32.totalorder %s25, %s41
    %p43 = scmp.eq.s32.totalorder %s17, 0
    %p44 = por %p42, %p43
    %s46 = sadd.s32 %s45, 1
    %p49 = scmp.eq.s32.totalorder %s11, 1
    %p50 = scmp.ne.s32.totalorder %s45, %s47
    %p51 = scmp.eq.s32.totalorder %s11, 0
    %p52 = por %p50, %p51
    %p53 = scmp.ne.s32.totalorder %s45, %s47
    %p54 = scmp.eq.s32.totalorder %s16, 1
    %p55 = por %p53, %p54
    %p56 = scmp.ne.s32.totalorder %s47, %s48
    %p57 = scmp.eq.s32.totalorder %s16, 0
    %p58 = por %p56, %p57
    %p59 = scmp.ne.s32.totalorder %s47, %s48
    %p60 = scmp.eq.s32.totalorder %s17, 1
    %p61 = por %p59, %p60
    %p63 = scmp.ne.s32.totalorder %s48, %s62
    %p64 = scmp.eq.s32.totalorder %s17, 0
    %p65 = por %p63, %p64
    %s67 = sadd.s32 %s66, 1
    %p70 = scmp.eq.s32.totalorder %s11, 1
    %p71 = scmp.ne.s32.totalorder %s66, %s68
    %p72 = scmp.eq.s32.totalorder %s11, 0
    %p73 = por %p71, %p72
    %p74 = scmp.ne.s32.totalorder %s66, %s68
    %p75 = scmp.eq.s32.totalorder %s16, 1
    %p76 = por %p74, %p75
    %p77 = scmp.ne.s32.totalorder %s68, %s69
    %p78 = scmp.eq.s32.totalorder %s16, 0
    %p79 = por %p77, %p78
    %p80 = scmp.ne.s32.totalorder %s68, %s69
    %p81 = scmp.eq.s32.totalorder %s17, 1
    %p82 = por %p80, %p81
    %p84 = scmp.ne.s32.totalorder %s69, %s83
    %p85 = scmp.eq.s32.totalorder %s17, 0
    %p86 = por %p84, %p85
    %s87 = ssub.s32 %s11, %s18
    %p88 = scmp.eq.s32.totalorder %s87, 0
    %s90 = sadd.s32 %s89, 1
    %s91 = scalar_select %p88, %s89, %s90
    %p94 = pneg %p88
    %p95 = scmp.eq.s32.totalorder %s11, 1
    %p96 = por %p94, %p95
    %p97 = scmp.ne.s32.totalorder %s89, %s92
    %p98 = scmp.eq.s32.totalorder %s11, 0
    %p99 = por %p97, %p98
    %p100 = scmp.ne.s32.totalorder %s89, %s92
    %p101 = scmp.eq.s32.totalorder %s16, 1
    %p102 = por %p100, %p101
    %p103 = scmp.ne.s32.totalorder %s92, %s93
    %p104 = scmp.eq.s32.totalorder %s16, 0
    %p105 = por %p103, %p104
    %p106 = scmp.ne.s32.totalorder %s92, %s93
    %p107 = scmp.eq.s32.totalorder %s17, 1
    %p108 = por %p106, %p107
    %p110 = scmp.ne.s32.totalorder %s93, %s109
    %p111 = scmp.eq.s32.totalorder %s17, 0
    %p112 = por %p110, %p111
    %s113 = ssub.s32 %s11, %s18
    %p114 = scmp.eq.s32.totalorder %s113, 0
    %s116 = sadd.s32 %s115, 1
    %s117 = scalar_select %p114, %s115, %s116
    %p120 = pneg %p114
    %p121 = scmp.eq.s32.totalorder %s11, 1
    %p122 = por %p120, %p121
    %p123 = scmp.ne.s32.totalorder %s115, %s118
    %p124 = scmp.eq.s32.totalorder %s11, 0
    %p125 = por %p123, %p124
    %p126 = scmp.ne.s32.totalorder %s115, %s118
    %p127 = scmp.eq.s32.totalorder %s16, 1
    %p128 = por %p126, %p127
    %p129 = scmp.ne.s32.totalorder %s118, %s119
    %p130 = scmp.eq.s32.totalorder %s16, 0
    %p131 = por %p129, %p130
    %p132 = scmp.ne.s32.totalorder %s118, %s119
    %p133 = scmp.eq.s32.totalorder %s17, 1
    %p134 = por %p132, %p133
    %p136 = scmp.ne.s32.totalorder %s119, %s135
    %p137 = scmp.eq.s32.totalorder %s17, 0
    %p138 = por %p136, %p137
    %p139 = scmp.le.s32.totalorder 1, %s11
    %p140 = scmp.lt.s32.totalorder %s11, 3
    %p141 = pnand %p139, %p140
    %p142 = pneg %p141
    // Predicated region
    $region9: #{_forward.8} parent=5 // pred_check
      _
    $region10: #{_forward.8} parent=5 // pred_check_branch
      %144 = sbr.rel (%p141) target = $region12
    $region11: #{_forward.8} parent=5 // pred_region
      %s145 = ssub.s32 %s11, 1
      // Predicated region
      $region13: #{_forward.8} parent=11 // pred_check
        %p146 = pneg %p58
      $region14: #{_forward.8} parent=11 // pred_check_branch
        %148 = sbr.rel (%p146) target = $region16
      $region15: #{_forward.8} parent=11 // pred_region
        _
      $region16: #{_forward.8} parent=11 // pred_fallthru
        _
      // Predicated region
      $region17: #{_forward.8} parent=11 // pred_check
        %p149 = pneg %p79
      $region18: #{_forward.8} parent=11 // pred_check_branch
        %151 = sbr.rel (%p149) target = $region20
      $region19: #{_forward.8} parent=11 // pred_region
        _
      $region20: #{_forward.8} parent=11 // pred_fallthru
        _
    $region12: #{_forward.8} parent=5 // pred_fallthru
      _
    %p152 = scmp.lt.s32.totalorder %s11, 2
    // Predicated region
    $region21: #{_forward.8} parent=5 // pred_check
      %p153 = pneg %p152
    $region22: #{_forward.8} parent=5 // pred_check_branch
      %155 = sbr.rel (%p153) target = $region24
    $region23: #{_forward.8} parent=5 // pred_region
      // Predicated region
      $region25: #{_forward.8} parent=23 // pred_check
        %p156 = pneg %p31
      $region26: #{_forward.8} parent=23 // pred_check_branch
        %158 = sbr.rel (%p156) target = $region28
      $region27: #{_forward.8} parent=23 // pred_region
        %p159 = scmp.lt.s32.totalorder %s11, 1
        %s160 = scalar_select %p159, %s11, 1
        %s161 = smul.addr %s160, 32
        %s162 = smul.addr %s161, 8
        %s163 = scalar_lea.vmem %s0, %s162
      $region28: #{_forward.8} parent=23 // pred_fallthru
        _
    $region24: #{_forward.8} parent=5 // pred_fallthru
      _
    %p164 = scmp.le.s32.totalorder 1, %s11
    %p165 = scmp.lt.s32.totalorder %s11, 3
    %p166 = pnand %p164, %p165
    %p167 = pneg %p166
    // Predicated region
    $region29: #{_forward.8} parent=5 // pred_check
      _
    $region30: #{_forward.8} parent=5 // pred_check_branch
      %169 = sbr.rel (%p166) target = $region32
    $region31: #{_forward.8} parent=5 // pred_region
      %s170 = ssub.s32 %s11, 1
      %p171 = scmp.lt.s32.totalorder %s16, 1
      %s172 = scalar_select %p171, %s16, 1
      %s173 = smul.addr %s172, 32
      %s174 = smul.addr %s173, 8
      %s175 = scalar_lea.vmem %s0, %s174
      %p176 = pneg %p37
      %p177 = pneg %p34
      %p178 = pneg %p58
      %p179 = pneg %p55
      %p180 = pneg %p79
      %p181 = pneg %p76
      %p182 = pneg %p105
      %p183 = pneg %p102
      %p184 = scmp.lt.s32.totalorder %s16, 1
      %s185 = scalar_select %p184, %s16, 1
      %s186 = smul.addr %s185, 32
      %s187 = smul.addr %s186, 8
      %s188 = scalar_lea.vmem %s3, %s187
      %p189 = pneg %p131
      %p190 = pneg %p128
      %p191 = scmp.lt.s32.totalorder %s16, 1
      %s192 = scalar_select %p191, %s16, 1
      %s193 = smul.addr %s192, 2
      %s194 = scalar_lea.vmem %s4, %s193
      %p195 = scmp.lt.s32.totalorder %s16, 1
      %s196 = scalar_select %p195, %s16, 1
      %s197 = smul.addr %s196, 32
      %s198 = smul.addr %s197, 8
      %s199 = scalar_lea.vmem %s0, %s198
      %p200 = scmp.lt.s32.totalorder %s16, 1
      %s201 = scalar_select %p200, %s16, 1
      %s202 = smul.addr %s201, 32
      %s203 = smul.addr %s202, 8
      %s204 = scalar_lea.vmem %s3, %s203
      %p205 = scmp.lt.s32.totalorder %s16, 1
      %s206 = scalar_select %p205, %s16, 1
      %s207 = smul.addr %s206, 2
      %s208 = scalar_lea.vmem %s4, %s207
      %v210 = vld [vmem:[%s199] sm:$0xff]
      %v211 = vld [vmem:[%s199 + $0x8] sm:$0xff]
      %v212 = vld [vmem:[%s199 + $0x10] sm:$0xff]
      %v213 = vld [vmem:[%s199 + $0x18] sm:$0xff]
      %v214 = vld [vmem:[%s199 + $0x20] sm:$0xff]
      %v215 = vld [vmem:[%s199 + $0x28] sm:$0xff]
      %v216 = vld [vmem:[%s199 + $0x30] sm:$0xff]
      %v217 = vld [vmem:[%s199 + $0x38] sm:$0xff]
      %v218 = vld [vmem:[%s199 + $0x40] sm:$0xff]
      %v219 = vld [vmem:[%s199 + $0x48] sm:$0xff]
      %v220 = vld [vmem:[%s199 + $0x50] sm:$0xff]
      %v221 = vld [vmem:[%s199 + $0x58] sm:$0xff]
      %v222 = vld [vmem:[%s199 + $0x60] sm:$0xff]
      %v223 = vld [vmem:[%s199 + $0x68] sm:$0xff]
      %v224 = vld [vmem:[%s199 + $0x70] sm:$0xff]
      %v225 = vld [vmem:[%s199 + $0x78] sm:$0xff]
      %v226 = vld [vmem:[%s199 + $0x80] sm:$0xff]
      %v227 = vld [vmem:[%s199 + $0x88] sm:$0xff]
      %v228 = vld [vmem:[%s199 + $0x90] sm:$0xff]
      %v229 = vld [vmem:[%s199 + $0x98] sm:$0xff]
      %v230 = vld [vmem:[%s199 + $0xa0] sm:$0xff]
      %v231 = vld [vmem:[%s199 + $0xa8] sm:$0xff]
      %v232 = vld [vmem:[%s199 + $0xb0] sm:$0xff]
      %v233 = vld [vmem:[%s199 + $0xb8] sm:$0xff]
      %v234 = vld [vmem:[%s199 + $0xc0] sm:$0xff]
      %v235 = vld [vmem:[%s199 + $0xc8] sm:$0xff]
      %v236 = vld [vmem:[%s199 + $0xd0] sm:$0xff]
      %v237 = vld [vmem:[%s199 + $0xd8] sm:$0xff]
      %v238 = vld [vmem:[%s199 + $0xe0] sm:$0xff]
      %v239 = vld [vmem:[%s199 + $0xe8] sm:$0xff]
      %v240 = vld [vmem:[%s199 + $0xf0] sm:$0xff]
      %v241 = vld [vmem:[%s199 + $0xf8] sm:$0xff]
      %v242 = vpack.c.bf16 %v211, %v210
      %v243 = vpack.c.bf16 %v213, %v212
      %v244 = vpack.c.bf16 %v215, %v214
      %v245 = vpack.c.bf16 %v217, %v216
      %v246 = vpack.c.bf16 %v219, %v218
      %v247 = vpack.c.bf16 %v221, %v220
      %v248 = vpack.c.bf16 %v223, %v222
      %v249 = vpack.c.bf16 %v225, %v224
      %v250 = vpack.c.bf16 %v227, %v226
      %v251 = vpack.c.bf16 %v229, %v228
      %v252 = vpack.c.bf16 %v231, %v230
      %v253 = vpack.c.bf16 %v233, %v232
      %v254 = vpack.c.bf16 %v235, %v234
      %v255 = vpack.c.bf16 %v237, %v236
      %v256 = vpack.c.bf16 %v239, %v238
      %v257 = vpack.c.bf16 %v241, %v240
      %v258 = vld [vmem:[%s1] sm:$0x3]
      %v259 = vld [vmem:[%s2] sm:$0x1]
      %v261 = vlaneseq
      %v262 = vshrl.u32 %v261, 7
      %v263 = vsub.s32 0, %v262
      %v264 = vrot.slane %v259, %v263
      %vm266 = vcmask 31744
      %v268 = vsel %vm266, %v242, 0
      %v271 = vsel %vm266, %v243, 0
      %v274 = vsel %vm266, %v244, 0
      %v277 = vsel %vm266, %v245, 0
      %v280 = vsel %vm266, %v246, 0
      %v283 = vsel %vm266, %v247, 0
      %v286 = vsel %vm266, %v248, 0
      %v289 = vsel %vm266, %v249, 0
      %v292 = vsel %vm266, %v250, 0
      %v295 = vsel %vm266, %v251, 0
      %v298 = vsel %vm266, %v252, 0
      %v301 = vsel %vm266, %v253, 0
      %v304 = vsel %vm266, %v254, 0
      %v307 = vsel %vm266, %v255, 0
      %v310 = vsel %vm266, %v256, 0
      %v313 = vsel %vm266, %v257, 0
      %vm315 = vcmask 1041408
      %v317 = vsel %vm315, %v258, 0
      %319 = vmatprep.subr.bf16.mxu0 0
      %320 = vmatpush1.bf16.msra.mxu0 %v317
      %321 = vmatprep.subr.bf16.mxu0 0
      %322 = vmatpush1.bf16.msra.mxu0 0
      %323 = vmatprep.subr.bf16.mxu0 0
      %324 = vmatpush1.bf16.msra.mxu0 0
      %325 = vmatprep.subr.bf16.mxu0 0
      %326 = vmatpush1.bf16.msra.mxu0 0
      %327 = vmatprep.subr.bf16.mxu0 0
      %328 = vmatpush1.bf16.msra.mxu0 0
      %329 = vmatprep.subr.bf16.mxu0 0
      %330 = vmatpush1.bf16.msra.mxu0 0
      %331 = vmatprep.subr.bf16.mxu0 0
      %332 = vmatpush1.bf16.msra.mxu0 0
      %333 = vmatprep.subr.bf16.mxu0 0
      %334 = vmatpush1.bf16.msra.mxu0 0
      %335 = vmatprep.subr.bf16.mxu0 0
      %336 = vmatpush1.bf16.msra.mxu0 0
      %337 = vmatprep.subr.bf16.mxu0 0
      %338 = vmatpush1.bf16.msra.mxu0 0
      %339 = vmatprep.subr.bf16.mxu0 0
      %340 = vmatpush1.bf16.msra.mxu0 0
      %341 = vmatprep.subr.bf16.mxu0 0
      %342 = vmatpush1.bf16.msra.mxu0 0
      %343 = vmatprep.subr.bf16.mxu0 0
      %344 = vmatpush1.bf16.msra.mxu0 0
      %345 = vmatprep.subr.bf16.mxu0 0
      %346 = vmatpush1.bf16.msra.mxu0 0
      %347 = vmatprep.subr.bf16.mxu0 0
      %348 = vmatpush1.bf16.msra.mxu0 0
      %349 = vmatprep.subr.bf16.mxu0 0
      %350 = vmatpush1.bf16.msra.mxu0 0
      %351 = vmatprep.mubr.bf16.mxu0 0
      %352 = vmatmul.mubr.bf16.gmra.mrb[0].mxu0 %v268
      %v353 = vpop.f32.mrb[0].mxu0
      %v354 = vadd.f32 %v264, %v353
      %v355 = vpop.f32.mrb[0].mxu0
      %v356 = vpop.f32.mrb[0].mxu0
      %v357 = vadd.f32 %v264, %v356
      %v358 = vpop.f32.mrb[0].mxu0
      %359 = vmatprep.mubr.bf16.mxu0 0
      %360 = vmatmul.mubr.bf16.gmra.mrb[0].mxu0 %v271
      %v361 = vpop.f32.mrb[0].mxu0
      %v362 = vadd.f32 %v264, %v361
      %v363 = vpop.f32.mrb[0].mxu0
      %v364 = vpop.f32.mrb[0].mxu0
      %v365 = vadd.f32 %v264, %v364
      %v366 = vpop.f32.mrb[0].mxu0
      %367 = vmatprep.mubr.bf16.mxu0 0
      %368 = vmatmul.mubr.bf16.gmra.mrb[0].mxu0 %v274
      %v369 = vpop.f32.mrb[0].mxu0
      %v370 = vadd.f32 %v264, %v369
      %v371 = vpop.f32.mrb[0].mxu0
      %v372 = vpop.f32.mrb[0].mxu0
      %v373 = vadd.f32 %v264, %v372
      %v374 = vpop.f32.mrb[0].mxu0
      %375 = vmatprep.mubr.bf16.mxu0 0
      %376 = vmatmul.mubr.bf16.gmra.mrb[0].mxu0 %v277
      %v377 = vpop.f32.mrb[0].mxu0
      %v378 = vadd.f32 %v264, %v377
      %v379 = vpop.f32.mrb[0].mxu0
      %v380 = vpop.f32.mrb[0].mxu0
      %v381 = vadd.f32 %v264, %v380
      %v382 = vpop.f32.mrb[0].mxu0
      %383 = vmatprep.mubr.bf16.mxu0 0
      %384 = vmatmul.mubr.bf16.gmra.mrb[0].mxu0 %v280
      %v385 = vpop.f32.mrb[0].mxu0
      %v386 = vadd.f32 %v264, %v385
      %v387 = vpop.f32.mrb[0].mxu0
      %v388 = vpop.f32.mrb[0].mxu0
      %v389 = vadd.f32 %v264, %v388
      %v390 = vpop.f32.mrb[0].mxu0
      %391 = vmatprep.mubr.bf16.mxu0 0
      %392 = vmatmul.mubr.bf16.gmra.mrb[0].mxu0 %v283
      %v393 = vpop.f32.mrb[0].mxu0
      %v394 = vadd.f32 %v264, %v393
      %v395 = vpop.f32.mrb[0].mxu0
      %v396 = vpop.f32.mrb[0].mxu0
      %v397 = vadd.f32 %v264, %v396
      %v398 = vpop.f32.mrb[0].mxu0
      %399 = vmatprep.mubr.bf16.mxu0 0
      %400 = vmatmul.mubr.bf16.gmra.mrb[0].mxu0 %v286
      %v401 = vpop.f32.mrb[0].mxu0
      %v402 = vadd.f32 %v264, %v401
      %v403 = vpop.f32.mrb[0].mxu0
      %v404 = vpop.f32.mrb[0].mxu0
      %v405 = vadd.f32 %v264, %v404
      %v406 = vpop.f32.mrb[0].mxu0
      %407 = vmatprep.mubr.bf16.mxu0 0
      %408 = vmatmul.mubr.bf16.gmra.mrb[0].mxu0 %v289
      %v409 = vpop.f32.mrb[0].mxu0
      %v410 = vadd.f32 %v264, %v409
      %v411 = vpop.f32.mrb[0].mxu0
      %v412 = vpop.f32.mrb[0].mxu0
      %v413 = vadd.f32 %v264, %v412
      %v414 = vpop.f32.mrb[0].mxu0
      %415 = vmatprep.mubr.bf16.mxu0 0
      %416 = vmatmul.mubr.bf16.gmra.mrb[0].mxu0 %v292
      %v417 = vpop.f32.mrb[0].mxu0
      %v418 = vadd.f32 %v264, %v417
      %v419 = vpop.f32.mrb[0].mxu0
      %v420 = vpop.f32.mrb[0].mxu0
      %v421 = vadd.f32 %v264, %v420
      %v422 = vpop.f32.mrb[0].mxu0
      %423 = vmatprep.mubr.bf16.mxu0 0
      %424 = vmatmul.mubr.bf16.gmra.mrb[0].mxu0 %v295
      %v425 = vpop.f32.mrb[0].mxu0
      %v426 = vadd.f32 %v264, %v425
      %v427 = vpop.f32.mrb[0].mxu0
      %v428 = vpop.f32.mrb[0].mxu0
      %v429 = vadd.f32 %v264, %v428
      %v430 = vpop.f32.mrb[0].mxu0
      %431 = vmatprep.mubr.bf16.mxu0 0
      %432 = vmatmul.mubr.bf16.gmra.mrb[0].mxu0 %v298
      %v433 = vpop.f32.mrb[0].mxu0
      %v434 = vadd.f32 %v264, %v433
      %v435 = vpop.f32.mrb[0].mxu0
      %v436 = vpop.f32.mrb[0].mxu0
      %v437 = vadd.f32 %v264, %v436
      %v438 = vpop.f32.mrb[0].mxu0
      %439 = vmatprep.mubr.bf16.mxu0 0
      %440 = vmatmul.mubr.bf16.gmra.mrb[0].mxu0 %v301
      %v441 = vpop.f32.mrb[0].mxu0
      %v442 = vadd.f32 %v264, %v441
      %v443 = vpop.f32.mrb[0].mxu0
      %v444 = vpop.f32.mrb[0].mxu0
      %v445 = vadd.f32 %v264, %v444
      %v446 = vpop.f32.mrb[0].mxu0
      %447 = vmatprep.mubr.bf16.mxu0 0
      %448 = vmatmul.mubr.bf16.gmra.mrb[0].mxu0 %v304
      %v449 = vpop.f32.mrb[0].mxu0
      %v450 = vadd.f32 %v264, %v449
      %v451 = vpop.f32.mrb[0].mxu0
      %v452 = vpop.f32.mrb[0].mxu0
      %v453 = vadd.f32 %v264, %v452
      %v454 = vpop.f32.mrb[0].mxu0
      %455 = vmatprep.mubr.bf16.mxu0 0
      %456 = vmatmul.mubr.bf16.gmra.mrb[0].mxu0 %v307
      %v457 = vpop.f32.mrb[0].mxu0
      %v458 = vadd.f32 %v264, %v457
      %v459 = vpop.f32.mrb[0].mxu0
      %v460 = vpop.f32.mrb[0].mxu0
      %v461 = vadd.f32 %v264, %v460
      %v462 = vpop.f32.mrb[0].mxu0
      %463 = vmatprep.mubr.bf16.mxu0 0
      %464 = vmatmul.mubr.bf16.gmra.mrb[0].mxu0 %v310
      %v465 = vpop.f32.mrb[0].mxu0
      %v466 = vadd.f32 %v264, %v465
      %v467 = vpop.f32.mrb[0].mxu0
      %v468 = vpop.f32.mrb[0].mxu0
      %v469 = vadd.f32 %v264, %v468
      %v470 = vpop.f32.mrb[0].mxu0
      %471 = vmatprep.mubr.bf16.mxu0 0
      %472 = vmatmul.mubr.bf16.gmra.mrb[0].mxu0 %v313
      %v473 = vpop.f32.mrb[0].mxu0
      %v474 = vadd.f32 %v264, %v473
      %v475 = vpop.f32.mrb[0].mxu0
      %v476 = vpop.f32.mrb[0].mxu0
      %v477 = vadd.f32 %v264, %v476
      %v478 = vpop.f32.mrb[0].mxu0
      %479 = vdwg.mxu0
      %vm480 = vcmask 64512
      %481 = vst.msk [vmem:[%s204] sm:$0xff] %vm480, %v354
      %482 = vst.msk [vmem:[%s204 + $0x8] sm:$0xff] %vm480, %v357
      %483 = vst.msk [vmem:[%s204 + $0x10] sm:$0xff] %vm480, %v362
      %484 = vst.msk [vmem:[%s204 + $0x18] sm:$0xff] %vm480, %v365
      %485 = vst.msk [vmem:[%s204 + $0x20] sm:$0xff] %vm480, %v370
      %486 = vst.msk [vmem:[%s204 + $0x28] sm:$0xff] %vm480, %v373
      %487 = vst.msk [vmem:[%s204 + $0x30] sm:$0xff] %vm480, %v378
      %488 = vst.msk [vmem:[%s204 + $0x38] sm:$0xff] %vm480, %v381
      %489 = vst.msk [vmem:[%s204 + $0x40] sm:$0xff] %vm480, %v386
      %490 = vst.msk [vmem:[%s204 + $0x48] sm:$0xff] %vm480, %v389
      %491 = vst.msk [vmem:[%s204 + $0x50] sm:$0xff] %vm480, %v394
      %492 = vst.msk [vmem:[%s204 + $0x58] sm:$0xff] %vm480, %v397
      %493 = vst.msk [vmem:[%s204 + $0x60] sm:$0xff] %vm480, %v402
      %494 = vst.msk [vmem:[%s204 + $0x68] sm:$0xff] %vm480, %v405
      %495 = vst.msk [vmem:[%s204 + $0x70] sm:$0xff] %vm480, %v410
      %496 = vst.msk [vmem:[%s204 + $0x78] sm:$0xff] %vm480, %v413
      %497 = vst.msk [vmem:[%s204 + $0x80] sm:$0xff] %vm480, %v418
      %498 = vst.msk [vmem:[%s204 + $0x88] sm:$0xff] %vm480, %v421
      %499 = vst.msk [vmem:[%s204 + $0x90] sm:$0xff] %vm480, %v426
      %500 = vst.msk [vmem:[%s204 + $0x98] sm:$0xff] %vm480, %v429
      %501 = vst.msk [vmem:[%s204 + $0xa0] sm:$0xff] %vm480, %v434
      %502 = vst.msk [vmem:[%s204 + $0xa8] sm:$0xff] %vm480, %v437
      %503 = vst.msk [vmem:[%s204 + $0xb0] sm:$0xff] %vm480, %v442
      %504 = vst.msk [vmem:[%s204 + $0xb8] sm:$0xff] %vm480, %v445
      %505 = vst.msk [vmem:[%s204 + $0xc0] sm:$0xff] %vm480, %v450
      %506 = vst.msk [vmem:[%s204 + $0xc8] sm:$0xff] %vm480, %v453
      %507 = vst.msk [vmem:[%s204 + $0xd0] sm:$0xff] %vm480, %v458
      %508 = vst.msk [vmem:[%s204 + $0xd8] sm:$0xff] %vm480, %v461
      %509 = vst.msk [vmem:[%s204 + $0xe0] sm:$0xff] %vm480, %v466
      %510 = vst.msk [vmem:[%s204 + $0xe8] sm:$0xff] %vm480, %v469
      %511 = vst.msk [vmem:[%s204 + $0xf0] sm:$0xff] %vm480, %v474
      %512 = vst.msk [vmem:[%s204 + $0xf8] sm:$0xff] %vm480, %v477
      %v513 = vsel %vm480, %v354, 0.0
      %v514 = vsel %vm480, %v357, 0.0
      %v515 = vadd.f32 %v513, %v514
      %v516 = vsel %vm480, %v362, 0.0
      %v517 = vadd.f32 %v515, %v516
      %v518 = vsel %vm480, %v365, 0.0
      %v519 = vadd.f32 %v517, %v518
      %v520 = vsel %vm480, %v370, 0.0
      %v521 = vadd.f32 %v519, %v520
      %v522 = vsel %vm480, %v373, 0.0
      %v523 = vadd.f32 %v521, %v522
      %v524 = vsel %vm480, %v378, 0.0
      %v525 = vadd.f32 %v523, %v524
      %v526 = vsel %vm480, %v381, 0.0
      %v527 = vadd.f32 %v525, %v526
      %v528 = vsel %vm480, %v386, 0.0
      %v529 = vadd.f32 %v527, %v528
      %v530 = vsel %vm480, %v389, 0.0
      %v531 = vadd.f32 %v529, %v530
      %v532 = vsel %vm480, %v394, 0.0
      %v533 = vadd.f32 %v531, %v532
      %v534 = vsel %vm480, %v397, 0.0
      %v535 = vadd.f32 %v533, %v534
      %v536 = vsel %vm480, %v402, 0.0
      %v537 = vadd.f32 %v535, %v536
      %v538 = vsel %vm480, %v405, 0.0
      %v539 = vadd.f32 %v537, %v538
      %v540 = vsel %vm480, %v410, 0.0
      %v541 = vadd.f32 %v539, %v540
      %v542 = vsel %vm480, %v413, 0.0
      %v543 = vadd.f32 %v541, %v542
      %v544 = vsel %vm480, %v418, 0.0
      %v545 = vadd.f32 %v543, %v544
      %v546 = vsel %vm480, %v421, 0.0
      %v547 = vadd.f32 %v545, %v546
      %v548 = vsel %vm480, %v426, 0.0
      %v549 = vadd.f32 %v547, %v548
      %v550 = vsel %vm480, %v429, 0.0
      %v551 = vadd.f32 %v549, %v550
      %v552 = vsel %vm480, %v434, 0.0
      %v553 = vadd.f32 %v551, %v552
      %v554 = vsel %vm480, %v437, 0.0
      %v555 = vadd.f32 %v553, %v554
      %v556 = vsel %vm480, %v442, 0.0
      %v557 = vadd.f32 %v555, %v556
      %v558 = vsel %vm480, %v445, 0.0
      %v559 = vadd.f32 %v557, %v558
      %v560 = vsel %vm480, %v450, 0.0
      %v561 = vadd.f32 %v559, %v560
      %v562 = vsel %vm480, %v453, 0.0
      %v563 = vadd.f32 %v561, %v562
      %v564 = vsel %vm480, %v458, 0.0
      %v565 = vadd.f32 %v563, %v564
      %v566 = vsel %vm480, %v461, 0.0
      %v567 = vadd.f32 %v565, %v566
      %v568 = vsel %vm480, %v466, 0.0
      %v569 = vadd.f32 %v567, %v568
      %v570 = vsel %vm480, %v469, 0.0
      %v571 = vadd.f32 %v569, %v570
      %v572 = vsel %vm480, %v474, 0.0
      %v573 = vadd.f32 %v571, %v572
      %v574 = vsel %vm480, %v477, 0.0
      %v575 = vadd.f32 %v573, %v574
      %v576 = vrot.slane %v575, 4
      %v577 = vadd.f32 %v575, %v576
      %v578 = vrot.slane %v577, 2
      %v579 = vadd.f32 %v577, %v578
      %v580 = vrot.slane %v579, 1
      %v581 = vadd.f32 %v579, %v580
      %v582 = vmul.f32 %v354, %v354
      %v583 = vmul.f32 %v357, %v357
      %v584 = vmul.f32 %v362, %v362
      %v585 = vmul.f32 %v365, %v365
      %v586 = vmul.f32 %v370, %v370
      %v587 = vmul.f32 %v373, %v373
      %v588 = vmul.f32 %v378, %v378
      %v589 = vmul.f32 %v381, %v381
      %v590 = vmul.f32 %v386, %v386
      %v591 = vmul.f32 %v389, %v389
      %v592 = vmul.f32 %v394, %v394
      %v593 = vmul.f32 %v397, %v397
      %v594 = vmul.f32 %v402, %v402
      %v595 = vmul.f32 %v405, %v405
      %v596 = vmul.f32 %v410, %v410
      %v597 = vmul.f32 %v413, %v413
      %v598 = vmul.f32 %v418, %v418
      %v599 = vmul.f32 %v421, %v421
      %v600 = vmul.f32 %v426, %v426
      %v601 = vmul.f32 %v429, %v429
      %v602 = vmul.f32 %v434, %v434
      %v603 = vmul.f32 %v437, %v437
      %v604 = vmul.f32 %v442, %v442
      %v605 = vmul.f32 %v445, %v445
      %v606 = vmul.f32 %v450, %v450
      %v607 = vmul.f32 %v453, %v453
      %v608 = vmul.f32 %v458, %v458
      %v609 = vmul.f32 %v461, %v461
      %v610 = vmul.f32 %v466, %v466
      %v611 = vmul.f32 %v469, %v469
      %v612 = vmul.f32 %v474, %v474
      %v613 = vmul.f32 %v477, %v477
      %v614 = vsel %vm480, %v582, 0.0
      %v615 = vsel %vm480, %v583, 0.0
      %v616 = vadd.f32 %v614, %v615
      %v617 = vsel %vm480, %v584, 0.0
      %v618 = vadd.f32 %v616, %v617
      %v619 = vsel %vm480, %v585, 0.0
      %v620 = vadd.f32 %v618, %v619
      %v621 = vsel %vm480, %v586, 0.0
      %v622 = vadd.f32 %v620, %v621
      %v623 = vsel %vm480, %v587, 0.0
      %v624 = vadd.f32 %v622, %v623
      %v625 = vsel %vm480, %v588, 0.0
      %v626 = vadd.f32 %v624, %v625
      %v627 = vsel %vm480, %v589, 0.0
      %v628 = vadd.f32 %v626, %v627
      %v629 = vsel %vm480, %v590, 0.0
      %v630 = vadd.f32 %v628, %v629
      %v631 = vsel %vm480, %v591, 0.0
      %v632 = vadd.f32 %v630, %v631
      %v633 = vsel %vm480, %v592, 0.0
      %v634 = vadd.f32 %v632, %v633
      %v635 = vsel %vm480, %v593, 0.0
      %v636 = vadd.f32 %v634, %v635
      %v637 = vsel %vm480, %v594, 0.0
      %v638 = vadd.f32 %v636, %v637
      %v639 = vsel %vm480, %v595, 0.0
      %v640 = vadd.f32 %v638, %v639
      %v641 = vsel %vm480, %v596, 0.0
      %v642 = vadd.f32 %v640, %v641
      %v643 = vsel %vm480, %v597, 0.0
      %v644 = vadd.f32 %v642, %v643
      %v645 = vsel %vm480, %v598, 0.0
      %v646 = vadd.f32 %v644, %v645
      %v647 = vsel %vm480, %v599, 0.0
      %v648 = vadd.f32 %v646, %v647
      %v649 = vsel %vm480, %v600, 0.0
      %v650 = vadd.f32 %v648, %v649
      %v651 = vsel %vm480, %v601, 0.0
      %v652 = vadd.f32 %v650, %v651
      %v653 = vsel %vm480, %v602, 0.0
      %v654 = vadd.f32 %v652, %v653
      %v655 = vsel %vm480, %v603, 0.0
      %v656 = vadd.f32 %v654, %v655
      %v657 = vsel %vm480, %v604, 0.0
      %v658 = vadd.f32 %v656, %v657
      %v659 = vsel %vm480, %v605, 0.0
      %v660 = vadd.f32 %v658, %v659
      %v661 = vsel %vm480, %v606, 0.0
      %v662 = vadd.f32 %v660, %v661
      %v663 = vsel %vm480, %v607, 0.0
      %v664 = vadd.f32 %v662, %v663
      %v665 = vsel %vm480, %v608, 0.0
      %v666 = vadd.f32 %v664, %v665
      %v667 = vsel %vm480, %v609, 0.0
      %v668 = vadd.f32 %v666, %v667
      %v669 = vsel %vm480, %v610, 0.0
      %v670 = vadd.f32 %v668, %v669
      %v671 = vsel %vm480, %v611, 0.0
      %v672 = vadd.f32 %v670, %v671
      %v673 = vsel %vm480, %v612, 0.0
      %v674 = vadd.f32 %v672, %v673
      %v675 = vsel %vm480, %v613, 0.0
      %v676 = vadd.f32 %v674, %v675
      %v677 = vrot.slane %v676, 4
      %v678 = vadd.f32 %v676, %v677
      %v679 = vrot.slane %v678, 2
      %v680 = vadd.f32 %v678, %v679
      %v681 = vrot.slane %v680, 1
      %v682 = vadd.f32 %v680, %v681
      %vm683 = vcmask 1040384
      %v684 = vsel %vm683, %v581, %v682
      %vm685 = vcmask 58368
      %686 = vst.msk [vmem:[%s208] sm:$0x3] %vm685, %v684
      %p687 = scmp.lt.s32.totalorder %s16, 1
      %s688 = scalar_select %p687, %s16, 1
      %s689 = smul.addr %s688, 32
      %s690 = smul.addr %s689, 8
      %s691 = scalar_lea.vmem %s3, %s690
      %p692 = scmp.lt.s32.totalorder %s16, 1
      %s693 = scalar_select %p692, %s16, 1
      %s694 = smul.addr %s693, 2
      %s695 = scalar_lea.vmem %s4, %s694
      // Predicated region
      $region33: #{_forward.8} parent=31 // pred_check
        %p696 = pneg %p102
      $region34: #{_forward.8} parent=31 // pred_check_branch
        %698 = sbr.rel (%p696) target = $region36
      $region35: #{_forward.8} parent=31 // pred_region
        _
      $region36: #{_forward.8} parent=31 // pred_fallthru
        _
      // Predicated region
      $region37: #{_forward.8} parent=31 // pred_check
        %p699 = pneg %p128
      $region38: #{_forward.8} parent=31 // pred_check_branch
        %701 = sbr.rel (%p699) target = $region40
      $region39: #{_forward.8} parent=31 // pred_region
        _
      $region40: #{_forward.8} parent=31 // pred_fallthru
        _
    $region32: #{_forward.8} parent=5 // pred_fallthru
      _
    %p702 = scmp.le.s32.totalorder 2, %s11
    // Predicated region
    $region41: #{_forward.8} parent=5 // pred_check
      %p703 = pneg %p702
    $region42: #{_forward.8} parent=5 // pred_check_branch
      %705 = sbr.rel (%p703) target = $region44
    $region43: #{_forward.8} parent=5 // pred_region
      %s706 = ssub.s32 %s11, 2
      // Predicated region
      $region45: #{_forward.8} parent=43 // pred_check
        %p707 = pneg %p108
      $region46: #{_forward.8} parent=43 // pred_check_branch
        %709 = sbr.rel (%p707) target = $region48
      $region47: #{_forward.8} parent=43 // pred_region
        %p710 = scmp.lt.s32.totalorder %s17, 1
        %s711 = scalar_select %p710, %s17, 1
        %s712 = smul.addr %s711, 32
        %s713 = smul.addr %s712, 8
        %s714 = scalar_lea.vmem %s3, %s713
      $region48: #{_forward.8} parent=43 // pred_fallthru
        _
      // Predicated region
      $region49: #{_forward.8} parent=43 // pred_check
        %p715 = pneg %p134
      $region50: #{_forward.8} parent=43 // pred_check_branch
        %717 = sbr.rel (%p715) target = $region52
      $region51: #{_forward.8} parent=43 // pred_region
        %p718 = scmp.lt.s32.totalorder %s17, 1
        %s719 = scalar_select %p718, %s17, 1
        %s720 = smul.addr %s719, 2
        %s721 = scalar_lea.vmem %s4, %s720
      $region52: #{_forward.8} parent=43 // pred_fallthru
        _
    $region44: #{_forward.8} parent=5 // pred_fallthru
      _
  $region6: #{_forward.8} parent=0 // loop_footer
    %s15 = sadd.s32 1, %s11
  $region7: #{_forward.8} parent=0 // loop_footer_branch
    %10 = sbr.rel target = $region3
  $region8: #{_forward.8} parent=0 // loop_exit
    _

// kernel: _forward.10
$region0: #{_forward.10}
  #allocation0 [shape = 'u32[]', space=smem, size = 0x4, offset = 0x4, fixed_abs, tag = 'smem constant byte address 0x4 - core index']
  #allocation1 [shape = 'u32[144,128]{1,0:T(1,128)}', space=vmem, size = 0x12000, scoped, tag = 'internal scratch']
  %s0 = inlined_call_operand.vmem [shape: f32[2,16,16,8], index: 0, kind: input, shape index: {}]
  %s1 = inlined_call_operand.vmem [shape: bf16[8,8], index: 1, kind: input, shape index: {}]
  %s2 = inlined_call_operand.vmem [shape: f32[1,8], index: 2, kind: input, shape index: {}]
  %s3 = inlined_call_operand.vmem [shape: f32[2,16,16,8], index: 3, kind: output, shape index: {0}]
  %s4 = inlined_call_operand.vmem [shape: f32[2,2,8], index: 4, kind: output, shape index: {1}]
  %5 = xla_tuple %s3, %s4
  %s6 = sld [smem:[#allocation0]]
  $region53: #{_forward.10} parent=0
    _
  %s8 = ssub.s32 1, %s6
  %s9 = scalar_select 0, %s8, %s6
  loop: start=0, step=1, limit=4
  $region2: #{_forward.10} parent=0 // loop_pre_header
    _
  $region3: #{_forward.10} parent=0 // loop_header
    %s11 = sphi 0, %s15
    %p12 = scmp.ge.s32.totalorder %s11, 4
    %s21 = sphi 0, %s23
    %s24 = sphi 0, %s21
    %s25 = sphi 0, %s24
    %s41 = sphi 0, %s25
    %s45 = sphi 0, %s45
    %s47 = sphi 0, %s45
    %s48 = sphi 0, %s47
    %s62 = sphi 0, %s48
    %s66 = sphi 0, %s66
    %s68 = sphi 0, %s66
    %s69 = sphi 0, %s68
    %s83 = sphi 0, %s69
    %s89 = sphi 0, %s91
    %s92 = sphi 0, %s89
    %s93 = sphi 0, %s92
    %s109 = sphi 0, %s93
    %s115 = sphi 0, %s117
    %s118 = sphi 0, %s115
    %s119 = sphi 0, %s118
    %s135 = sphi 0, %s119
  $region4: #{_forward.10} parent=0 // loop_header_branch
    %14 = sbr.rel (%p12) target = $region8
  $region5: #{_forward.10} parent=0 // loop_body
    %s16 = ssub.s32 %s11, 1
    %s17 = ssub.s32 %s11, 2
    %s18 = sadd.s32 %s11, 1
    %s19 = ssub.s32 %s11, %s18
    %p20 = scmp.eq.s32.totalorder %s19, 0
    %s22 = sadd.s32 %s21, 1
    %s23 = scalar_select %p20, %s21, %s22
    %p26 = pneg %p20
    %p27 = scmp.eq.s32.totalorder %s11, 1
    %p28 = por %p26, %p27
    %p29 = scmp.ne.s32.totalorder %s21, %s24
    %p30 = scmp.eq.s32.totalorder %s11, 0
    %p31 = por %p29, %p30
    %p32 = scmp.ne.s32.totalorder %s21, %s24
    %p33 = scmp.eq.s32.totalorder %s16, 1
    %p34 = por %p32, %p33
    %p35 = scmp.ne.s32.totalorder %s24, %s25
    %p36 = scmp.eq.s32.totalorder %s16, 0
    %p37 = por %p35, %p36
    %p38 = scmp.ne.s32.totalorder %s24, %s25
    %p39 = scmp.eq.s32.totalorder %s17, 1
    %p40 = por %p38, %p39
    %p42 = scmp.ne.s32.totalorder %s25, %s41
    %p43 = scmp.eq.s32.totalorder %s17, 0
    %p44 = por %p42, %p43
    %s46 = sadd.s32 %s45, 1
    %p49 = scmp.eq.s32.totalorder %s11, 1
    %p50 = scmp.ne.s32.totalorder %s45, %s47
    %p51 = scmp.eq.s32.totalorder %s11, 0
    %p52 = por %p50, %p51
    %p53 = scmp.ne.s32.totalorder %s45, %s47
    %p54 = scmp.eq.s32.totalorder %s16, 1
    %p55 = por %p53, %p54
    %p56 = scmp.ne.s32.totalorder %s47, %s48
    %p57 = scmp.eq.s32.totalorder %s16, 0
    %p58 = por %p56, %p57
    %p59 = scmp.ne.s32.totalorder %s47, %s48
    %p60 = scmp.eq.s32.totalorder %s17, 1
    %p61 = por %p59, %p60
    %p63 = scmp.ne.s32.totalorder %s48, %s62
    %p64 = scmp.eq.s32.totalorder %s17, 0
    %p65 = por %p63, %p64
    %s67 = sadd.s32 %s66, 1
    %p70 = scmp.eq.s32.totalorder %s11, 1
    %p71 = scmp.ne.s32.totalorder %s66, %s68
    %p72 = scmp.eq.s32.totalorder %s11, 0
    %p73 = por %p71, %p72
    %p74 = scmp.ne.s32.totalorder %s66, %s68
    %p75 = scmp.eq.s32.totalorder %s16, 1
    %p76 = por %p74, %p75
    %p77 = scmp.ne.s32.totalorder %s68, %s69
    %p78 = scmp.eq.s32.totalorder %s16, 0
    %p79 = por %p77, %p78
    %p80 = scmp.ne.s32.totalorder %s68, %s69
    %p81 = scmp.eq.s32.totalorder %s17, 1
    %p82 = por %p80, %p81
    %p84 = scmp.ne.s32.totalorder %s69, %s83
    %p85 = scmp.eq.s32.totalorder %s17, 0
    %p86 = por %p84, %p85
    %s87 = ssub.s32 %s11, %s18
    %p88 = scmp.eq.s32.totalorder %s87, 0
    %s90 = sadd.s32 %s89, 1
    %s91 = scalar_select %p88, %s89, %s90
    %p94 = pneg %p88
    %p95 = scmp.eq.s32.totalorder %s11, 1
    %p96 = por %p94, %p95
    %p97 = scmp.ne.s32.totalorder %s89, %s92
    %p98 = scmp.eq.s32.totalorder %s11, 0
    %p99 = por %p97, %p98
    %p100 = scmp.ne.s32.totalorder %s89, %s92
    %p101 = scmp.eq.s32.totalorder %s16, 1
    %p102 = por %p100, %p101
    %p103 = scmp.ne.s32.totalorder %s92, %s93
    %p104 = scmp.eq.s32.totalorder %s16, 0
    %p105 = por %p103, %p104
    %p106 = scmp.ne.s32.totalorder %s92, %s93
    %p107 = scmp.eq.s32.totalorder %s17, 1
    %p108 = por %p106, %p107
    %p110 = scmp.ne.s32.totalorder %s93, %s109
    %p111 = scmp.eq.s32.totalorder %s17, 0
    %p112 = por %p110, %p111
    %s113 = ssub.s32 %s11, %s18
    %p114 = scmp.eq.s32.totalorder %s113, 0
    %s116 = sadd.s32 %s115, 1
    %s117 = scalar_select %p114, %s115, %s116
    %p120 = pneg %p114
    %p121 = scmp.eq.s32.totalorder %s11, 1
    %p122 = por %p120, %p121
    %p123 = scmp.ne.s32.totalorder %s115, %s118
    %p124 = scmp.eq.s32.totalorder %s11, 0
    %p125 = por %p123, %p124
    %p126 = scmp.ne.s32.totalorder %s115, %s118
    %p127 = scmp.eq.s32.totalorder %s16, 1
    %p128 = por %p126, %p127
    %p129 = scmp.ne.s32.totalorder %s118, %s119
    %p130 = scmp.eq.s32.totalorder %s16, 0
    %p131 = por %p129, %p130
    %p132 = scmp.ne.s32.totalorder %s118, %s119
    %p133 = scmp.eq.s32.totalorder %s17, 1
    %p134 = por %p132, %p133
    %p136 = scmp.ne.s32.totalorder %s119, %s135
    %p137 = scmp.eq.s32.totalorder %s17, 0
    %p138 = por %p136, %p137
    %p139 = scmp.le.s32.totalorder 1, %s11
    %p140 = scmp.lt.s32.totalorder %s11, 3
    %p141 = pnand %p139, %p140
    %p142 = pneg %p141
    // Predicated region
    $region9: #{_forward.10} parent=5 // pred_check
      _
    $region10: #{_forward.10} parent=5 // pred_check_branch
      %144 = sbr.rel (%p141) target = $region12
    $region11: #{_forward.10} parent=5 // pred_region
      %s145 = ssub.s32 %s11, 1
      // Predicated region
      $region13: #{_forward.10} parent=11 // pred_check
        %p146 = pneg %p58
      $region14: #{_forward.10} parent=11 // pred_check_branch
        %148 = sbr.rel (%p146) target = $region16
      $region15: #{_forward.10} parent=11 // pred_region
        _
      $region16: #{_forward.10} parent=11 // pred_fallthru
        _
      // Predicated region
      $region17: #{_forward.10} parent=11 // pred_check
        %p149 = pneg %p79
      $region18: #{_forward.10} parent=11 // pred_check_branch
        %151 = sbr.rel (%p149) target = $region20
      $region19: #{_forward.10} parent=11 // pred_region
        _
      $region20: #{_forward.10} parent=11 // pred_fallthru
        _
    $region12: #{_forward.10} parent=5 // pred_fallthru
      _
    %p152 = scmp.lt.s32.totalorder %s11, 2
    // Predicated region
    $region21: #{_forward.10} parent=5 // pred_check
      %p153 = pneg %p152
    $region22: #{_forward.10} parent=5 // pred_check_branch
      %155 = sbr.rel (%p153) target = $region24
    $region23: #{_forward.10} parent=5 // pred_region
      // Predicated region
      $region25: #{_forward.10} parent=23 // pred_check
        %p156 = pneg %p31
      $region26: #{_forward.10} parent=23 // pred_check_branch
        %158 = sbr.rel (%p156) target = $region28
      $region27: #{_forward.10} parent=23 // pred_region
        %p159 = scmp.lt.s32.totalorder %s11, 1
        %s160 = scalar_select %p159, %s11, 1
        %s161 = smul.addr %s160, 32
        %s162 = smul.addr %s161, 8
        %s163 = scalar_lea.vmem %s0, %s162
      $region28: #{_forward.10} parent=23 // pred_fallthru
        _
    $region24: #{_forward.10} parent=5 // pred_fallthru
      _
    %p164 = scmp.le.s32.totalorder 1, %s11
    %p165 = scmp.lt.s32.totalorder %s11, 3
    %p166 = pnand %p164, %p165
    %p167 = pneg %p166
    // Predicated region
    $region29: #{_forward.10} parent=5 // pred_check
      _
    $region30: #{_forward.10} parent=5 // pred_check_branch
      %169 = sbr.rel (%p166) target = $region32
    $region31: #{_forward.10} parent=5 // pred_region
      %s170 = ssub.s32 %s11, 1
      %p171 = scmp.lt.s32.totalorder %s16, 1
      %s172 = scalar_select %p171, %s16, 1
      %s173 = smul.addr %s172, 32
      %s174 = smul.addr %s173, 8
      %s175 = scalar_lea.vmem %s0, %s174
      %p176 = pneg %p37
      %p177 = pneg %p34
      %p178 = pneg %p58
      %p179 = pneg %p55
      %p180 = pneg %p79
      %p181 = pneg %p76
      %p182 = pneg %p105
      %p183 = pneg %p102
      %p184 = scmp.lt.s32.totalorder %s16, 1
      %s185 = scalar_select %p184, %s16, 1
      %s186 = smul.addr %s185, 32
      %s187 = smul.addr %s186, 8
      %s188 = scalar_lea.vmem %s3, %s187
      %p189 = pneg %p131
      %p190 = pneg %p128
      %p191 = scmp.lt.s32.totalorder %s16, 1
      %s192 = scalar_select %p191, %s16, 1
      %s193 = smul.addr %s192, 2
      %s194 = scalar_lea.vmem %s4, %s193
      %p195 = scmp.lt.s32.totalorder %s16, 1
      %s196 = scalar_select %p195, %s16, 1
      %s197 = smul.addr %s196, 32
      %s198 = smul.addr %s197, 8
      %s199 = scalar_lea.vmem %s0, %s198
      %p200 = scmp.lt.s32.totalorder %s16, 1
      %s201 = scalar_select %p200, %s16, 1
      %s202 = smul.addr %s201, 32
      %s203 = smul.addr %s202, 8
      %s204 = scalar_lea.vmem %s3, %s203
      %p205 = scmp.lt.s32.totalorder %s16, 1
      %s206 = scalar_select %p205, %s16, 1
      %s207 = smul.addr %s206, 2
      %s208 = scalar_lea.vmem %s4, %s207
      %v210 = vld [vmem:[%s199] sm:$0xff]
      %v211 = vld [vmem:[%s199 + $0x8] sm:$0xff]
      %v212 = vld [vmem:[%s199 + $0x10] sm:$0xff]
      %v213 = vld [vmem:[%s199 + $0x18] sm:$0xff]
      %v214 = vld [vmem:[%s199 + $0x20] sm:$0xff]
      %v215 = vld [vmem:[%s199 + $0x28] sm:$0xff]
      %v216 = vld [vmem:[%s199 + $0x30] sm:$0xff]
      %v217 = vld [vmem:[%s199 + $0x38] sm:$0xff]
      %v218 = vld [vmem:[%s199 + $0x40] sm:$0xff]
      %v219 = vld [vmem:[%s199 + $0x48] sm:$0xff]
      %v220 = vld [vmem:[%s199 + $0x50] sm:$0xff]
      %v221 = vld [vmem:[%s199 + $0x58] sm:$0xff]
      %v222 = vld [vmem:[%s199 + $0x60] sm:$0xff]
      %v223 = vld [vmem:[%s199 + $0x68] sm:$0xff]
      %v224 = vld [vmem:[%s199 + $0x70] sm:$0xff]
      %v225 = vld [vmem:[%s199 + $0x78] sm:$0xff]
      %v226 = vld [vmem:[%s199 + $0x80] sm:$0xff]
      %v227 = vld [vmem:[%s199 + $0x88] sm:$0xff]
      %v228 = vld [vmem:[%s199 + $0x90] sm:$0xff]
      %v229 = vld [vmem:[%s199 + $0x98] sm:$0xff]
      %v230 = vld [vmem:[%s199 + $0xa0] sm:$0xff]
      %v231 = vld [vmem:[%s199 + $0xa8] sm:$0xff]
      %v232 = vld [vmem:[%s199 + $0xb0] sm:$0xff]
      %v233 = vld [vmem:[%s199 + $0xb8] sm:$0xff]
      %v234 = vld [vmem:[%s199 + $0xc0] sm:$0xff]
      %v235 = vld [vmem:[%s199 + $0xc8] sm:$0xff]
      %v236 = vld [vmem:[%s199 + $0xd0] sm:$0xff]
      %v237 = vld [vmem:[%s199 + $0xd8] sm:$0xff]
      %v238 = vld [vmem:[%s199 + $0xe0] sm:$0xff]
      %v239 = vld [vmem:[%s199 + $0xe8] sm:$0xff]
      %v240 = vld [vmem:[%s199 + $0xf0] sm:$0xff]
      %v241 = vld [vmem:[%s199 + $0xf8] sm:$0xff]
      %v242 = vpack.c.bf16 %v211, %v210
      %v243 = vpack.c.bf16 %v213, %v212
      %v244 = vpack.c.bf16 %v215, %v214
      %v245 = vpack.c.bf16 %v217, %v216
      %v246 = vpack.c.bf16 %v219, %v218
      %v247 = vpack.c.bf16 %v221, %v220
      %v248 = vpack.c.bf16 %v223, %v222
      %v249 = vpack.c.bf16 %v225, %v224
      %v250 = vpack.c.bf16 %v227, %v226
      %v251 = vpack.c.bf16 %v229, %v228
      %v252 = vpack.c.bf16 %v231, %v230
      %v253 = vpack.c.bf16 %v233, %v232
      %v254 = vpack.c.bf16 %v235, %v234
      %v255 = vpack.c.bf16 %v237, %v236
      %v256 = vpack.c.bf16 %v239, %v238
      %v257 = vpack.c.bf16 %v241, %v240
      %v258 = vld [vmem:[%s1] sm:$0xf]
      %v259 = vld [vmem:[%s2] sm:$0x1]
      %v261 = vlaneseq
      %v262 = vshrl.u32 %v261, 7
      %v263 = vsub.s32 0, %v262
      %v264 = vrot.slane %v259, %v263
      %vm266 = vcmask 64512
      %v268 = vsel %vm266, %v242, 0
      %v271 = vsel %vm266, %v243, 0
      %v274 = vsel %vm266, %v244, 0
      %v277 = vsel %vm266, %v245, 0
      %v280 = vsel %vm266, %v246, 0
      %v283 = vsel %vm266, %v247, 0
      %v286 = vsel %vm266, %v248, 0
      %v289 = vsel %vm266, %v249, 0
      %v292 = vsel %vm266, %v250, 0
      %v295 = vsel %vm266, %v251, 0
      %v298 = vsel %vm266, %v252, 0
      %v301 = vsel %vm266, %v253, 0
      %v304 = vsel %vm266, %v254, 0
      %v307 = vsel %vm266, %v255, 0
      %v310 = vsel %vm266, %v256, 0
      %v313 = vsel %vm266, %v257, 0
      %vm315 = vcmask 1043456
      %v317 = vsel %vm315, %v258, 0
      %319 = vmatprep.subr.bf16.mxu0 0
      %320 = vmatpush1.bf16.msra.mxu0 %v317
      %321 = vmatprep.subr.bf16.mxu0 0
      %322 = vmatpush1.bf16.msra.mxu0 0
      %323 = vmatprep.subr.bf16.mxu0 0
      %324 = vmatpush1.bf16.msra.mxu0 0
      %325 = vmatprep.subr.bf16.mxu0 0
      %326 = vmatpush1.bf16.msra.mxu0 0
      %327 = vmatprep.subr.bf16.mxu0 0
      %328 = vmatpush1.bf16.msra.mxu0 0
      %329 = vmatprep.subr.bf16.mxu0 0
      %330 = vmatpush1.bf16.msra.mxu0 0
      %331 = vmatprep.subr.bf16.mxu0 0
      %332 = vmatpush1.bf16.msra.mxu0 0
      %333 = vmatprep.subr.bf16.mxu0 0
      %334 = vmatpush1.bf16.msra.mxu0 0
      %335 = vmatprep.subr.bf16.mxu0 0
      %336 = vmatpush1.bf16.msra.mxu0 0
      %337 = vmatprep.subr.bf16.mxu0 0
      %338 = vmatpush1.bf16.msra.mxu0 0
      %339 = vmatprep.subr.bf16.mxu0 0
      %340 = vmatpush1.bf16.msra.mxu0 0
      %341 = vmatprep.subr.bf16.mxu0 0
      %342 = vmatpush1.bf16.msra.mxu0 0
      %343 = vmatprep.subr.bf16.mxu0 0
      %344 = vmatpush1.bf16.msra.mxu0 0
      %345 = vmatprep.subr.bf16.mxu0 0
      %346 = vmatpush1.bf16.msra.mxu0 0
      %347 = vmatprep.subr.bf16.mxu0 0
      %348 = vmatpush1.bf16.msra.mxu0 0
      %349 = vmatprep.subr.bf16.mxu0 0
      %350 = vmatpush1.bf16.msra.mxu0 0
      %351 = vmatprep.mubr.bf16.mxu0 0
      %352 = vmatmul.mubr.bf16.gmra.mrb[0].mxu0 %v268
      %v353 = vpop.f32.mrb[0].mxu0
      %v354 = vadd.f32 %v264, %v353
      %v355 = vpop.f32.mrb[0].mxu0
      %v356 = vpop.f32.mrb[0].mxu0
      %v357 = vadd.f32 %v264, %v356
      %v358 = vpop.f32.mrb[0].mxu0
      %359 = vmatprep.mubr.bf16.mxu0 0
      %360 = vmatmul.mubr.bf16.gmra.mrb[0].mxu0 %v271
      %v361 = vpop.f32.mrb[0].mxu0
      %v362 = vadd.f32 %v264, %v361
      %v363 = vpop.f32.mrb[0].mxu0
      %v364 = vpop.f32.mrb[0].mxu0
      %v365 = vadd.f32 %v264, %v364
      %v366 = vpop.f32.mrb[0].mxu0
      %367 = vmatprep.mubr.bf16.mxu0 0
      %368 = vmatmul.mubr.bf16.gmra.mrb[0].mxu0 %v274
      %v369 = vpop.f32.mrb[0].mxu0
      %v370 = vadd.f32 %v264, %v369
      %v371 = vpop.f32.mrb[0].mxu0
      %v372 = vpop.f32.mrb[0].mxu0
      %v373 = vadd.f32 %v264, %v372
      %v374 = vpop.f32.mrb[0].mxu0
      %375 = vmatprep.mubr.bf16.mxu0 0
      %376 = vmatmul.mubr.bf16.gmra.mrb[0].mxu0 %v277
      %v377 = vpop.f32.mrb[0].mxu0
      %v378 = vadd.f32 %v264, %v377
      %v379 = vpop.f32.mrb[0].mxu0
      %v380 = vpop.f32.mrb[0].mxu0
      %v381 = vadd.f32 %v264, %v380
      %v382 = vpop.f32.mrb[0].mxu0
      %383 = vmatprep.mubr.bf16.mxu0 0
      %384 = vmatmul.mubr.bf16.gmra.mrb[0].mxu0 %v280
      %v385 = vpop.f32.mrb[0].mxu0
      %v386 = vadd.f32 %v264, %v385
      %v387 = vpop.f32.mrb[0].mxu0
      %v388 = vpop.f32.mrb[0].mxu0
      %v389 = vadd.f32 %v264, %v388
      %v390 = vpop.f32.mrb[0].mxu0
      %391 = vmatprep.mubr.bf16.mxu0 0
      %392 = vmatmul.mubr.bf16.gmra.mrb[0].mxu0 %v283
      %v393 = vpop.f32.mrb[0].mxu0
      %v394 = vadd.f32 %v264, %v393
      %v395 = vpop.f32.mrb[0].mxu0
      %v396 = vpop.f32.mrb[0].mxu0
      %v397 = vadd.f32 %v264, %v396
      %v398 = vpop.f32.mrb[0].mxu0
      %399 = vmatprep.mubr.bf16.mxu0 0
      %400 = vmatmul.mubr.bf16.gmra.mrb[0].mxu0 %v286
      %v401 = vpop.f32.mrb[0].mxu0
      %v402 = vadd.f32 %v264, %v401
      %v403 = vpop.f32.mrb[0].mxu0
      %v404 = vpop.f32.mrb[0].mxu0
      %v405 = vadd.f32 %v264, %v404
      %v406 = vpop.f32.mrb[0].mxu0
      %407 = vmatprep.mubr.bf16.mxu0 0
      %408 = vmatmul.mubr.bf16.gmra.mrb[0].mxu0 %v289
      %v409 = vpop.f32.mrb[0].mxu0
      %v410 = vadd.f32 %v264, %v409
      %v411 = vpop.f32.mrb[0].mxu0
      %v412 = vpop.f32.mrb[0].mxu0
      %v413 = vadd.f32 %v264, %v412
      %v414 = vpop.f32.mrb[0].mxu0
      %415 = vmatprep.mubr.bf16.mxu0 0
      %416 = vmatmul.mubr.bf16.gmra.mrb[0].mxu0 %v292
      %v417 = vpop.f32.mrb[0].mxu0
      %v418 = vadd.f32 %v264, %v417
      %v419 = vpop.f32.mrb[0].mxu0
      %v420 = vpop.f32.mrb[0].mxu0
      %v421 = vadd.f32 %v264, %v420
      %v422 = vpop.f32.mrb[0].mxu0
      %423 = vmatprep.mubr.bf16.mxu0 0
      %424 = vmatmul.mubr.bf16.gmra.mrb[0].mxu0 %v295
      %v425 = vpop.f32.mrb[0].mxu0
      %v426 = vadd.f32 %v264, %v425
      %v427 = vpop.f32.mrb[0].mxu0
      %v428 = vpop.f32.mrb[0].mxu0
      %v429 = vadd.f32 %v264, %v428
      %v430 = vpop.f32.mrb[0].mxu0
      %431 = vmatprep.mubr.bf16.mxu0 0
      %432 = vmatmul.mubr.bf16.gmra.mrb[0].mxu0 %v298
      %v433 = vpop.f32.mrb[0].mxu0
      %v434 = vadd.f32 %v264, %v433
      %v435 = vpop.f32.mrb[0].mxu0
      %v436 = vpop.f32.mrb[0].mxu0
      %v437 = vadd.f32 %v264, %v436
      %v438 = vpop.f32.mrb[0].mxu0
      %439 = vmatprep.mubr.bf16.mxu0 0
      %440 = vmatmul.mubr.bf16.gmra.mrb[0].mxu0 %v301
      %v441 = vpop.f32.mrb[0].mxu0
      %v442 = vadd.f32 %v264, %v441
      %v443 = vpop.f32.mrb[0].mxu0
      %v444 = vpop.f32.mrb[0].mxu0
      %v445 = vadd.f32 %v264, %v444
      %v446 = vpop.f32.mrb[0].mxu0
      %447 = vmatprep.mubr.bf16.mxu0 0
      %448 = vmatmul.mubr.bf16.gmra.mrb[0].mxu0 %v304
      %v449 = vpop.f32.mrb[0].mxu0
      %v450 = vadd.f32 %v264, %v449
      %v451 = vpop.f32.mrb[0].mxu0
      %v452 = vpop.f32.mrb[0].mxu0
      %v453 = vadd.f32 %v264, %v452
      %v454 = vpop.f32.mrb[0].mxu0
      %455 = vmatprep.mubr.bf16.mxu0 0
      %456 = vmatmul.mubr.bf16.gmra.mrb[0].mxu0 %v307
      %v457 = vpop.f32.mrb[0].mxu0
      %v458 = vadd.f32 %v264, %v457
      %v459 = vpop.f32.mrb[0].mxu0
      %v460 = vpop.f32.mrb[0].mxu0
      %v461 = vadd.f32 %v264, %v460
      %v462 = vpop.f32.mrb[0].mxu0
      %463 = vmatprep.mubr.bf16.mxu0 0
      %464 = vmatmul.mubr.bf16.gmra.mrb[0].mxu0 %v310
      %v465 = vpop.f32.mrb[0].mxu0
      %v466 = vadd.f32 %v264, %v465
      %v467 = vpop.f32.mrb[0].mxu0
      %v468 = vpop.f32.mrb[0].mxu0
      %v469 = vadd.f32 %v264, %v468
      %v470 = vpop.f32.mrb[0].mxu0
      %471 = vmatprep.mubr.bf16.mxu0 0
      %472 = vmatmul.mubr.bf16.gmra.mrb[0].mxu0 %v313
      %v473 = vpop.f32.mrb[0].mxu0
      %v474 = vadd.f32 %v264, %v473
      %v475 = vpop.f32.mrb[0].mxu0
      %v476 = vpop.f32.mrb[0].mxu0
      %v477 = vadd.f32 %v264, %v476
      %v478 = vpop.f32.mrb[0].mxu0
      %479 = vdwg.mxu0
      %480 = vst.msk [vmem:[%s204] sm:$0xff] %vm266, %v354
      %481 = vst.msk [vmem:[%s204 + $0x8] sm:$0xff] %vm266, %v357
      %482 = vst.msk [vmem:[%s204 + $0x10] sm:$0xff] %vm266, %v362
      %483 = vst.msk [vmem:[%s204 + $0x18] sm:$0xff] %vm266, %v365
      %484 = vst.msk [vmem:[%s204 + $0x20] sm:$0xff] %vm266, %v370
      %485 = vst.msk [vmem:[%s204 + $0x28] sm:$0xff] %vm266, %v373
      %486 = vst.msk [vmem:[%s204 + $0x30] sm:$0xff] %vm266, %v378
      %487 = vst.msk [vmem:[%s204 + $0x38] sm:$0xff] %vm266, %v381
      %488 = vst.msk [vmem:[%s204 + $0x40] sm:$0xff] %vm266, %v386
      %489 = vst.msk [vmem:[%s204 + $0x48] sm:$0xff] %vm266, %v389
      %490 = vst.msk [vmem:[%s204 + $0x50] sm:$0xff] %vm266, %v394
      %491 = vst.msk [vmem:[%s204 + $0x58] sm:$0xff] %vm266, %v397
      %492 = vst.msk [vmem:[%s204 + $0x60] sm:$0xff] %vm266, %v402
      %493 = vst.msk [vmem:[%s204 + $0x68] sm:$0xff] %vm266, %v405
      %494 = vst.msk [vmem:[%s204 + $0x70] sm:$0xff] %vm266, %v410
      %495 = vst.msk [vmem:[%s204 + $0x78] sm:$0xff] %vm266, %v413
      %496 = vst.msk [vmem:[%s204 + $0x80] sm:$0xff] %vm266, %v418
      %497 = vst.msk [vmem:[%s204 + $0x88] sm:$0xff] %vm266, %v421
      %498 = vst.msk [vmem:[%s204 + $0x90] sm:$0xff] %vm266, %v426
      %499 = vst.msk [vmem:[%s204 + $0x98] sm:$0xff] %vm266, %v429
      %500 = vst.msk [vmem:[%s204 + $0xa0] sm:$0xff] %vm266, %v434
      %501 = vst.msk [vmem:[%s204 + $0xa8] sm:$0xff] %vm266, %v437
      %502 = vst.msk [vmem:[%s204 + $0xb0] sm:$0xff] %vm266, %v442
      %503 = vst.msk [vmem:[%s204 + $0xb8] sm:$0xff] %vm266, %v445
      %504 = vst.msk [vmem:[%s204 + $0xc0] sm:$0xff] %vm266, %v450
      %505 = vst.msk [vmem:[%s204 + $0xc8] sm:$0xff] %vm266, %v453
      %506 = vst.msk [vmem:[%s204 + $0xd0] sm:$0xff] %vm266, %v458
      %507 = vst.msk [vmem:[%s204 + $0xd8] sm:$0xff] %vm266, %v461
      %508 = vst.msk [vmem:[%s204 + $0xe0] sm:$0xff] %vm266, %v466
      %509 = vst.msk [vmem:[%s204 + $0xe8] sm:$0xff] %vm266, %v469
      %510 = vst.msk [vmem:[%s204 + $0xf0] sm:$0xff] %vm266, %v474
      %511 = vst.msk [vmem:[%s204 + $0xf8] sm:$0xff] %vm266, %v477
      %v512 = vsel %vm266, %v354, 0.0
      %v513 = vsel %vm266, %v357, 0.0
      %v514 = vadd.f32 %v512, %v513
      %v515 = vsel %vm266, %v362, 0.0
      %v516 = vadd.f32 %v514, %v515
      %v517 = vsel %vm266, %v365, 0.0
      %v518 = vadd.f32 %v516, %v517
      %v519 = vsel %vm266, %v370, 0.0
      %v520 = vadd.f32 %v518, %v519
      %v521 = vsel %vm266, %v373, 0.0
      %v522 = vadd.f32 %v520, %v521
      %v523 = vsel %vm266, %v378, 0.0
      %v524 = vadd.f32 %v522, %v523
      %v525 = vsel %vm266, %v381, 0.0
      %v526 = vadd.f32 %v524, %v525
      %v527 = vsel %vm266, %v386, 0.0
      %v528 = vadd.f32 %v526, %v527
      %v529 = vsel %vm266, %v389, 0.0
      %v530 = vadd.f32 %v528, %v529
      %v531 = vsel %vm266, %v394, 0.0
      %v532 = vadd.f32 %v530, %v531
      %v533 = vsel %vm266, %v397, 0.0
      %v534 = vadd.f32 %v532, %v533
      %v535 = vsel %vm266, %v402, 0.0
      %v536 = vadd.f32 %v534, %v535
      %v537 = vsel %vm266, %v405, 0.0
      %v538 = vadd.f32 %v536, %v537
      %v539 = vsel %vm266, %v410, 0.0
      %v540 = vadd.f32 %v538, %v539
      %v541 = vsel %vm266, %v413, 0.0
      %v542 = vadd.f32 %v540, %v541
      %v543 = vsel %vm266, %v418, 0.0
      %v544 = vadd.f32 %v542, %v543
      %v545 = vsel %vm266, %v421, 0.0
      %v546 = vadd.f32 %v544, %v545
      %v547 = vsel %vm266, %v426, 0.0
      %v548 = vadd.f32 %v546, %v547
      %v549 = vsel %vm266, %v429, 0.0
      %v550 = vadd.f32 %v548, %v549
      %v551 = vsel %vm266, %v434, 0.0
      %v552 = vadd.f32 %v550, %v551
      %v553 = vsel %vm266, %v437, 0.0
      %v554 = vadd.f32 %v552, %v553
      %v555 = vsel %vm266, %v442, 0.0
      %v556 = vadd.f32 %v554, %v555
      %v557 = vsel %vm266, %v445, 0.0
      %v558 = vadd.f32 %v556, %v557
      %v559 = vsel %vm266, %v450, 0.0
      %v560 = vadd.f32 %v558, %v559
      %v561 = vsel %vm266, %v453, 0.0
      %v562 = vadd.f32 %v560, %v561
      %v563 = vsel %vm266, %v458, 0.0
      %v564 = vadd.f32 %v562, %v563
      %v565 = vsel %vm266, %v461, 0.0
      %v566 = vadd.f32 %v564, %v565
      %v567 = vsel %vm266, %v466, 0.0
      %v568 = vadd.f32 %v566, %v567
      %v569 = vsel %vm266, %v469, 0.0
      %v570 = vadd.f32 %v568, %v569
      %v571 = vsel %vm266, %v474, 0.0
      %v572 = vadd.f32 %v570, %v571
      %v573 = vsel %vm266, %v477, 0.0
      %v574 = vadd.f32 %v572, %v573
      %v575 = vrot.slane %v574, 4
      %v576 = vadd.f32 %v574, %v575
      %v577 = vrot.slane %v576, 2
      %v578 = vadd.f32 %v576, %v577
      %v579 = vrot.slane %v578, 1
      %v580 = vadd.f32 %v578, %v579
      %v581 = vmul.f32 %v354, %v354
      %v582 = vmul.f32 %v357, %v357
      %v583 = vmul.f32 %v362, %v362
      %v584 = vmul.f32 %v365, %v365
      %v585 = vmul.f32 %v370, %v370
      %v586 = vmul.f32 %v373, %v373
      %v587 = vmul.f32 %v378, %v378
      %v588 = vmul.f32 %v381, %v381
      %v589 = vmul.f32 %v386, %v386
      %v590 = vmul.f32 %v389, %v389
      %v591 = vmul.f32 %v394, %v394
      %v592 = vmul.f32 %v397, %v397
      %v593 = vmul.f32 %v402, %v402
      %v594 = vmul.f32 %v405, %v405
      %v595 = vmul.f32 %v410, %v410
      %v596 = vmul.f32 %v413, %v413
      %v597 = vmul.f32 %v418, %v418
      %v598 = vmul.f32 %v421, %v421
      %v599 = vmul.f32 %v426, %v426
      %v600 = vmul.f32 %v429, %v429
      %v601 = vmul.f32 %v434, %v434
      %v602 = vmul.f32 %v437, %v437
      %v603 = vmul.f32 %v442, %v442
      %v604 = vmul.f32 %v445, %v445
      %v605 = vmul.f32 %v450, %v450
      %v606 = vmul.f32 %v453, %v453
      %v607 = vmul.f32 %v458, %v458
      %v608 = vmul.f32 %v461, %v461
      %v609 = vmul.f32 %v466, %v466
      %v610 = vmul.f32 %v469, %v469
      %v611 = vmul.f32 %v474, %v474
      %v612 = vmul.f32 %v477, %v477
      %v613 = vsel %vm266, %v581, 0.0
      %v614 = vsel %vm266, %v582, 0.0
      %v615 = vadd.f32 %v613, %v614
      %v616 = vsel %vm266, %v583, 0.0
      %v617 = vadd.f32 %v615, %v616
      %v618 = vsel %vm266, %v584, 0.0
      %v619 = vadd.f32 %v617, %v618
      %v620 = vsel %vm266, %v585, 0.0
      %v621 = vadd.f32 %v619, %v620
      %v622 = vsel %vm266, %v586, 0.0
      %v623 = vadd.f32 %v621, %v622
      %v624 = vsel %vm266, %v587, 0.0
      %v625 = vadd.f32 %v623, %v624
      %v626 = vsel %vm266, %v588, 0.0
      %v627 = vadd.f32 %v625, %v626
      %v628 = vsel %vm266, %v589, 0.0
      %v629 = vadd.f32 %v627, %v628
      %v630 = vsel %vm266, %v590, 0.0
      %v631 = vadd.f32 %v629, %v630
      %v632 = vsel %vm266, %v591, 0.0
      %v633 = vadd.f32 %v631, %v632
      %v634 = vsel %vm266, %v592, 0.0
      %v635 = vadd.f32 %v633, %v634
      %v636 = vsel %vm266, %v593, 0.0
      %v637 = vadd.f32 %v635, %v636
      %v638 = vsel %vm266, %v594, 0.0
      %v639 = vadd.f32 %v637, %v638
      %v640 = vsel %vm266, %v595, 0.0
      %v641 = vadd.f32 %v639, %v640
      %v642 = vsel %vm266, %v596, 0.0
      %v643 = vadd.f32 %v641, %v642
      %v644 = vsel %vm266, %v597, 0.0
      %v645 = vadd.f32 %v643, %v644
      %v646 = vsel %vm266, %v598, 0.0
      %v647 = vadd.f32 %v645, %v646
      %v648 = vsel %vm266, %v599, 0.0
      %v649 = vadd.f32 %v647, %v648
      %v650 = vsel %vm266, %v600, 0.0
      %v651 = vadd.f32 %v649, %v650
      %v652 = vsel %vm266, %v601, 0.0
      %v653 = vadd.f32 %v651, %v652
      %v654 = vsel %vm266, %v602, 0.0
      %v655 = vadd.f32 %v653, %v654
      %v656 = vsel %vm266, %v603, 0.0
      %v657 = vadd.f32 %v655, %v656
      %v658 = vsel %vm266, %v604, 0.0
      %v659 = vadd.f32 %v657, %v658
      %v660 = vsel %vm266, %v605, 0.0
      %v661 = vadd.f32 %v659, %v660
      %v662 = vsel %vm266, %v606, 0.0
      %v663 = vadd.f32 %v661, %v662
      %v664 = vsel %vm266, %v607, 0.0
      %v665 = vadd.f32 %v663, %v664
      %v666 = vsel %vm266, %v608, 0.0
      %v667 = vadd.f32 %v665, %v666
      %v668 = vsel %vm266, %v609, 0.0
      %v669 = vadd.f32 %v667, %v668
      %v670 = vsel %vm266, %v610, 0.0
      %v671 = vadd.f32 %v669, %v670
      %v672 = vsel %vm266, %v611, 0.0
      %v673 = vadd.f32 %v671, %v672
      %v674 = vsel %vm266, %v612, 0.0
      %v675 = vadd.f32 %v673, %v674
      %v676 = vrot.slane %v675, 4
      %v677 = vadd.f32 %v675, %v676
      %v678 = vrot.slane %v677, 2
      %v679 = vadd.f32 %v677, %v678
      %v680 = vrot.slane %v679, 1
      %v681 = vadd.f32 %v679, %v680
      %vm682 = vcmask 1040384
      %v683 = vsel %vm682, %v580, %v681
      %vm684 = vcmask 58368
      %685 = vst.msk [vmem:[%s208] sm:$0x3] %vm684, %v683
      %p686 = scmp.lt.s32.totalorder %s16, 1
      %s687 = scalar_select %p686, %s16, 1
      %s688 = smul.addr %s687, 32
      %s689 = smul.addr %s688, 8
      %s690 = scalar_lea.vmem %s3, %s689
      %p691 = scmp.lt.s32.totalorder %s16, 1
      %s692 = scalar_select %p691, %s16, 1
      %s693 = smul.addr %s692, 2
      %s694 = scalar_lea.vmem %s4, %s693
      // Predicated region
      $region33: #{_forward.10} parent=31 // pred_check
        %p695 = pneg %p102
      $region34: #{_forward.10} parent=31 // pred_check_branch
        %697 = sbr.rel (%p695) target = $region36
      $region35: #{_forward.10} parent=31 // pred_region
        _
      $region36: #{_forward.10} parent=31 // pred_fallthru
        _
      // Predicated region
      $region37: #{_forward.10} parent=31 // pred_check
        %p698 = pneg %p128
      $region38: #{_forward.10} parent=31 // pred_check_branch
        %700 = sbr.rel (%p698) target = $region40
      $region39: #{_forward.10} parent=31 // pred_region
        _
      $region40: #{_forward.10} parent=31 // pred_fallthru
        _
    $region32: #{_forward.10} parent=5 // pred_fallthru
      _
    %p701 = scmp.le.s32.totalorder 2, %s11
    // Predicated region
    $region41: #{_forward.10} parent=5 // pred_check
      %p702 = pneg %p701
    $region42: #{_forward.10} parent=5 // pred_check_branch
      %704 = sbr.rel (%p702) target = $region44
    $region43: #{_forward.10} parent=5 // pred_region
      %s705 = ssub.s32 %s11, 2
      // Predicated region
      $region45: #{_forward.10} parent=43 // pred_check
        %p706 = pneg %p108
      $region46: #{_forward.10} parent=43 // pred_check_branch
        %708 = sbr.rel (%p706) target = $region48
      $region47: #{_forward.10} parent=43 // pred_region
        %p709 = scmp.lt.s32.totalorder %s17, 1
        %s710 = scalar_select %p709, %s17, 1
        %s711 = smul.addr %s710, 32
        %s712 = smul.addr %s711, 8
        %s713 = scalar_lea.vmem %s3, %s712
      $region48: #{_forward.10} parent=43 // pred_fallthru
        _
      // Predicated region
      $region49: #{_forward.10} parent=43 // pred_check
        %p714 = pneg %p134
      $region50: #{_forward.10} parent=43 // pred_check_branch
        %716 = sbr.rel (%p714) target = $region52
      $region51: #{_forward.10} parent=43 // pred_region
        %p717 = scmp.lt.s32.totalorder %s17, 1
        %s718 = scalar_select %p717, %s17, 1
        %s719 = smul.addr %s718, 2
        %s720 = scalar_lea.vmem %s4, %s719
      $region52: #{_forward.10} parent=43 // pred_fallthru
        _
    $region44: #{_forward.10} parent=5 // pred_fallthru
      _
  $region6: #{_forward.10} parent=0 // loop_footer
    %s15 = sadd.s32 1, %s11
  $region7: #{_forward.10} parent=0 // loop_footer_branch
    %10 = sbr.rel target = $region3
  $region8: #{_forward.10} parent=0 // loop_exit
    _

// kernel: _forward.7
$region0: #{_forward.7}
  #allocation0 [shape = 'u32[]', space=smem, size = 0x4, offset = 0x4, fixed_abs, tag = 'smem constant byte address 0x4 - core index']
  #allocation1 [shape = 'u32[144,128]{1,0:T(1,128)}', space=vmem, size = 0x12000, scoped, tag = 'internal scratch']
  %s0 = inlined_call_operand.vmem [shape: f32[2,16,16,4], index: 0, kind: input, shape index: {}]
  %s1 = inlined_call_operand.vmem [shape: f32[3,3,4], index: 1, kind: input, shape index: {}]
  %s2 = inlined_call_operand.vmem [shape: bf16[4,8], index: 2, kind: input, shape index: {}]
  %s3 = inlined_call_operand.vmem [shape: f32[2,16,16,4], index: 3, kind: output, shape index: {0}]
  %s4 = inlined_call_operand.vmem [shape: f32[2,2,4], index: 4, kind: output, shape index: {1}]
  %s5 = inlined_call_operand.vmem [shape: f32[2,16,16,8], index: 5, kind: output, shape index: {2}]
  %s6 = inlined_call_operand.vmem [shape: f32[2,2,8], index: 6, kind: output, shape index: {3}]
  %7 = xla_tuple %s3, %s4, %s5, %s6
  %s8 = sld [smem:[#allocation0]]
  $region69: #{_forward.7} parent=0
    _
  %s10 = ssub.s32 1, %s8
  %s11 = scalar_select 0, %s10, %s8
  loop: start=0, step=1, limit=4
  $region2: #{_forward.7} parent=0 // loop_pre_header
    _
  $region3: #{_forward.7} parent=0 // loop_header
    %s13 = sphi 0, %s17
    %p14 = scmp.ge.s32.totalorder %s13, 4
    %s23 = sphi 0, %s25
    %s26 = sphi 0, %s23
    %s27 = sphi 0, %s26
    %s43 = sphi 0, %s27
    %s47 = sphi 0, %s47
    %s49 = sphi 0, %s47
    %s50 = sphi 0, %s49
    %s64 = sphi 0, %s50
    %s68 = sphi 0, %s68
    %s70 = sphi 0, %s68
    %s71 = sphi 0, %s70
    %s85 = sphi 0, %s71
    %s91 = sphi 0, %s93
    %s94 = sphi 0, %s91
    %s95 = sphi 0, %s94
    %s111 = sphi 0, %s95
    %s117 = sphi 0, %s119
    %s120 = sphi 0, %s117
    %s121 = sphi 0, %s120
    %s137 = sphi 0, %s121
    %s143 = sphi 0, %s145
    %s146 = sphi 0, %s143
    %s147 = sphi 0, %s146
    %s163 = sphi 0, %s147
    %s169 = sphi 0, %s171
    %s172 = sphi 0, %s169
    %s173 = sphi 0, %s172
    %s189 = sphi 0, %s173
  $region4: #{_forward.7} parent=0 // loop_header_branch
    %16 = sbr.rel (%p14) target = $region8
  $region5: #{_forward.7} parent=0 // loop_body
    %s18 = ssub.s32 %s13, 1
    %s19 = ssub.s32 %s13, 2
    %s20 = sadd.s32 %s13, 1
    %s21 = ssub.s32 %s13, %s20
    %p22 = scmp.eq.s32.totalorder %s21, 0
    %s24 = sadd.s32 %s23, 1
    %s25 = scalar_select %p22, %s23, %s24
    %p28 = pneg %p22
    %p29 = scmp.eq.s32.totalorder %s13, 1
    %p30 = por %p28, %p29
    %p31 = scmp.ne.s32.totalorder %s23, %s26
    %p32 = scmp.eq.s32.totalorder %s13, 0
    %p33 = por %p31, %p32
    %p34 = scmp.ne.s32.totalorder %s23, %s26
    %p35 = scmp.eq.s32.totalorder %s18, 1
    %p36 = por %p34, %p35
    %p37 = scmp.ne.s32.totalorder %s26, %s27
    %p38 = scmp.eq.s32.totalorder %s18, 0
    %p39 = por %p37, %p38
    %p40 = scmp.ne.s32.totalorder %s26, %s27
    %p41 = scmp.eq.s32.totalorder %s19, 1
    %p42 = por %p40, %p41
    %p44 = scmp.ne.s32.totalorder %s27, %s43
    %p45 = scmp.eq.s32.totalorder %s19, 0
    %p46 = por %p44, %p45
    %s48 = sadd.s32 %s47, 1
    %p51 = scmp.eq.s32.totalorder %s13, 1
    %p52 = scmp.ne.s32.totalorder %s47, %s49
    %p53 = scmp.eq.s32.totalorder %s13, 0
    %p54 = por %p52, %p53
    %p55 = scmp.ne.s32.totalorder %s47, %s49
    %p56 = scmp.eq.s32.totalorder %s18, 1
    %p57 = por %p55, %p56
    %p58 = scmp.ne.s32.totalorder %s49, %s50
    %p59 = scmp.eq.s32.totalorder %s18, 0
    %p60 = por %p58, %p59
    %p61 = scmp.ne.s32.totalorder %s49, %s50
    %p62 = scmp.eq.s32.totalorder %s19, 1
    %p63 = por %p61, %p62
    %p65 = scmp.ne.s32.totalorder %s50, %s64
    %p66 = scmp.eq.s32.totalorder %s19, 0
    %p67 = por %p65, %p66
    %s69 = sadd.s32 %s68, 1
    %p72 = scmp.eq.s32.totalorder %s13, 1
    %p73 = scmp.ne.s32.totalorder %s68, %s70
    %p74 = scmp.eq.s32.totalorder %s13, 0
    %p75 = por %p73, %p74
    %p76 = scmp.ne.s32.totalorder %s68, %s70
    %p77 = scmp.eq.s32.totalorder %s18, 1
    %p78 = por %p76, %p77
    %p79 = scmp.ne.s32.totalorder %s70, %s71
    %p80 = scmp.eq.s32.totalorder %s18, 0
    %p81 = por %p79, %p80
    %p82 = scmp.ne.s32.totalorder %s70, %s71
    %p83 = scmp.eq.s32.totalorder %s19, 1
    %p84 = por %p82, %p83
    %p86 = scmp.ne.s32.totalorder %s71, %s85
    %p87 = scmp.eq.s32.totalorder %s19, 0
    %p88 = por %p86, %p87
    %s89 = ssub.s32 %s13, %s20
    %p90 = scmp.eq.s32.totalorder %s89, 0
    %s92 = sadd.s32 %s91, 1
    %s93 = scalar_select %p90, %s91, %s92
    %p96 = pneg %p90
    %p97 = scmp.eq.s32.totalorder %s13, 1
    %p98 = por %p96, %p97
    %p99 = scmp.ne.s32.totalorder %s91, %s94
    %p100 = scmp.eq.s32.totalorder %s13, 0
    %p101 = por %p99, %p100
    %p102 = scmp.ne.s32.totalorder %s91, %s94
    %p103 = scmp.eq.s32.totalorder %s18, 1
    %p104 = por %p102, %p103
    %p105 = scmp.ne.s32.totalorder %s94, %s95
    %p106 = scmp.eq.s32.totalorder %s18, 0
    %p107 = por %p105, %p106
    %p108 = scmp.ne.s32.totalorder %s94, %s95
    %p109 = scmp.eq.s32.totalorder %s19, 1
    %p110 = por %p108, %p109
    %p112 = scmp.ne.s32.totalorder %s95, %s111
    %p113 = scmp.eq.s32.totalorder %s19, 0
    %p114 = por %p112, %p113
    %s115 = ssub.s32 %s13, %s20
    %p116 = scmp.eq.s32.totalorder %s115, 0
    %s118 = sadd.s32 %s117, 1
    %s119 = scalar_select %p116, %s117, %s118
    %p122 = pneg %p116
    %p123 = scmp.eq.s32.totalorder %s13, 1
    %p124 = por %p122, %p123
    %p125 = scmp.ne.s32.totalorder %s117, %s120
    %p126 = scmp.eq.s32.totalorder %s13, 0
    %p127 = por %p125, %p126
    %p128 = scmp.ne.s32.totalorder %s117, %s120
    %p129 = scmp.eq.s32.totalorder %s18, 1
    %p130 = por %p128, %p129
    %p131 = scmp.ne.s32.totalorder %s120, %s121
    %p132 = scmp.eq.s32.totalorder %s18, 0
    %p133 = por %p131, %p132
    %p134 = scmp.ne.s32.totalorder %s120, %s121
    %p135 = scmp.eq.s32.totalorder %s19, 1
    %p136 = por %p134, %p135
    %p138 = scmp.ne.s32.totalorder %s121, %s137
    %p139 = scmp.eq.s32.totalorder %s19, 0
    %p140 = por %p138, %p139
    %s141 = ssub.s32 %s13, %s20
    %p142 = scmp.eq.s32.totalorder %s141, 0
    %s144 = sadd.s32 %s143, 1
    %s145 = scalar_select %p142, %s143, %s144
    %p148 = pneg %p142
    %p149 = scmp.eq.s32.totalorder %s13, 1
    %p150 = por %p148, %p149
    %p151 = scmp.ne.s32.totalorder %s143, %s146
    %p152 = scmp.eq.s32.totalorder %s13, 0
    %p153 = por %p151, %p152
    %p154 = scmp.ne.s32.totalorder %s143, %s146
    %p155 = scmp.eq.s32.totalorder %s18, 1
    %p156 = por %p154, %p155
    %p157 = scmp.ne.s32.totalorder %s146, %s147
    %p158 = scmp.eq.s32.totalorder %s18, 0
    %p159 = por %p157, %p158
    %p160 = scmp.ne.s32.totalorder %s146, %s147
    %p161 = scmp.eq.s32.totalorder %s19, 1
    %p162 = por %p160, %p161
    %p164 = scmp.ne.s32.totalorder %s147, %s163
    %p165 = scmp.eq.s32.totalorder %s19, 0
    %p166 = por %p164, %p165
    %s167 = ssub.s32 %s13, %s20
    %p168 = scmp.eq.s32.totalorder %s167, 0
    %s170 = sadd.s32 %s169, 1
    %s171 = scalar_select %p168, %s169, %s170
    %p174 = pneg %p168
    %p175 = scmp.eq.s32.totalorder %s13, 1
    %p176 = por %p174, %p175
    %p177 = scmp.ne.s32.totalorder %s169, %s172
    %p178 = scmp.eq.s32.totalorder %s13, 0
    %p179 = por %p177, %p178
    %p180 = scmp.ne.s32.totalorder %s169, %s172
    %p181 = scmp.eq.s32.totalorder %s18, 1
    %p182 = por %p180, %p181
    %p183 = scmp.ne.s32.totalorder %s172, %s173
    %p184 = scmp.eq.s32.totalorder %s18, 0
    %p185 = por %p183, %p184
    %p186 = scmp.ne.s32.totalorder %s172, %s173
    %p187 = scmp.eq.s32.totalorder %s19, 1
    %p188 = por %p186, %p187
    %p190 = scmp.ne.s32.totalorder %s173, %s189
    %p191 = scmp.eq.s32.totalorder %s19, 0
    %p192 = por %p190, %p191
    %p193 = scmp.le.s32.totalorder 1, %s13
    %p194 = scmp.lt.s32.totalorder %s13, 3
    %p195 = pnand %p193, %p194
    %p196 = pneg %p195
    // Predicated region
    $region9: #{_forward.7} parent=5 // pred_check
      _
    $region10: #{_forward.7} parent=5 // pred_check_branch
      %198 = sbr.rel (%p195) target = $region12
    $region11: #{_forward.7} parent=5 // pred_region
      %s199 = ssub.s32 %s13, 1
      // Predicated region
      $region13: #{_forward.7} parent=11 // pred_check
        %p200 = pneg %p60
      $region14: #{_forward.7} parent=11 // pred_check_branch
        %202 = sbr.rel (%p200) target = $region16
      $region15: #{_forward.7} parent=11 // pred_region
        _
      $region16: #{_forward.7} parent=11 // pred_fallthru
        _
      // Predicated region
      $region17: #{_forward.7} parent=11 // pred_check
        %p203 = pneg %p81
      $region18: #{_forward.7} parent=11 // pred_check_branch
        %205 = sbr.rel (%p203) target = $region20
      $region19: #{_forward.7} parent=11 // pred_region
        _
      $region20: #{_forward.7} parent=11 // pred_fallthru
        _
    $region12: #{_forward.7} parent=5 // pred_fallthru
      _
    %p206 = scmp.lt.s32.totalorder %s13, 2
    // Predicated region
    $region21: #{_forward.7} parent=5 // pred_check
      %p207 = pneg %p206
    $region22: #{_forward.7} parent=5 // pred_check_branch
      %209 = sbr.rel (%p207) target = $region24
    $region23: #{_forward.7} parent=5 // pred_region
      // Predicated region
      $region25: #{_forward.7} parent=23 // pred_check
        %p210 = pneg %p33
      $region26: #{_forward.7} parent=23 // pred_check_branch
        %212 = sbr.rel (%p210) target = $region28
      $region27: #{_forward.7} parent=23 // pred_region
        %p213 = scmp.lt.s32.totalorder %s13, 1
        %s214 = scalar_select %p213, %s13, 1
        %s215 = smul.addr %s214, 32
        %s216 = smul.addr %s215, 8
        %s217 = scalar_lea.vmem %s0, %s216
      $region28: #{_forward.7} parent=23 // pred_fallthru
        _
    $region24: #{_forward.7} parent=5 // pred_fallthru
      _
    %p218 = scmp.le.s32.totalorder 1, %s13
    %p219 = scmp.lt.s32.totalorder %s13, 3
    %p220 = pnand %p218, %p219
    %p221 = pneg %p220
    // Predicated region
    $region29: #{_forward.7} parent=5 // pred_check
      _
    $region30: #{_forward.7} parent=5 // pred_check_branch
      %223 = sbr.rel (%p220) target = $region32
    $region31: #{_forward.7} parent=5 // pred_region
      %s224 = ssub.s32 %s13, 1
      %p225 = scmp.lt.s32.totalorder %s18, 1
      %s226 = scalar_select %p225, %s18, 1
      %s227 = smul.addr %s226, 32
      %s228 = smul.addr %s227, 8
      %s229 = scalar_lea.vmem %s0, %s228
      %p230 = pneg %p39
      %p231 = pneg %p36
      %p232 = pneg %p60
      %p233 = pneg %p57
      %p234 = pneg %p81
      %p235 = pneg %p78
      %p236 = pneg %p107
      %p237 = pneg %p104
      %p238 = scmp.lt.s32.totalorder %s18, 1
      %s239 = scalar_select %p238, %s18, 1
      %s240 = smul.addr %s239, 32
      %s241 = smul.addr %s240, 8
      %s242 = scalar_lea.vmem %s3, %s241
      %p243 = pneg %p133
      %p244 = pneg %p130
      %p245 = scmp.lt.s32.totalorder %s18, 1
      %s246 = scalar_select %p245, %s18, 1
      %s247 = smul.addr %s246, 2
      %s248 = scalar_lea.vmem %s4, %s247
      %p249 = pneg %p159
      %p250 = pneg %p156
      %p251 = scmp.lt.s32.totalorder %s18, 1
      %s252 = scalar_select %p251, %s18, 1
      %s253 = smul.addr %s252, 32
      %s254 = smul.addr %s253, 8
      %s255 = scalar_lea.vmem %s5, %s254
      %p256 = pneg %p185
      %p257 = pneg %p182
      %p258 = scmp.lt.s32.totalorder %s18, 1
      %s259 = scalar_select %p258, %s18, 1
      %s260 = smul.addr %s259, 2
      %s261 = scalar_lea.vmem %s6, %s260
      %p262 = scmp.lt.s32.totalorder %s18, 1
      %s263 = scalar_select %p262, %s18, 1
      %s264 = smul.addr %s263, 32
      %s265 = smul.addr %s264, 8
      %s266 = scalar_lea.vmem %s0, %s265
      %p267 = scmp.lt.s32.totalorder %s18, 1
      %s268 = scalar_select %p267, %s18, 1
      %s269 = smul.addr %s268, 32
      %s270 = smul.addr %s269, 8
      %s271 = scalar_lea.vmem %s3, %s270
      %p272 = scmp.lt.s32.totalorder %s18, 1
      %s273 = scalar_select %p272, %s18, 1
      %s274 = smul.addr %s273, 2
      %s275 = scalar_lea.vmem %s4, %s274
      %p276 = scmp.lt.s32.totalorder %s18, 1
      %s277 = scalar_select %p276, %s18, 1
      %s278 = smul.addr %s277, 32
      %s279 = smul.addr %s278, 8
      %s280 = scalar_lea.vmem %s5, %s279
      %p281 = scmp.lt.s32.totalorder %s18, 1
      %s282 = scalar_select %p281, %s18, 1
      %s283 = smul.addr %s282, 2
      %s284 = scalar_lea.vmem %s6, %s283
      %v286 = vld [vmem:[%s266] sm:$0xff]
      %v287 = vld [vmem:[%s266 + $0x8] sm:$0xff]
      %v288 = vld [vmem:[%s266 + $0x10] sm:$0xff]
      %v289 = vld [vmem:[%s266 + $0x18] sm:$0xff]
      %v290 = vld [vmem:[%s266 + $0x20] sm:$0xff]
      %v291 = vld [vmem:[%s266 + $0x28] sm:$0xff]
      %v292 = vld [vmem:[%s266 + $0x30] sm:$0xff]
      %v293 = vld [vmem:[%s266 + $0x38] sm:$0xff]
      %v294 = vld [vmem:[%s266 + $0x40] sm:$0xff]
      %v295 = vld [vmem:[%s266 + $0x48] sm:$0xff]
      %v296 = vld [vmem:[%s266 + $0x50] sm:$0xff]
      %v297 = vld [vmem:[%s266 + $0x58] sm:$0xff]
      %v298 = vld [vmem:[%s266 + $0x60] sm:$0xff]
      %v299 = vld [vmem:[%s266 + $0x68] sm:$0xff]
      %v300 = vld [vmem:[%s266 + $0x70] sm:$0xff]
      %v301 = vld [vmem:[%s266 + $0x78] sm:$0xff]
      %v302 = vld [vmem:[%s266 + $0x80] sm:$0xff]
      %v303 = vld [vmem:[%s266 + $0x88] sm:$0xff]
      %v304 = vld [vmem:[%s266 + $0x90] sm:$0xff]
      %v305 = vld [vmem:[%s266 + $0x98] sm:$0xff]
      %v306 = vld [vmem:[%s266 + $0xa0] sm:$0xff]
      %v307 = vld [vmem:[%s266 + $0xa8] sm:$0xff]
      %v308 = vld [vmem:[%s266 + $0xb0] sm:$0xff]
      %v309 = vld [vmem:[%s266 + $0xb8] sm:$0xff]
      %v310 = vld [vmem:[%s266 + $0xc0] sm:$0xff]
      %v311 = vld [vmem:[%s266 + $0xc8] sm:$0xff]
      %v312 = vld [vmem:[%s266 + $0xd0] sm:$0xff]
      %v313 = vld [vmem:[%s266 + $0xd8] sm:$0xff]
      %v314 = vld [vmem:[%s266 + $0xe0] sm:$0xff]
      %v315 = vld [vmem:[%s266 + $0xe8] sm:$0xff]
      %v316 = vld [vmem:[%s266 + $0xf0] sm:$0xff]
      %v317 = vld [vmem:[%s266 + $0xf8] sm:$0xff]
      %v318 = vmax.f32 %v286, 0.0
      %v319 = vmax.f32 %v287, 0.0
      %v320 = vmax.f32 %v288, 0.0
      %v321 = vmax.f32 %v289, 0.0
      %v322 = vmax.f32 %v290, 0.0
      %v323 = vmax.f32 %v291, 0.0
      %v324 = vmax.f32 %v292, 0.0
      %v325 = vmax.f32 %v293, 0.0
      %v326 = vmax.f32 %v294, 0.0
      %v327 = vmax.f32 %v295, 0.0
      %v328 = vmax.f32 %v296, 0.0
      %v329 = vmax.f32 %v297, 0.0
      %v330 = vmax.f32 %v298, 0.0
      %v331 = vmax.f32 %v299, 0.0
      %v332 = vmax.f32 %v300, 0.0
      %v333 = vmax.f32 %v301, 0.0
      %v334 = vmax.f32 %v302, 0.0
      %v335 = vmax.f32 %v303, 0.0
      %v336 = vmax.f32 %v304, 0.0
      %v337 = vmax.f32 %v305, 0.0
      %v338 = vmax.f32 %v306, 0.0
      %v339 = vmax.f32 %v307, 0.0
      %v340 = vmax.f32 %v308, 0.0
      %v341 = vmax.f32 %v309, 0.0
      %v342 = vmax.f32 %v310, 0.0
      %v343 = vmax.f32 %v311, 0.0
      %v344 = vmax.f32 %v312, 0.0
      %v345 = vmax.f32 %v313, 0.0
      %v346 = vmax.f32 %v314, 0.0
      %v347 = vmax.f32 %v315, 0.0
      %v348 = vmax.f32 %v316, 0.0
      %v349 = vmax.f32 %v317, 0.0
      %v350 = vld [vmem:[%s1] sm:$0x7]
      %v351 = vld [vmem:[%s1 + $0x4] sm:$0x7]
      %v352 = vld [vmem:[%s1 + $0x8] sm:$0x7]
      %v353 = vlaneseq
      %v354 = vshrl.u32 %v353, 7
      %v355 = vsub.s32 1, %v354
      %v356 = vrot.slane %v351, %v355
      %v357 = vmul.f32 %v318, %v356
      %v358 = vmul.f32 %v319, %v356
      %v359 = vmul.f32 %v320, %v356
      %v360 = vmul.f32 %v321, %v356
      %v361 = vmul.f32 %v322, %v356
      %v362 = vmul.f32 %v323, %v356
      %v363 = vmul.f32 %v324, %v356
      %v364 = vmul.f32 %v325, %v356
      %v365 = vmul.f32 %v326, %v356
      %v366 = vmul.f32 %v327, %v356
      %v367 = vmul.f32 %v328, %v356
      %v368 = vmul.f32 %v329, %v356
      %v369 = vmul.f32 %v330, %v356
      %v370 = vmul.f32 %v331, %v356
      %v371 = vmul.f32 %v332, %v356
      %v372 = vmul.f32 %v333, %v356
      %v373 = vmul.f32 %v334, %v356
      %v374 = vmul.f32 %v335, %v356
      %v375 = vmul.f32 %v336, %v356
      %v376 = vmul.f32 %v337, %v356
      %v377 = vmul.f32 %v338, %v356
      %v378 = vmul.f32 %v339, %v356
      %v379 = vmul.f32 %v340, %v356
      %v380 = vmul.f32 %v341, %v356
      %v381 = vmul.f32 %v342, %v356
      %v382 = vmul.f32 %v343, %v356
      %v383 = vmul.f32 %v344, %v356
      %v384 = vmul.f32 %v345, %v356
      %v385 = vmul.f32 %v346, %v356
      %v386 = vmul.f32 %v347, %v356
      %v387 = vmul.f32 %v348, %v356
      %v388 = vmul.f32 %v349, %v356
      %vm420 = vcmask 1040384
      %v421 = vrot.slane 0.0, 7
      %v422 = vsel %vm420, %v421, %v421
      %v423 = vrot.slane %v318, 7
      %v424 = vrot.slane %v319, 7
      %v425 = vsel %vm420, %v423, %v424
      %v426 = vrot.slane %v320, 7
      %v427 = vrot.slane %v321, 7
      %v428 = vsel %vm420, %v426, %v427
      %v429 = vrot.slane %v322, 7
      %v430 = vrot.slane %v323, 7
      %v431 = vsel %vm420, %v429, %v430
      %v432 = vrot.slane %v324, 7
      %v433 = vrot.slane %v325, 7
      %v434 = vsel %vm420, %v432, %v433
      %v435 = vrot.slane %v326, 7
      %v436 = vrot.slane %v327, 7
      %v437 = vsel %vm420, %v435, %v436
      %v438 = vrot.slane %v328, 7
      %v439 = vrot.slane %v329, 7
      %v440 = vsel %vm420, %v438, %v439
      %v441 = vrot.slane %v330, 7
      %v442 = vrot.slane %v331, 7
      %v443 = vsel %vm420, %v441, %v442
      %v444 = vrot.slane %v332, 7
      %v445 = vrot.slane %v333, 7
      %v446 = vsel %vm420, %v444, %v445
      %v447 = vrot.slane %v334, 7
      %v448 = vrot.slane %v335, 7
      %v449 = vsel %vm420, %v447, %v448
      %v450 = vrot.slane %v336, 7
      %v451 = vrot.slane %v337, 7
      %v452 = vsel %vm420, %v450, %v451
      %v453 = vrot.slane %v338, 7
      %v454 = vrot.slane %v339, 7
      %v455 = vsel %vm420, %v453, %v454
      %v456 = vrot.slane %v340, 7
      %v457 = vrot.slane %v341, 7
      %v458 = vsel %vm420, %v456, %v457
      %v459 = vrot.slane %v342, 7
      %v460 = vrot.slane %v343, 7
      %v461 = vsel %vm420, %v459, %v460
      %v462 = vrot.slane %v344, 7
      %v463 = vrot.slane %v345, 7
      %v464 = vsel %vm420, %v462, %v463
      %v465 = vrot.slane %v346, 7
      %v466 = vrot.slane %v347, 7
      %v467 = vsel %vm420, %v465, %v466
      %v500 = vsel %vm420, 0.0, %v421
      %v501 = vsel %vm420, 0.0, %v423
      %v502 = vsel %vm420, 0.0, %v426
      %v503 = vsel %vm420, 0.0, %v429
      %v504 = vsel %vm420, 0.0, %v432
      %v505 = vsel %vm420, 0.0, %v435
      %v506 = vsel %vm420, 0.0, %v438
      %v507 = vsel %vm420, 0.0, %v441
      %v508 = vsel %vm420, 0.0, %v444
      %v509 = vsel %vm420, 0.0, %v447
      %v510 = vsel %vm420, 0.0, %v450
      %v511 = vsel %vm420, 0.0, %v453
      %v512 = vsel %vm420, 0.0, %v456
      %v513 = vsel %vm420, 0.0, %v459
      %v514 = vsel %vm420, 0.0, %v462
      %v515 = vsel %vm420, 0.0, %v465
      %v516 = vlaneseq
      %v517 = vshrl.u32 %v516, 7
      %v518 = vsub.s32 0, %v517
      %v519 = vrot.slane %v350, %v518
      %v520 = vmul.f32 %v500, %v519
      %v521 = vmul.f32 %v422, %v519
      %v522 = vmul.f32 %v501, %v519
      %v523 = vmul.f32 %v425, %v519
      %v524 = vmul.f32 %v502, %v519
      %v525 = vmul.f32 %v428, %v519
      %v526 = vmul.f32 %v503, %v519
      %v527 = vmul.f32 %v431, %v519
      %v528 = vmul.f32 %v504, %v519
      %v529 = vmul.f32 %v434, %v519
      %v530 = vmul.f32 %v505, %v519
      %v531 = vmul.f32 %v437, %v519
      %v532 = vmul.f32 %v506, %v519
      %v533 = vmul.f32 %v440, %v519
      %v534 = vmul.f32 %v507, %v519
      %v535 = vmul.f32 %v443, %v519
      %v536 = vmul.f32 %v508, %v519
      %v537 = vmul.f32 %v446, %v519
      %v538 = vmul.f32 %v509, %v519
      %v539 = vmul.f32 %v449, %v519
      %v540 = vmul.f32 %v510, %v519
      %v541 = vmul.f32 %v452, %v519
      %v542 = vmul.f32 %v511, %v519
      %v543 = vmul.f32 %v455, %v519
      %v544 = vmul.f32 %v512, %v519
      %v545 = vmul.f32 %v458, %v519
      %v546 = vmul.f32 %v513, %v519
      %v547 = vmul.f32 %v461, %v519
      %v548 = vmul.f32 %v514, %v519
      %v549 = vmul.f32 %v464, %v519
      %v550 = vmul.f32 %v515, %v519
      %v551 = vmul.f32 %v467, %v519
      %v552 = vadd.f32 %v357, %v520
      %v553 = vadd.f32 %v358, %v521
      %v554 = vadd.f32 %v359, %v522
      %v555 = vadd.f32 %v360, %v523
      %v556 = vadd.f32 %v361, %v524
      %v557 = vadd.f32 %v362, %v525
      %v558 = vadd.f32 %v363, %v526
      %v559 = vadd.f32 %v364, %v527
      %v560 = vadd.f32 %v365, %v528
      %v561 = vadd.f32 %v366, %v529
      %v562 = vadd.f32 %v367, %v530
      %v563 = vadd.f32 %v368, %v531
      %v564 = vadd.f32 %v369, %v532
      %v565 = vadd.f32 %v370, %v533
      %v566 = vadd.f32 %v371, %v534
      %v567 = vadd.f32 %v372, %v535
      %v568 = vadd.f32 %v373, %v536
      %v569 = vadd.f32 %v374, %v537
      %v570 = vadd.f32 %v375, %v538
      %v571 = vadd.f32 %v376, %v539
      %v572 = vadd.f32 %v377, %v540
      %v573 = vadd.f32 %v378, %v541
      %v574 = vadd.f32 %v379, %v542
      %v575 = vadd.f32 %v380, %v543
      %v576 = vadd.f32 %v381, %v544
      %v577 = vadd.f32 %v382, %v545
      %v578 = vadd.f32 %v383, %v546
      %v579 = vadd.f32 %v384, %v547
      %v580 = vadd.f32 %v385, %v548
      %v581 = vadd.f32 %v386, %v549
      %v582 = vadd.f32 %v387, %v550
      %v583 = vadd.f32 %v388, %v551
      %v584 = vlaneseq
      %v585 = vshrl.u32 %v584, 7
      %v586 = vsub.s32 1, %v585
      %v587 = vrot.slane %v350, %v586
      %v588 = vmul.f32 %v587, 0.0
      %v589 = vmul.f32 %v318, %v587
      %v590 = vmul.f32 %v319, %v587
      %v591 = vmul.f32 %v320, %v587
      %v592 = vmul.f32 %v321, %v587
      %v593 = vmul.f32 %v322, %v587
      %v594 = vmul.f32 %v323, %v587
      %v595 = vmul.f32 %v324, %v587
      %v596 = vmul.f32 %v325, %v587
      %v597 = vmul.f32 %v326, %v587
      %v598 = vmul.f32 %v327, %v587
      %v599 = vmul.f32 %v328, %v587
      %v600 = vmul.f32 %v329, %v587
      %v601 = vmul.f32 %v330, %v587
      %v602 = vmul.f32 %v331, %v587
      %v603 = vmul.f32 %v332, %v587
      %v604 = vmul.f32 %v333, %v587
      %v605 = vmul.f32 %v334, %v587
      %v606 = vmul.f32 %v335, %v587
      %v607 = vmul.f32 %v336, %v587
      %v608 = vmul.f32 %v337, %v587
      %v609 = vmul.f32 %v338, %v587
      %v610 = vmul.f32 %v339, %v587
      %v611 = vmul.f32 %v340, %v587
      %v612 = vmul.f32 %v341, %v587
      %v613 = vmul.f32 %v342, %v587
      %v614 = vmul.f32 %v343, %v587
      %v615 = vmul.f32 %v344, %v587
      %v616 = vmul.f32 %v345, %v587
      %v617 = vmul.f32 %v346, %v587
      %v618 = vmul.f32 %v347, %v587
      %v619 = vadd.f32 %v552, %v588
      %v620 = vadd.f32 %v553, %v588
      %v621 = vadd.f32 %v554, %v589
      %v622 = vadd.f32 %v555, %v590
      %v623 = vadd.f32 %v556, %v591
      %v624 = vadd.f32 %v557, %v592
      %v625 = vadd.f32 %v558, %v593
      %v626 = vadd.f32 %v559, %v594
      %v627 = vadd.f32 %v560, %v595
      %v628 = vadd.f32 %v561, %v596
      %v629 = vadd.f32 %v562, %v597
      %v630 = vadd.f32 %v563, %v598
      %v631 = vadd.f32 %v564, %v599
      %v632 = vadd.f32 %v565, %v600
      %v633 = vadd.f32 %v566, %v601
      %v634 = vadd.f32 %v567, %v602
      %v635 = vadd.f32 %v568, %v603
      %v636 = vadd.f32 %v569, %v604
      %v637 = vadd.f32 %v570, %v605
      %v638 = vadd.f32 %v571, %v606
      %v639 = vadd.f32 %v572, %v607
      %v640 = vadd.f32 %v573, %v608
      %v641 = vadd.f32 %v574, %v609
      %v642 = vadd.f32 %v575, %v610
      %v643 = vadd.f32 %v576, %v611
      %v644 = vadd.f32 %v577, %v612
      %v645 = vadd.f32 %v578, %v613
      %v646 = vadd.f32 %v579, %v614
      %v647 = vadd.f32 %v580, %v615
      %v648 = vadd.f32 %v581, %v616
      %v649 = vadd.f32 %v582, %v617
      %v650 = vadd.f32 %v583, %v618
      %vm651 = vcmask 1046528
      %v652 = vrot.slane 0.0, 1
      %v653 = vsel %vm651, %v652, %v652
      %v654 = vrot.slane %v318, 1
      %v655 = vrot.slane %v319, 1
      %v656 = vsel %vm651, %v654, %v655
      %v657 = vrot.slane %v320, 1
      %v658 = vrot.slane %v321, 1
      %v659 = vsel %vm651, %v657, %v658
      %v660 = vrot.slane %v322, 1
      %v661 = vrot.slane %v323, 1
      %v662 = vsel %vm651, %v660, %v661
      %v663 = vrot.slane %v324, 1
      %v664 = vrot.slane %v325, 1
      %v665 = vsel %vm651, %v663, %v664
      %v666 = vrot.slane %v326, 1
      %v667 = vrot.slane %v327, 1
      %v668 = vsel %vm651, %v666, %v667
      %v669 = vrot.slane %v328, 1
      %v670 = vrot.slane %v329, 1
      %v671 = vsel %vm651, %v669, %v670
      %v672 = vrot.slane %v330, 1
      %v673 = vrot.slane %v331, 1
      %v674 = vsel %vm651, %v672, %v673
      %v675 = vrot.slane %v332, 1
      %v676 = vrot.slane %v333, 1
      %v677 = vsel %vm651, %v675, %v676
      %v678 = vrot.slane %v334, 1
      %v679 = vrot.slane %v335, 1
      %v680 = vsel %vm651, %v678, %v679
      %v681 = vrot.slane %v336, 1
      %v682 = vrot.slane %v337, 1
      %v683 = vsel %vm651, %v681, %v682
      %v684 = vrot.slane %v338, 1
      %v685 = vrot.slane %v339, 1
      %v686 = vsel %vm651, %v684, %v685
      %v687 = vrot.slane %v340, 1
      %v688 = vrot.slane %v341, 1
      %v689 = vsel %vm651, %v687, %v688
      %v690 = vrot.slane %v342, 1
      %v691 = vrot.slane %v343, 1
      %v692 = vsel %vm651, %v690, %v691
      %v693 = vrot.slane %v344, 1
      %v694 = vrot.slane %v345, 1
      %v695 = vsel %vm651, %v693, %v694
      %v696 = vrot.slane %v346, 1
      %v697 = vrot.slane %v347, 1
      %v698 = vsel %vm651, %v696, %v697
      %v731 = vsel %vm651, %v652, 0.0
      %v732 = vsel %vm651, %v655, 0.0
      %v733 = vsel %vm651, %v658, 0.0
      %v734 = vsel %vm651, %v661, 0.0
      %v735 = vsel %vm651, %v664, 0.0
      %v736 = vsel %vm651, %v667, 0.0
      %v737 = vsel %vm651, %v670, 0.0
      %v738 = vsel %vm651, %v673, 0.0
      %v739 = vsel %vm651, %v676, 0.0
      %v740 = vsel %vm651, %v679, 0.0
      %v741 = vsel %vm651, %v682, 0.0
      %v742 = vsel %vm651, %v685, 0.0
      %v743 = vsel %vm651, %v688, 0.0
      %v744 = vsel %vm651, %v691, 0.0
      %v745 = vsel %vm651, %v694, 0.0
      %v746 = vsel %vm651, %v697, 0.0
      %v747 = vlaneseq
      %v748 = vshrl.u32 %v747, 7
      %v749 = vsub.s32 2, %v748
      %v750 = vrot.slane %v350, %v749
      %v751 = vmul.f32 %v653, %v750
      %v752 = vmul.f32 %v731, %v750
      %v753 = vmul.f32 %v656, %v750
      %v754 = vmul.f32 %v732, %v750
      %v755 = vmul.f32 %v659, %v750
      %v756 = vmul.f32 %v733, %v750
      %v757 = vmul.f32 %v662, %v750
      %v758 = vmul.f32 %v734, %v750
      %v759 = vmul.f32 %v665, %v750
      %v760 = vmul.f32 %v735, %v750
      %v761 = vmul.f32 %v668, %v750
      %v762 = vmul.f32 %v736, %v750
      %v763 = vmul.f32 %v671, %v750
      %v764 = vmul.f32 %v737, %v750
      %v765 = vmul.f32 %v674, %v750
      %v766 = vmul.f32 %v738, %v750
      %v767 = vmul.f32 %v677, %v750
      %v768 = vmul.f32 %v739, %v750
      %v769 = vmul.f32 %v680, %v750
      %v770 = vmul.f32 %v740, %v750
      %v771 = vmul.f32 %v683, %v750
      %v772 = vmul.f32 %v741, %v750
      %v773 = vmul.f32 %v686, %v750
      %v774 = vmul.f32 %v742, %v750
      %v775 = vmul.f32 %v689, %v750
      %v776 = vmul.f32 %v743, %v750
      %v777 = vmul.f32 %v692, %v750
      %v778 = vmul.f32 %v744, %v750
      %v779 = vmul.f32 %v695, %v750
      %v780 = vmul.f32 %v745, %v750
      %v781 = vmul.f32 %v698, %v750
      %v782 = vmul.f32 %v746, %v750
      %v783 = vadd.f32 %v619, %v751
      %v784 = vadd.f32 %v620, %v752
      %v785 = vadd.f32 %v621, %v753
      %v786 = vadd.f32 %v622, %v754
      %v787 = vadd.f32 %v623, %v755
      %v788 = vadd.f32 %v624, %v756
      %v789 = vadd.f32 %v625, %v757
      %v790 = vadd.f32 %v626, %v758
      %v791 = vadd.f32 %v627, %v759
      %v792 = vadd.f32 %v628, %v760
      %v793 = vadd.f32 %v629, %v761
      %v794 = vadd.f32 %v630, %v762
      %v795 = vadd.f32 %v631, %v763
      %v796 = vadd.f32 %v632, %v764
      %v797 = vadd.f32 %v633, %v765
      %v798 = vadd.f32 %v634, %v766
      %v799 = vadd.f32 %v635, %v767
      %v800 = vadd.f32 %v636, %v768
      %v801 = vadd.f32 %v637, %v769
      %v802 = vadd.f32 %v638, %v770
      %v803 = vadd.f32 %v639, %v771
      %v804 = vadd.f32 %v640, %v772
      %v805 = vadd.f32 %v641, %v773
      %v806 = vadd.f32 %v642, %v774
      %v807 = vadd.f32 %v643, %v775
      %v808 = vadd.f32 %v644, %v776
      %v809 = vadd.f32 %v645, %v777
      %v810 = vadd.f32 %v646, %v778
      %v811 = vadd.f32 %v647, %v779
      %v812 = vadd.f32 %v648, %v780
      %v813 = vadd.f32 %v649, %v781
      %v814 = vadd.f32 %v650, %v782
      %v817 = vrot.slane %v348, 7
      %v818 = vrot.slane %v349, 7
      %v819 = vsel %vm420, %v817, %v818
      %v822 = vsel %vm420, 0.0, %v817
      %v823 = vlaneseq
      %v824 = vshrl.u32 %v823, 7
      %v825 = vsub.s32 0, %v824
      %v826 = vrot.slane %v351, %v825
      %v827 = vmul.f32 %v501, %v826
      %v828 = vmul.f32 %v425, %v826
      %v829 = vmul.f32 %v502, %v826
      %v830 = vmul.f32 %v428, %v826
      %v831 = vmul.f32 %v503, %v826
      %v832 = vmul.f32 %v431, %v826
      %v833 = vmul.f32 %v504, %v826
      %v834 = vmul.f32 %v434, %v826
      %v835 = vmul.f32 %v505, %v826
      %v836 = vmul.f32 %v437, %v826
      %v837 = vmul.f32 %v506, %v826
      %v838 = vmul.f32 %v440, %v826
      %v839 = vmul.f32 %v507, %v826
      %v840 = vmul.f32 %v443, %v826
      %v841 = vmul.f32 %v508, %v826
      %v842 = vmul.f32 %v446, %v826
      %v843 = vmul.f32 %v509, %v826
      %v844 = vmul.f32 %v449, %v826
      %v845 = vmul.f32 %v510, %v826
      %v846 = vmul.f32 %v452, %v826
      %v847 = vmul.f32 %v511, %v826
      %v848 = vmul.f32 %v455, %v826
      %v849 = vmul.f32 %v512, %v826
      %v850 = vmul.f32 %v458, %v826
      %v851 = vmul.f32 %v513, %v826
      %v852 = vmul.f32 %v461, %v826
      %v853 = vmul.f32 %v514, %v826
      %v854 = vmul.f32 %v464, %v826
      %v855 = vmul.f32 %v515, %v826
      %v856 = vmul.f32 %v467, %v826
      %v857 = vmul.f32 %v822, %v826
      %v858 = vmul.f32 %v819, %v826
      %v859 = vadd.f32 %v783, %v827
      %v860 = vadd.f32 %v784, %v828
      %v861 = vadd.f32 %v785, %v829
      %v862 = vadd.f32 %v786, %v830
      %v863 = vadd.f32 %v787, %v831
      %v864 = vadd.f32 %v788, %v832
      %v865 = vadd.f32 %v789, %v833
      %v866 = vadd.f32 %v790, %v834
      %v867 = vadd.f32 %v791, %v835
      %v868 = vadd.f32 %v792, %v836
      %v869 = vadd.f32 %v793, %v837
      %v870 = vadd.f32 %v794, %v838
      %v871 = vadd.f32 %v795, %v839
      %v872 = vadd.f32 %v796, %v840
      %v873 = vadd.f32 %v797, %v841
      %v874 = vadd.f32 %v798, %v842
      %v875 = vadd.f32 %v799, %v843
      %v876 = vadd.f32 %v800, %v844
      %v877 = vadd.f32 %v801, %v845
      %v878 = vadd.f32 %v802, %v846
      %v879 = vadd.f32 %v803, %v847
      %v880 = vadd.f32 %v804, %v848
      %v881 = vadd.f32 %v805, %v849
      %v882 = vadd.f32 %v806, %v850
      %v883 = vadd.f32 %v807, %v851
      %v884 = vadd.f32 %v808, %v852
      %v885 = vadd.f32 %v809, %v853
      %v886 = vadd.f32 %v810, %v854
      %v887 = vadd.f32 %v811, %v855
      %v888 = vadd.f32 %v812, %v856
      %v889 = vadd.f32 %v813, %v857
      %v890 = vadd.f32 %v814, %v858
      %v891 = vrot.slane %v348, 1
      %v892 = vrot.slane %v349, 1
      %v893 = vsel %vm651, %v891, %v892
      %v896 = vsel %vm651, %v892, 0.0
      %v897 = vlaneseq
      %v898 = vshrl.u32 %v897, 7
      %v899 = vsub.s32 2, %v898
      %v900 = vrot.slane %v351, %v899
      %v901 = vmul.f32 %v656, %v900
      %v902 = vmul.f32 %v732, %v900
      %v903 = vmul.f32 %v659, %v900
      %v904 = vmul.f32 %v733, %v900
      %v905 = vmul.f32 %v662, %v900
      %v906 = vmul.f32 %v734, %v900
      %v907 = vmul.f32 %v665, %v900
      %v908 = vmul.f32 %v735, %v900
      %v909 = vmul.f32 %v668, %v900
      %v910 = vmul.f32 %v736, %v900
      %v911 = vmul.f32 %v671, %v900
      %v912 = vmul.f32 %v737, %v900
      %v913 = vmul.f32 %v674, %v900
      %v914 = vmul.f32 %v738, %v900
      %v915 = vmul.f32 %v677, %v900
      %v916 = vmul.f32 %v739, %v900
      %v917 = vmul.f32 %v680, %v900
      %v918 = vmul.f32 %v740, %v900
      %v919 = vmul.f32 %v683, %v900
      %v920 = vmul.f32 %v741, %v900
      %v921 = vmul.f32 %v686, %v900
      %v922 = vmul.f32 %v742, %v900
      %v923 = vmul.f32 %v689, %v900
      %v924 = vmul.f32 %v743, %v900
      %v925 = vmul.f32 %v692, %v900
      %v926 = vmul.f32 %v744, %v900
      %v927 = vmul.f32 %v695, %v900
      %v928 = vmul.f32 %v745, %v900
      %v929 = vmul.f32 %v698, %v900
      %v930 = vmul.f32 %v746, %v900
      %v931 = vmul.f32 %v893, %v900
      %v932 = vmul.f32 %v896, %v900
      %v933 = vadd.f32 %v859, %v901
      %v934 = vadd.f32 %v860, %v902
      %v935 = vadd.f32 %v861, %v903
      %v936 = vadd.f32 %v862, %v904
      %v937 = vadd.f32 %v863, %v905
      %v938 = vadd.f32 %v864, %v906
      %v939 = vadd.f32 %v865, %v907
      %v940 = vadd.f32 %v866, %v908
      %v941 = vadd.f32 %v867, %v909
      %v942 = vadd.f32 %v868, %v910
      %v943 = vadd.f32 %v869, %v911
      %v944 = vadd.f32 %v870, %v912
      %v945 = vadd.f32 %v871, %v913
      %v946 = vadd.f32 %v872, %v914
      %v947 = vadd.f32 %v873, %v915
      %v948 = vadd.f32 %v874, %v916
      %v949 = vadd.f32 %v875, %v917
      %v950 = vadd.f32 %v876, %v918
      %v951 = vadd.f32 %v877, %v919
      %v952 = vadd.f32 %v878, %v920
      %v953 = vadd.f32 %v879, %v921
      %v954 = vadd.f32 %v880, %v922
      %v955 = vadd.f32 %v881, %v923
      %v956 = vadd.f32 %v882, %v924
      %v957 = vadd.f32 %v883, %v925
      %v958 = vadd.f32 %v884, %v926
      %v959 = vadd.f32 %v885, %v927
      %v960 = vadd.f32 %v886, %v928
      %v961 = vadd.f32 %v887, %v929
      %v962 = vadd.f32 %v888, %v930
      %v963 = vadd.f32 %v889, %v931
      %v964 = vadd.f32 %v890, %v932
      %v965 = vlaneseq
      %v966 = vshrl.u32 %v965, 7
      %v967 = vsub.s32 0, %v966
      %v968 = vrot.slane %v352, %v967
      %v969 = vmul.f32 %v502, %v968
      %v970 = vmul.f32 %v428, %v968
      %v971 = vmul.f32 %v503, %v968
      %v972 = vmul.f32 %v431, %v968
      %v973 = vmul.f32 %v504, %v968
      %v974 = vmul.f32 %v434, %v968
      %v975 = vmul.f32 %v505, %v968
      %v976 = vmul.f32 %v437, %v968
      %v977 = vmul.f32 %v506, %v968
      %v978 = vmul.f32 %v440, %v968
      %v979 = vmul.f32 %v507, %v968
      %v980 = vmul.f32 %v443, %v968
      %v981 = vmul.f32 %v508, %v968
      %v982 = vmul.f32 %v446, %v968
      %v983 = vmul.f32 %v509, %v968
      %v984 = vmul.f32 %v449, %v968
      %v985 = vmul.f32 %v510, %v968
      %v986 = vmul.f32 %v452, %v968
      %v987 = vmul.f32 %v511, %v968
      %v988 = vmul.f32 %v455, %v968
      %v989 = vmul.f32 %v512, %v968
      %v990 = vmul.f32 %v458, %v968
      %v991 = vmul.f32 %v513, %v968
      %v992 = vmul.f32 %v461, %v968
      %v993 = vmul.f32 %v514, %v968
      %v994 = vmul.f32 %v464, %v968
      %v995 = vmul.f32 %v515, %v968
      %v996 = vmul.f32 %v467, %v968
      %v997 = vmul.f32 %v822, %v968
      %v998 = vmul.f32 %v819, %v968
      %v999 = vmul.f32 %v500, %v968
      %v1000 = vmul.f32 %v422, %v968
      %v1001 = vadd.f32 %v933, %v969
      %v1002 = vadd.f32 %v934, %v970
      %v1003 = vadd.f32 %v935, %v971
      %v1004 = vadd.f32 %v936, %v972
      %v1005 = vadd.f32 %v937, %v973
      %v1006 = vadd.f32 %v938, %v974
      %v1007 = vadd.f32 %v939, %v975
      %v1008 = vadd.f32 %v940, %v976
      %v1009 = vadd.f32 %v941, %v977
      %v1010 = vadd.f32 %v942, %v978
      %v1011 = vadd.f32 %v943, %v979
      %v1012 = vadd.f32 %v944, %v980
      %v1013 = vadd.f32 %v945, %v981
      %v1014 = vadd.f32 %v946, %v982
      %v1015 = vadd.f32 %v947, %v983
      %v1016 = vadd.f32 %v948, %v984
      %v1017 = vadd.f32 %v949, %v985
      %v1018 = vadd.f32 %v950, %v986
      %v1019 = vadd.f32 %v951, %v987
      %v1020 = vadd.f32 %v952, %v988
      %v1021 = vadd.f32 %v953, %v989
      %v1022 = vadd.f32 %v954, %v990
      %v1023 = vadd.f32 %v955, %v991
      %v1024 = vadd.f32 %v956, %v992
      %v1025 = vadd.f32 %v957, %v993
      %v1026 = vadd.f32 %v958, %v994
      %v1027 = vadd.f32 %v959, %v995
      %v1028 = vadd.f32 %v960, %v996
      %v1029 = vadd.f32 %v961, %v997
      %v1030 = vadd.f32 %v962, %v998
      %v1031 = vadd.f32 %v963, %v999
      %v1032 = vadd.f32 %v964, %v1000
      %v1033 = vlaneseq
      %v1034 = vshrl.u32 %v1033, 7
      %v1035 = vsub.s32 1, %v1034
      %v1036 = vrot.slane %v352, %v1035
      %v1037 = vmul.f32 %v320, %v1036
      %v1038 = vmul.f32 %v321, %v1036
      %v1039 = vmul.f32 %v322, %v1036
      %v1040 = vmul.f32 %v323, %v1036
      %v1041 = vmul.f32 %v324, %v1036
      %v1042 = vmul.f32 %v325, %v1036
      %v1043 = vmul.f32 %v326, %v1036
      %v1044 = vmul.f32 %v327, %v1036
      %v1045 = vmul.f32 %v328, %v1036
      %v1046 = vmul.f32 %v329, %v1036
      %v1047 = vmul.f32 %v330, %v1036
      %v1048 = vmul.f32 %v331, %v1036
      %v1049 = vmul.f32 %v332, %v1036
      %v1050 = vmul.f32 %v333, %v1036
      %v1051 = vmul.f32 %v334, %v1036
      %v1052 = vmul.f32 %v335, %v1036
      %v1053 = vmul.f32 %v336, %v1036
      %v1054 = vmul.f32 %v337, %v1036
      %v1055 = vmul.f32 %v338, %v1036
      %v1056 = vmul.f32 %v339, %v1036
      %v1057 = vmul.f32 %v340, %v1036
      %v1058 = vmul.f32 %v341, %v1036
      %v1059 = vmul.f32 %v342, %v1036
      %v1060 = vmul.f32 %v343, %v1036
      %v1061 = vmul.f32 %v344, %v1036
      %v1062 = vmul.f32 %v345, %v1036
      %v1063 = vmul.f32 %v346, %v1036
      %v1064 = vmul.f32 %v347, %v1036
      %v1065 = vmul.f32 %v348, %v1036
      %v1066 = vmul.f32 %v349, %v1036
      %v1067 = vmul.f32 %v1036, 0.0
      %v1068 = vadd.f32 %v1001, %v1037
      %v1069 = vadd.f32 %v1002, %v1038
      %v1070 = vadd.f32 %v1003, %v1039
      %v1071 = vadd.f32 %v1004, %v1040
      %v1072 = vadd.f32 %v1005, %v1041
      %v1073 = vadd.f32 %v1006, %v1042
      %v1074 = vadd.f32 %v1007, %v1043
      %v1075 = vadd.f32 %v1008, %v1044
      %v1076 = vadd.f32 %v1009, %v1045
      %v1077 = vadd.f32 %v1010, %v1046
      %v1078 = vadd.f32 %v1011, %v1047
      %v1079 = vadd.f32 %v1012, %v1048
      %v1080 = vadd.f32 %v1013, %v1049
      %v1081 = vadd.f32 %v1014, %v1050
      %v1082 = vadd.f32 %v1015, %v1051
      %v1083 = vadd.f32 %v1016, %v1052
      %v1084 = vadd.f32 %v1017, %v1053
      %v1085 = vadd.f32 %v1018, %v1054
      %v1086 = vadd.f32 %v1019, %v1055
      %v1087 = vadd.f32 %v1020, %v1056
      %v1088 = vadd.f32 %v1021, %v1057
      %v1089 = vadd.f32 %v1022, %v1058
      %v1090 = vadd.f32 %v1023, %v1059
      %v1091 = vadd.f32 %v1024, %v1060
      %v1092 = vadd.f32 %v1025, %v1061
      %v1093 = vadd.f32 %v1026, %v1062
      %v1094 = vadd.f32 %v1027, %v1063
      %v1095 = vadd.f32 %v1028, %v1064
      %v1096 = vadd.f32 %v1029, %v1065
      %v1097 = vadd.f32 %v1030, %v1066
      %v1098 = vadd.f32 %v1031, %v1067
      %v1099 = vadd.f32 %v1032, %v1067
      %v1100 = vlaneseq
      %v1101 = vshrl.u32 %v1100, 7
      %v1102 = vsub.s32 2, %v1101
      %v1103 = vrot.slane %v352, %v1102
      %v1104 = vmul.f32 %v659, %v1103
      %v1105 = vmul.f32 %v733, %v1103
      %v1106 = vmul.f32 %v662, %v1103
      %v1107 = vmul.f32 %v734, %v1103
      %v1108 = vmul.f32 %v665, %v1103
      %v1109 = vmul.f32 %v735, %v1103
      %v1110 = vmul.f32 %v668, %v1103
      %v1111 = vmul.f32 %v736, %v1103
      %v1112 = vmul.f32 %v671, %v1103
      %v1113 = vmul.f32 %v737, %v1103
      %v1114 = vmul.f32 %v674, %v1103
      %v1115 = vmul.f32 %v738, %v1103
      %v1116 = vmul.f32 %v677, %v1103
      %v1117 = vmul.f32 %v739, %v1103
      %v1118 = vmul.f32 %v680, %v1103
      %v1119 = vmul.f32 %v740, %v1103
      %v1120 = vmul.f32 %v683, %v1103
      %v1121 = vmul.f32 %v741, %v1103
      %v1122 = vmul.f32 %v686, %v1103
      %v1123 = vmul.f32 %v742, %v1103
      %v1124 = vmul.f32 %v689, %v1103
      %v1125 = vmul.f32 %v743, %v1103
      %v1126 = vmul.f32 %v692, %v1103
      %v1127 = vmul.f32 %v744, %v1103
      %v1128 = vmul.f32 %v695, %v1103
      %v1129 = vmul.f32 %v745, %v1103
      %v1130 = vmul.f32 %v698, %v1103
      %v1131 = vmul.f32 %v746, %v1103
      %v1132 = vmul.f32 %v893, %v1103
      %v1133 = vmul.f32 %v896, %v1103
      %v1134 = vmul.f32 %v653, %v1103
      %v1135 = vmul.f32 %v731, %v1103
      %v1136 = vadd.f32 %v1068, %v1104
      %v1137 = vadd.f32 %v1069, %v1105
      %v1138 = vadd.f32 %v1070, %v1106
      %v1139 = vadd.f32 %v1071, %v1107
      %v1140 = vadd.f32 %v1072, %v1108
      %v1141 = vadd.f32 %v1073, %v1109
      %v1142 = vadd.f32 %v1074, %v1110
      %v1143 = vadd.f32 %v1075, %v1111
      %v1144 = vadd.f32 %v1076, %v1112
      %v1145 = vadd.f32 %v1077, %v1113
      %v1146 = vadd.f32 %v1078, %v1114
      %v1147 = vadd.f32 %v1079, %v1115
      %v1148 = vadd.f32 %v1080, %v1116
      %v1149 = vadd.f32 %v1081, %v1117
      %v1150 = vadd.f32 %v1082, %v1118
      %v1151 = vadd.f32 %v1083, %v1119
      %v1152 = vadd.f32 %v1084, %v1120
      %v1153 = vadd.f32 %v1085, %v1121
      %v1154 = vadd.f32 %v1086, %v1122
      %v1155 = vadd.f32 %v1087, %v1123
      %v1156 = vadd.f32 %v1088, %v1124
      %v1157 = vadd.f32 %v1089, %v1125
      %v1158 = vadd.f32 %v1090, %v1126
      %v1159 = vadd.f32 %v1091, %v1127
      %v1160 = vadd.f32 %v1092, %v1128
      %v1161 = vadd.f32 %v1093, %v1129
      %v1162 = vadd.f32 %v1094, %v1130
      %v1163 = vadd.f32 %v1095, %v1131
      %v1164 = vadd.f32 %v1096, %v1132
      %v1165 = vadd.f32 %v1097, %v1133
      %v1166 = vadd.f32 %v1098, %v1134
      %v1167 = vadd.f32 %v1099, %v1135
      %vm1168 = vcmask 31744
      %1169 = vst.msk [vmem:[%s271] sm:$0xff] %vm1168, %v1136
      %1170 = vst.msk [vmem:[%s271 + $0x8] sm:$0xff] %vm1168, %v1137
      %1171 = vst.msk [vmem:[%s271 + $0x10] sm:$0xff] %vm1168, %v1138
      %1172 = vst.msk [vmem:[%s271 + $0x18] sm:$0xff] %vm1168, %v1139
      %1173 = vst.msk [vmem:[%s271 + $0x20] sm:$0xff] %vm1168, %v1140
      %1174 = vst.msk [vmem:[%s271 + $0x28] sm:$0xff] %vm1168, %v1141
      %1175 = vst.msk [vmem:[%s271 + $0x30] sm:$0xff] %vm1168, %v1142
      %1176 = vst.msk [vmem:[%s271 + $0x38] sm:$0xff] %vm1168, %v1143
      %1177 = vst.msk [vmem:[%s271 + $0x40] sm:$0xff] %vm1168, %v1144
      %1178 = vst.msk [vmem:[%s271 + $0x48] sm:$0xff] %vm1168, %v1145
      %1179 = vst.msk [vmem:[%s271 + $0x50] sm:$0xff] %vm1168, %v1146
      %1180 = vst.msk [vmem:[%s271 + $0x58] sm:$0xff] %vm1168, %v1147
      %1181 = vst.msk [vmem:[%s271 + $0x60] sm:$0xff] %vm1168, %v1148
      %1182 = vst.msk [vmem:[%s271 + $0x68] sm:$0xff] %vm1168, %v1149
      %1183 = vst.msk [vmem:[%s271 + $0x70] sm:$0xff] %vm1168, %v1150
      %1184 = vst.msk [vmem:[%s271 + $0x78] sm:$0xff] %vm1168, %v1151
      %1185 = vst.msk [vmem:[%s271 + $0x80] sm:$0xff] %vm1168, %v1152
      %1186 = vst.msk [vmem:[%s271 + $0x88] sm:$0xff] %vm1168, %v1153
      %1187 = vst.msk [vmem:[%s271 + $0x90] sm:$0xff] %vm1168, %v1154
      %1188 = vst.msk [vmem:[%s271 + $0x98] sm:$0xff] %vm1168, %v1155
      %1189 = vst.msk [vmem:[%s271 + $0xa0] sm:$0xff] %vm1168, %v1156
      %1190 = vst.msk [vmem:[%s271 + $0xa8] sm:$0xff] %vm1168, %v1157
      %1191 = vst.msk [vmem:[%s271 + $0xb0] sm:$0xff] %vm1168, %v1158
      %1192 = vst.msk [vmem:[%s271 + $0xb8] sm:$0xff] %vm1168, %v1159
      %1193 = vst.msk [vmem:[%s271 + $0xc0] sm:$0xff] %vm1168, %v1160
      %1194 = vst.msk [vmem:[%s271 + $0xc8] sm:$0xff] %vm1168, %v1161
      %1195 = vst.msk [vmem:[%s271 + $0xd0] sm:$0xff] %vm1168, %v1162
      %1196 = vst.msk [vmem:[%s271 + $0xd8] sm:$0xff] %vm1168, %v1163
      %1197 = vst.msk [vmem:[%s271 + $0xe0] sm:$0xff] %vm1168, %v1164
      %1198 = vst.msk [vmem:[%s271 + $0xe8] sm:$0xff] %vm1168, %v1165
      %1199 = vst.msk [vmem:[%s271 + $0xf0] sm:$0xff] %vm1168, %v1166
      %1200 = vst.msk [vmem:[%s271 + $0xf8] sm:$0xff] %vm1168, %v1167
      %v1201 = vsel %vm1168, %v1136, 0.0
      %v1202 = vsel %vm1168, %v1137, 0.0
      %v1203 = vadd.f32 %v1201, %v1202
      %v1204 = vsel %vm1168, %v1138, 0.0
      %v1205 = vadd.f32 %v1203, %v1204
      %v1206 = vsel %vm1168, %v1139, 0.0
      %v1207 = vadd.f32 %v1205, %v1206
      %v1208 = vsel %vm1168, %v1140, 0.0
      %v1209 = vadd.f32 %v1207, %v1208
      %v1210 = vsel %vm1168, %v1141, 0.0
      %v1211 = vadd.f32 %v1209, %v1210
      %v1212 = vsel %vm1168, %v1142, 0.0
      %v1213 = vadd.f32 %v1211, %v1212
      %v1214 = vsel %vm1168, %v1143, 0.0
      %v1215 = vadd.f32 %v1213, %v1214
      %v1216 = vsel %vm1168, %v1144, 0.0
      %v1217 = vadd.f32 %v1215, %v1216
      %v1218 = vsel %vm1168, %v1145, 0.0
      %v1219 = vadd.f32 %v1217, %v1218
      %v1220 = vsel %vm1168, %v1146, 0.0
      %v1221 = vadd.f32 %v1219, %v1220
      %v1222 = vsel %vm1168, %v1147, 0.0
      %v1223 = vadd.f32 %v1221, %v1222
      %v1224 = vsel %vm1168, %v1148, 0.0
      %v1225 = vadd.f32 %v1223, %v1224
      %v1226 = vsel %vm1168, %v1149, 0.0
      %v1227 = vadd.f32 %v1225, %v1226
      %v1228 = vsel %vm1168, %v1150, 0.0
      %v1229 = vadd.f32 %v1227, %v1228
      %v1230 = vsel %vm1168, %v1151, 0.0
      %v1231 = vadd.f32 %v1229, %v1230
      %v1232 = vsel %vm1168, %v1152, 0.0
      %v1233 = vadd.f32 %v1231, %v1232
      %v1234 = vsel %vm1168, %v1153, 0.0
      %v1235 = vadd.f32 %v1233, %v1234
      %v1236 = vsel %vm1168, %v1154, 0.0
      %v1237 = vadd.f32 %v1235, %v1236
      %v1238 = vsel %vm1168, %v1155, 0.0
      %v1239 = vadd.f32 %v1237, %v1238
      %v1240 = vsel %vm1168, %v1156, 0.0
      %v1241 = vadd.f32 %v1239, %v1240
      %v1242 = vsel %vm1168, %v1157, 0.0
      %v1243 = vadd.f32 %v1241, %v1242
      %v1244 = vsel %vm1168, %v1158, 0.0
      %v1245 = vadd.f32 %v1243, %v1244
      %v1246 = vsel %vm1168, %v1159, 0.0
      %v1247 = vadd.f32 %v1245, %v1246
      %v1248 = vsel %vm1168, %v1160, 0.0
      %v1249 = vadd.f32 %v1247, %v1248
      %v1250 = vsel %vm1168, %v1161, 0.0
      %v1251 = vadd.f32 %v1249, %v1250
      %v1252 = vsel %vm1168, %v1162, 0.0
      %v1253 = vadd.f32 %v1251, %v1252
      %v1254 = vsel %vm1168, %v1163, 0.0
      %v1255 = vadd.f32 %v1253, %v1254
      %v1256 = vsel %vm1168, %v1164, 0.0
      %v1257 = vadd.f32 %v1255, %v1256
      %v1258 = vsel %vm1168, %v1165, 0.0
      %v1259 = vadd.f32 %v1257, %v1258
      %v1260 = vsel %vm1168, %v1166, 0.0
      %v1261 = vadd.f32 %v1259, %v1260
      %v1262 = vsel %vm1168, %v1167, 0.0
      %v1263 = vadd.f32 %v1261, %v1262
      %v1264 = vrot.slane %v1263, 4
      %v1265 = vadd.f32 %v1263, %v1264
      %v1266 = vrot.slane %v1265, 2
      %v1267 = vadd.f32 %v1265, %v1266
      %v1268 = vrot.slane %v1267, 1
      %v1269 = vadd.f32 %v1267, %v1268
      %v1270 = vmul.f32 %v1136, %v1136
      %v1271 = vmul.f32 %v1137, %v1137
      %v1272 = vmul.f32 %v1138, %v1138
      %v1273 = vmul.f32 %v1139, %v1139
      %v1274 = vmul.f32 %v1140, %v1140
      %v1275 = vmul.f32 %v1141, %v1141
      %v1276 = vmul.f32 %v1142, %v1142
      %v1277 = vmul.f32 %v1143, %v1143
      %v1278 = vmul.f32 %v1144, %v1144
      %v1279 = vmul.f32 %v1145, %v1145
      %v1280 = vmul.f32 %v1146, %v1146
      %v1281 = vmul.f32 %v1147, %v1147
      %v1282 = vmul.f32 %v1148, %v1148
      %v1283 = vmul.f32 %v1149, %v1149
      %v1284 = vmul.f32 %v1150, %v1150
      %v1285 = vmul.f32 %v1151, %v1151
      %v1286 = vmul.f32 %v1152, %v1152
      %v1287 = vmul.f32 %v1153, %v1153
      %v1288 = vmul.f32 %v1154, %v1154
      %v1289 = vmul.f32 %v1155, %v1155
      %v1290 = vmul.f32 %v1156, %v1156
      %v1291 = vmul.f32 %v1157, %v1157
      %v1292 = vmul.f32 %v1158, %v1158
      %v1293 = vmul.f32 %v1159, %v1159
      %v1294 = vmul.f32 %v1160, %v1160
      %v1295 = vmul.f32 %v1161, %v1161
      %v1296 = vmul.f32 %v1162, %v1162
      %v1297 = vmul.f32 %v1163, %v1163
      %v1298 = vmul.f32 %v1164, %v1164
      %v1299 = vmul.f32 %v1165, %v1165
      %v1300 = vmul.f32 %v1166, %v1166
      %v1301 = vmul.f32 %v1167, %v1167
      %v1302 = vsel %vm1168, %v1270, 0.0
      %v1303 = vsel %vm1168, %v1271, 0.0
      %v1304 = vadd.f32 %v1302, %v1303
      %v1305 = vsel %vm1168, %v1272, 0.0
      %v1306 = vadd.f32 %v1304, %v1305
      %v1307 = vsel %vm1168, %v1273, 0.0
      %v1308 = vadd.f32 %v1306, %v1307
      %v1309 = vsel %vm1168, %v1274, 0.0
      %v1310 = vadd.f32 %v1308, %v1309
      %v1311 = vsel %vm1168, %v1275, 0.0
      %v1312 = vadd.f32 %v1310, %v1311
      %v1313 = vsel %vm1168, %v1276, 0.0
      %v1314 = vadd.f32 %v1312, %v1313
      %v1315 = vsel %vm1168, %v1277, 0.0
      %v1316 = vadd.f32 %v1314, %v1315
      %v1317 = vsel %vm1168, %v1278, 0.0
      %v1318 = vadd.f32 %v1316, %v1317
      %v1319 = vsel %vm1168, %v1279, 0.0
      %v1320 = vadd.f32 %v1318, %v1319
      %v1321 = vsel %vm1168, %v1280, 0.0
      %v1322 = vadd.f32 %v1320, %v1321
      %v1323 = vsel %vm1168, %v1281, 0.0
      %v1324 = vadd.f32 %v1322, %v1323
      %v1325 = vsel %vm1168, %v1282, 0.0
      %v1326 = vadd.f32 %v1324, %v1325
      %v1327 = vsel %vm1168, %v1283, 0.0
      %v1328 = vadd.f32 %v1326, %v1327
      %v1329 = vsel %vm1168, %v1284, 0.0
      %v1330 = vadd.f32 %v1328, %v1329
      %v1331 = vsel %vm1168, %v1285, 0.0
      %v1332 = vadd.f32 %v1330, %v1331
      %v1333 = vsel %vm1168, %v1286, 0.0
      %v1334 = vadd.f32 %v1332, %v1333
      %v1335 = vsel %vm1168, %v1287, 0.0
      %v1336 = vadd.f32 %v1334, %v1335
      %v1337 = vsel %vm1168, %v1288, 0.0
      %v1338 = vadd.f32 %v1336, %v1337
      %v1339 = vsel %vm1168, %v1289, 0.0
      %v1340 = vadd.f32 %v1338, %v1339
      %v1341 = vsel %vm1168, %v1290, 0.0
      %v1342 = vadd.f32 %v1340, %v1341
      %v1343 = vsel %vm1168, %v1291, 0.0
      %v1344 = vadd.f32 %v1342, %v1343
      %v1345 = vsel %vm1168, %v1292, 0.0
      %v1346 = vadd.f32 %v1344, %v1345
      %v1347 = vsel %vm1168, %v1293, 0.0
      %v1348 = vadd.f32 %v1346, %v1347
      %v1349 = vsel %vm1168, %v1294, 0.0
      %v1350 = vadd.f32 %v1348, %v1349
      %v1351 = vsel %vm1168, %v1295, 0.0
      %v1352 = vadd.f32 %v1350, %v1351
      %v1353 = vsel %vm1168, %v1296, 0.0
      %v1354 = vadd.f32 %v1352, %v1353
      %v1355 = vsel %vm1168, %v1297, 0.0
      %v1356 = vadd.f32 %v1354, %v1355
      %v1357 = vsel %vm1168, %v1298, 0.0
      %v1358 = vadd.f32 %v1356, %v1357
      %v1359 = vsel %vm1168, %v1299, 0.0
      %v1360 = vadd.f32 %v1358, %v1359
      %v1361 = vsel %vm1168, %v1300, 0.0
      %v1362 = vadd.f32 %v1360, %v1361
      %v1363 = vsel %vm1168, %v1301, 0.0
      %v1364 = vadd.f32 %v1362, %v1363
      %v1365 = vrot.slane %v1364, 4
      %v1366 = vadd.f32 %v1364, %v1365
      %v1367 = vrot.slane %v1366, 2
      %v1368 = vadd.f32 %v1366, %v1367
      %v1369 = vrot.slane %v1368, 1
      %v1370 = vadd.f32 %v1368, %v1369
      %v1371 = vsel %vm420, %v1269, %v1370
      %vm1372 = vcmask 25600
      %1373 = vst.msk [vmem:[%s275] sm:$0x3] %vm1372, %v1371
      %v1374 = vpack.c.bf16 %v319, %v318
      %v1375 = vpack.c.bf16 %v321, %v320
      %v1376 = vpack.c.bf16 %v323, %v322
      %v1377 = vpack.c.bf16 %v325, %v324
      %v1378 = vpack.c.bf16 %v327, %v326
      %v1379 = vpack.c.bf16 %v329, %v328
      %v1380 = vpack.c.bf16 %v331, %v330
      %v1381 = vpack.c.bf16 %v333, %v332
      %v1382 = vpack.c.bf16 %v335, %v334
      %v1383 = vpack.c.bf16 %v337, %v336
      %v1384 = vpack.c.bf16 %v339, %v338
      %v1385 = vpack.c.bf16 %v341, %v340
      %v1386 = vpack.c.bf16 %v343, %v342
      %v1387 = vpack.c.bf16 %v345, %v344
      %v1388 = vpack.c.bf16 %v347, %v346
      %v1389 = vpack.c.bf16 %v349, %v348
      %v1390 = vld [vmem:[%s2] sm:$0x3]
      %v1392 = vsel %vm1168, %v1374, 0
      %v1395 = vsel %vm1168, %v1375, 0
      %v1398 = vsel %vm1168, %v1376, 0
      %v1401 = vsel %vm1168, %v1377, 0
      %v1404 = vsel %vm1168, %v1378, 0
      %v1407 = vsel %vm1168, %v1379, 0
      %v1410 = vsel %vm1168, %v1380, 0
      %v1413 = vsel %vm1168, %v1381, 0
      %v1416 = vsel %vm1168, %v1382, 0
      %v1419 = vsel %vm1168, %v1383, 0
      %v1422 = vsel %vm1168, %v1384, 0
      %v1425 = vsel %vm1168, %v1385, 0
      %v1428 = vsel %vm1168, %v1386, 0
      %v1431 = vsel %vm1168, %v1387, 0
      %v1434 = vsel %vm1168, %v1388, 0
      %v1437 = vsel %vm1168, %v1389, 0
      %vm1439 = vcmask 1041408
      %v1441 = vsel %vm1439, %v1390, 0
      %1443 = vmatprep.subr.bf16.mxu0 0
      %1444 = vmatpush1.bf16.msra.mxu0 %v1441
      %1445 = vmatprep.subr.bf16.mxu0 0
      %1446 = vmatpush1.bf16.msra.mxu0 0
      %1447 = vmatprep.subr.bf16.mxu0 0
      %1448 = vmatpush1.bf16.msra.mxu0 0
      %1449 = vmatprep.subr.bf16.mxu0 0
      %1450 = vmatpush1.bf16.msra.mxu0 0
      %1451 = vmatprep.subr.bf16.mxu0 0
      %1452 = vmatpush1.bf16.msra.mxu0 0
      %1453 = vmatprep.subr.bf16.mxu0 0
      %1454 = vmatpush1.bf16.msra.mxu0 0
      %1455 = vmatprep.subr.bf16.mxu0 0
      %1456 = vmatpush1.bf16.msra.mxu0 0
      %1457 = vmatprep.subr.bf16.mxu0 0
      %1458 = vmatpush1.bf16.msra.mxu0 0
      %1459 = vmatprep.subr.bf16.mxu0 0
      %1460 = vmatpush1.bf16.msra.mxu0 0
      %1461 = vmatprep.subr.bf16.mxu0 0
      %1462 = vmatpush1.bf16.msra.mxu0 0
      %1463 = vmatprep.subr.bf16.mxu0 0
      %1464 = vmatpush1.bf16.msra.mxu0 0
      %1465 = vmatprep.subr.bf16.mxu0 0
      %1466 = vmatpush1.bf16.msra.mxu0 0
      %1467 = vmatprep.subr.bf16.mxu0 0
      %1468 = vmatpush1.bf16.msra.mxu0 0
      %1469 = vmatprep.subr.bf16.mxu0 0
      %1470 = vmatpush1.bf16.msra.mxu0 0
      %1471 = vmatprep.subr.bf16.mxu0 0
      %1472 = vmatpush1.bf16.msra.mxu0 0
      %1473 = vmatprep.subr.bf16.mxu0 0
      %1474 = vmatpush1.bf16.msra.mxu0 0
      %1475 = vmatprep.mubr.bf16.mxu0 0
      %1476 = vmatmul.mubr.bf16.gmra.mrb[0].mxu0 %v1392
      %v1477 = vpop.f32.mrb[0].mxu0
      %v1478 = vadd.f32 0.0, %v1477
      %v1479 = vpop.f32.mrb[0].mxu0
      %v1480 = vpop.f32.mrb[0].mxu0
      %v1481 = vadd.f32 0.0, %v1480
      %v1482 = vpop.f32.mrb[0].mxu0
      %1483 = vmatprep.mubr.bf16.mxu0 0
      %1484 = vmatmul.mubr.bf16.gmra.mrb[0].mxu0 %v1395
      %v1485 = vpop.f32.mrb[0].mxu0
      %v1486 = vadd.f32 0.0, %v1485
      %v1487 = vpop.f32.mrb[0].mxu0
      %v1488 = vpop.f32.mrb[0].mxu0
      %v1489 = vadd.f32 0.0, %v1488
      %v1490 = vpop.f32.mrb[0].mxu0
      %1491 = vmatprep.mubr.bf16.mxu0 0
      %1492 = vmatmul.mubr.bf16.gmra.mrb[0].mxu0 %v1398
      %v1493 = vpop.f32.mrb[0].mxu0
      %v1494 = vadd.f32 0.0, %v1493
      %v1495 = vpop.f32.mrb[0].mxu0
      %v1496 = vpop.f32.mrb[0].mxu0
      %v1497 = vadd.f32 0.0, %v1496
      %v1498 = vpop.f32.mrb[0].mxu0
      %1499 = vmatprep.mubr.bf16.mxu0 0
      %1500 = vmatmul.mubr.bf16.gmra.mrb[0].mxu0 %v1401
      %v1501 = vpop.f32.mrb[0].mxu0
      %v1502 = vadd.f32 0.0, %v1501
      %v1503 = vpop.f32.mrb[0].mxu0
      %v1504 = vpop.f32.mrb[0].mxu0
      %v1505 = vadd.f32 0.0, %v1504
      %v1506 = vpop.f32.mrb[0].mxu0
      %1507 = vmatprep.mubr.bf16.mxu0 0
      %1508 = vmatmul.mubr.bf16.gmra.mrb[0].mxu0 %v1404
      %v1509 = vpop.f32.mrb[0].mxu0
      %v1510 = vadd.f32 0.0, %v1509
      %v1511 = vpop.f32.mrb[0].mxu0
      %v1512 = vpop.f32.mrb[0].mxu0
      %v1513 = vadd.f32 0.0, %v1512
      %v1514 = vpop.f32.mrb[0].mxu0
      %1515 = vmatprep.mubr.bf16.mxu0 0
      %1516 = vmatmul.mubr.bf16.gmra.mrb[0].mxu0 %v1407
      %v1517 = vpop.f32.mrb[0].mxu0
      %v1518 = vadd.f32 0.0, %v1517
      %v1519 = vpop.f32.mrb[0].mxu0
      %v1520 = vpop.f32.mrb[0].mxu0
      %v1521 = vadd.f32 0.0, %v1520
      %v1522 = vpop.f32.mrb[0].mxu0
      %1523 = vmatprep.mubr.bf16.mxu0 0
      %1524 = vmatmul.mubr.bf16.gmra.mrb[0].mxu0 %v1410
      %v1525 = vpop.f32.mrb[0].mxu0
      %v1526 = vadd.f32 0.0, %v1525
      %v1527 = vpop.f32.mrb[0].mxu0
      %v1528 = vpop.f32.mrb[0].mxu0
      %v1529 = vadd.f32 0.0, %v1528
      %v1530 = vpop.f32.mrb[0].mxu0
      %1531 = vmatprep.mubr.bf16.mxu0 0
      %1532 = vmatmul.mubr.bf16.gmra.mrb[0].mxu0 %v1413
      %v1533 = vpop.f32.mrb[0].mxu0
      %v1534 = vadd.f32 0.0, %v1533
      %v1535 = vpop.f32.mrb[0].mxu0
      %v1536 = vpop.f32.mrb[0].mxu0
      %v1537 = vadd.f32 0.0, %v1536
      %v1538 = vpop.f32.mrb[0].mxu0
      %1539 = vmatprep.mubr.bf16.mxu0 0
      %1540 = vmatmul.mubr.bf16.gmra.mrb[0].mxu0 %v1416
      %v1541 = vpop.f32.mrb[0].mxu0
      %v1542 = vadd.f32 0.0, %v1541
      %v1543 = vpop.f32.mrb[0].mxu0
      %v1544 = vpop.f32.mrb[0].mxu0
      %v1545 = vadd.f32 0.0, %v1544
      %v1546 = vpop.f32.mrb[0].mxu0
      %1547 = vmatprep.mubr.bf16.mxu0 0
      %1548 = vmatmul.mubr.bf16.gmra.mrb[0].mxu0 %v1419
      %v1549 = vpop.f32.mrb[0].mxu0
      %v1550 = vadd.f32 0.0, %v1549
      %v1551 = vpop.f32.mrb[0].mxu0
      %v1552 = vpop.f32.mrb[0].mxu0
      %v1553 = vadd.f32 0.0, %v1552
      %v1554 = vpop.f32.mrb[0].mxu0
      %1555 = vmatprep.mubr.bf16.mxu0 0
      %1556 = vmatmul.mubr.bf16.gmra.mrb[0].mxu0 %v1422
      %v1557 = vpop.f32.mrb[0].mxu0
      %v1558 = vadd.f32 0.0, %v1557
      %v1559 = vpop.f32.mrb[0].mxu0
      %v1560 = vpop.f32.mrb[0].mxu0
      %v1561 = vadd.f32 0.0, %v1560
      %v1562 = vpop.f32.mrb[0].mxu0
      %1563 = vmatprep.mubr.bf16.mxu0 0
      %1564 = vmatmul.mubr.bf16.gmra.mrb[0].mxu0 %v1425
      %v1565 = vpop.f32.mrb[0].mxu0
      %v1566 = vadd.f32 0.0, %v1565
      %v1567 = vpop.f32.mrb[0].mxu0
      %v1568 = vpop.f32.mrb[0].mxu0
      %v1569 = vadd.f32 0.0, %v1568
      %v1570 = vpop.f32.mrb[0].mxu0
      %1571 = vmatprep.mubr.bf16.mxu0 0
      %1572 = vmatmul.mubr.bf16.gmra.mrb[0].mxu0 %v1428
      %v1573 = vpop.f32.mrb[0].mxu0
      %v1574 = vadd.f32 0.0, %v1573
      %v1575 = vpop.f32.mrb[0].mxu0
      %v1576 = vpop.f32.mrb[0].mxu0
      %v1577 = vadd.f32 0.0, %v1576
      %v1578 = vpop.f32.mrb[0].mxu0
      %1579 = vmatprep.mubr.bf16.mxu0 0
      %1580 = vmatmul.mubr.bf16.gmra.mrb[0].mxu0 %v1431
      %v1581 = vpop.f32.mrb[0].mxu0
      %v1582 = vadd.f32 0.0, %v1581
      %v1583 = vpop.f32.mrb[0].mxu0
      %v1584 = vpop.f32.mrb[0].mxu0
      %v1585 = vadd.f32 0.0, %v1584
      %v1586 = vpop.f32.mrb[0].mxu0
      %1587 = vmatprep.mubr.bf16.mxu0 0
      %1588 = vmatmul.mubr.bf16.gmra.mrb[0].mxu0 %v1434
      %v1589 = vpop.f32.mrb[0].mxu0
      %v1590 = vadd.f32 0.0, %v1589
      %v1591 = vpop.f32.mrb[0].mxu0
      %v1592 = vpop.f32.mrb[0].mxu0
      %v1593 = vadd.f32 0.0, %v1592
      %v1594 = vpop.f32.mrb[0].mxu0
      %1595 = vmatprep.mubr.bf16.mxu0 0
      %1596 = vmatmul.mubr.bf16.gmra.mrb[0].mxu0 %v1437
      %v1597 = vpop.f32.mrb[0].mxu0
      %v1598 = vadd.f32 0.0, %v1597
      %v1599 = vpop.f32.mrb[0].mxu0
      %v1600 = vpop.f32.mrb[0].mxu0
      %v1601 = vadd.f32 0.0, %v1600
      %v1602 = vpop.f32.mrb[0].mxu0
      %1603 = vdwg.mxu0
      %vm1604 = vcmask 64512
      %1605 = vst.msk [vmem:[%s280] sm:$0xff] %vm1604, %v1478
      %1606 = vst.msk [vmem:[%s280 + $0x8] sm:$0xff] %vm1604, %v1481
      %1607 = vst.msk [vmem:[%s280 + $0x10] sm:$0xff] %vm1604, %v1486
      %1608 = vst.msk [vmem:[%s280 + $0x18] sm:$0xff] %vm1604, %v1489
      %1609 = vst.msk [vmem:[%s280 + $0x20] sm:$0xff] %vm1604, %v1494
      %1610 = vst.msk [vmem:[%s280 + $0x28] sm:$0xff] %vm1604, %v1497
      %1611 = vst.msk [vmem:[%s280 + $0x30] sm:$0xff] %vm1604, %v1502
      %1612 = vst.msk [vmem:[%s280 + $0x38] sm:$0xff] %vm1604, %v1505
      %1613 = vst.msk [vmem:[%s280 + $0x40] sm:$0xff] %vm1604, %v1510
      %1614 = vst.msk [vmem:[%s280 + $0x48] sm:$0xff] %vm1604, %v1513
      %1615 = vst.msk [vmem:[%s280 + $0x50] sm:$0xff] %vm1604, %v1518
      %1616 = vst.msk [vmem:[%s280 + $0x58] sm:$0xff] %vm1604, %v1521
      %1617 = vst.msk [vmem:[%s280 + $0x60] sm:$0xff] %vm1604, %v1526
      %1618 = vst.msk [vmem:[%s280 + $0x68] sm:$0xff] %vm1604, %v1529
      %1619 = vst.msk [vmem:[%s280 + $0x70] sm:$0xff] %vm1604, %v1534
      %1620 = vst.msk [vmem:[%s280 + $0x78] sm:$0xff] %vm1604, %v1537
      %1621 = vst.msk [vmem:[%s280 + $0x80] sm:$0xff] %vm1604, %v1542
      %1622 = vst.msk [vmem:[%s280 + $0x88] sm:$0xff] %vm1604, %v1545
      %1623 = vst.msk [vmem:[%s280 + $0x90] sm:$0xff] %vm1604, %v1550
      %1624 = vst.msk [vmem:[%s280 + $0x98] sm:$0xff] %vm1604, %v1553
      %1625 = vst.msk [vmem:[%s280 + $0xa0] sm:$0xff] %vm1604, %v1558
      %1626 = vst.msk [vmem:[%s280 + $0xa8] sm:$0xff] %vm1604, %v1561
      %1627 = vst.msk [vmem:[%s280 + $0xb0] sm:$0xff] %vm1604, %v1566
      %1628 = vst.msk [vmem:[%s280 + $0xb8] sm:$0xff] %vm1604, %v1569
      %1629 = vst.msk [vmem:[%s280 + $0xc0] sm:$0xff] %vm1604, %v1574
      %1630 = vst.msk [vmem:[%s280 + $0xc8] sm:$0xff] %vm1604, %v1577
      %1631 = vst.msk [vmem:[%s280 + $0xd0] sm:$0xff] %vm1604, %v1582
      %1632 = vst.msk [vmem:[%s280 + $0xd8] sm:$0xff] %vm1604, %v1585
      %1633 = vst.msk [vmem:[%s280 + $0xe0] sm:$0xff] %vm1604, %v1590
      %1634 = vst.msk [vmem:[%s280 + $0xe8] sm:$0xff] %vm1604, %v1593
      %1635 = vst.msk [vmem:[%s280 + $0xf0] sm:$0xff] %vm1604, %v1598
      %1636 = vst.msk [vmem:[%s280 + $0xf8] sm:$0xff] %vm1604, %v1601
      %v1637 = vsel %vm1604, %v1478, 0.0
      %v1638 = vsel %vm1604, %v1481, 0.0
      %v1639 = vadd.f32 %v1637, %v1638
      %v1640 = vsel %vm1604, %v1486, 0.0
      %v1641 = vadd.f32 %v1639, %v1640
      %v1642 = vsel %vm1604, %v1489, 0.0
      %v1643 = vadd.f32 %v1641, %v1642
      %v1644 = vsel %vm1604, %v1494, 0.0
      %v1645 = vadd.f32 %v1643, %v1644
      %v1646 = vsel %vm1604, %v1497, 0.0
      %v1647 = vadd.f32 %v1645, %v1646
      %v1648 = vsel %vm1604, %v1502, 0.0
      %v1649 = vadd.f32 %v1647, %v1648
      %v1650 = vsel %vm1604, %v1505, 0.0
      %v1651 = vadd.f32 %v1649, %v1650
      %v1652 = vsel %vm1604, %v1510, 0.0
      %v1653 = vadd.f32 %v1651, %v1652
      %v1654 = vsel %vm1604, %v1513, 0.0
      %v1655 = vadd.f32 %v1653, %v1654
      %v1656 = vsel %vm1604, %v1518, 0.0
      %v1657 = vadd.f32 %v1655, %v1656
      %v1658 = vsel %vm1604, %v1521, 0.0
      %v1659 = vadd.f32 %v1657, %v1658
      %v1660 = vsel %vm1604, %v1526, 0.0
      %v1661 = vadd.f32 %v1659, %v1660
      %v1662 = vsel %vm1604, %v1529, 0.0
      %v1663 = vadd.f32 %v1661, %v1662
      %v1664 = vsel %vm1604, %v1534, 0.0
      %v1665 = vadd.f32 %v1663, %v1664
      %v1666 = vsel %vm1604, %v1537, 0.0
      %v1667 = vadd.f32 %v1665, %v1666
      %v1668 = vsel %vm1604, %v1542, 0.0
      %v1669 = vadd.f32 %v1667, %v1668
      %v1670 = vsel %vm1604, %v1545, 0.0
      %v1671 = vadd.f32 %v1669, %v1670
      %v1672 = vsel %vm1604, %v1550, 0.0
      %v1673 = vadd.f32 %v1671, %v1672
      %v1674 = vsel %vm1604, %v1553, 0.0
      %v1675 = vadd.f32 %v1673, %v1674
      %v1676 = vsel %vm1604, %v1558, 0.0
      %v1677 = vadd.f32 %v1675, %v1676
      %v1678 = vsel %vm1604, %v1561, 0.0
      %v1679 = vadd.f32 %v1677, %v1678
      %v1680 = vsel %vm1604, %v1566, 0.0
      %v1681 = vadd.f32 %v1679, %v1680
      %v1682 = vsel %vm1604, %v1569, 0.0
      %v1683 = vadd.f32 %v1681, %v1682
      %v1684 = vsel %vm1604, %v1574, 0.0
      %v1685 = vadd.f32 %v1683, %v1684
      %v1686 = vsel %vm1604, %v1577, 0.0
      %v1687 = vadd.f32 %v1685, %v1686
      %v1688 = vsel %vm1604, %v1582, 0.0
      %v1689 = vadd.f32 %v1687, %v1688
      %v1690 = vsel %vm1604, %v1585, 0.0
      %v1691 = vadd.f32 %v1689, %v1690
      %v1692 = vsel %vm1604, %v1590, 0.0
      %v1693 = vadd.f32 %v1691, %v1692
      %v1694 = vsel %vm1604, %v1593, 0.0
      %v1695 = vadd.f32 %v1693, %v1694
      %v1696 = vsel %vm1604, %v1598, 0.0
      %v1697 = vadd.f32 %v1695, %v1696
      %v1698 = vsel %vm1604, %v1601, 0.0
      %v1699 = vadd.f32 %v1697, %v1698
      %v1700 = vrot.slane %v1699, 4
      %v1701 = vadd.f32 %v1699, %v1700
      %v1702 = vrot.slane %v1701, 2
      %v1703 = vadd.f32 %v1701, %v1702
      %v1704 = vrot.slane %v1703, 1
      %v1705 = vadd.f32 %v1703, %v1704
      %v1706 = vmul.f32 %v1478, %v1478
      %v1707 = vmul.f32 %v1481, %v1481
      %v1708 = vmul.f32 %v1486, %v1486
      %v1709 = vmul.f32 %v1489, %v1489
      %v1710 = vmul.f32 %v1494, %v1494
      %v1711 = vmul.f32 %v1497, %v1497
      %v1712 = vmul.f32 %v1502, %v1502
      %v1713 = vmul.f32 %v1505, %v1505
      %v1714 = vmul.f32 %v1510, %v1510
      %v1715 = vmul.f32 %v1513, %v1513
      %v1716 = vmul.f32 %v1518, %v1518
      %v1717 = vmul.f32 %v1521, %v1521
      %v1718 = vmul.f32 %v1526, %v1526
      %v1719 = vmul.f32 %v1529, %v1529
      %v1720 = vmul.f32 %v1534, %v1534
      %v1721 = vmul.f32 %v1537, %v1537
      %v1722 = vmul.f32 %v1542, %v1542
      %v1723 = vmul.f32 %v1545, %v1545
      %v1724 = vmul.f32 %v1550, %v1550
      %v1725 = vmul.f32 %v1553, %v1553
      %v1726 = vmul.f32 %v1558, %v1558
      %v1727 = vmul.f32 %v1561, %v1561
      %v1728 = vmul.f32 %v1566, %v1566
      %v1729 = vmul.f32 %v1569, %v1569
      %v1730 = vmul.f32 %v1574, %v1574
      %v1731 = vmul.f32 %v1577, %v1577
      %v1732 = vmul.f32 %v1582, %v1582
      %v1733 = vmul.f32 %v1585, %v1585
      %v1734 = vmul.f32 %v1590, %v1590
      %v1735 = vmul.f32 %v1593, %v1593
      %v1736 = vmul.f32 %v1598, %v1598
      %v1737 = vmul.f32 %v1601, %v1601
      %v1738 = vsel %vm1604, %v1706, 0.0
      %v1739 = vsel %vm1604, %v1707, 0.0
      %v1740 = vadd.f32 %v1738, %v1739
      %v1741 = vsel %vm1604, %v1708, 0.0
      %v1742 = vadd.f32 %v1740, %v1741
      %v1743 = vsel %vm1604, %v1709, 0.0
      %v1744 = vadd.f32 %v1742, %v1743
      %v1745 = vsel %vm1604, %v1710, 0.0
      %v1746 = vadd.f32 %v1744, %v1745
      %v1747 = vsel %vm1604, %v1711, 0.0
      %v1748 = vadd.f32 %v1746, %v1747
      %v1749 = vsel %vm1604, %v1712, 0.0
      %v1750 = vadd.f32 %v1748, %v1749
      %v1751 = vsel %vm1604, %v1713, 0.0
      %v1752 = vadd.f32 %v1750, %v1751
      %v1753 = vsel %vm1604, %v1714, 0.0
      %v1754 = vadd.f32 %v1752, %v1753
      %v1755 = vsel %vm1604, %v1715, 0.0
      %v1756 = vadd.f32 %v1754, %v1755
      %v1757 = vsel %vm1604, %v1716, 0.0
      %v1758 = vadd.f32 %v1756, %v1757
      %v1759 = vsel %vm1604, %v1717, 0.0
      %v1760 = vadd.f32 %v1758, %v1759
      %v1761 = vsel %vm1604, %v1718, 0.0
      %v1762 = vadd.f32 %v1760, %v1761
      %v1763 = vsel %vm1604, %v1719, 0.0
      %v1764 = vadd.f32 %v1762, %v1763
      %v1765 = vsel %vm1604, %v1720, 0.0
      %v1766 = vadd.f32 %v1764, %v1765
      %v1767 = vsel %vm1604, %v1721, 0.0
      %v1768 = vadd.f32 %v1766, %v1767
      %v1769 = vsel %vm1604, %v1722, 0.0
      %v1770 = vadd.f32 %v1768, %v1769
      %v1771 = vsel %vm1604, %v1723, 0.0
      %v1772 = vadd.f32 %v1770, %v1771
      %v1773 = vsel %vm1604, %v1724, 0.0
      %v1774 = vadd.f32 %v1772, %v1773
      %v1775 = vsel %vm1604, %v1725, 0.0
      %v1776 = vadd.f32 %v1774, %v1775
      %v1777 = vsel %vm1604, %v1726, 0.0
      %v1778 = vadd.f32 %v1776, %v1777
      %v1779 = vsel %vm1604, %v1727, 0.0
      %v1780 = vadd.f32 %v1778, %v1779
      %v1781 = vsel %vm1604, %v1728, 0.0
      %v1782 = vadd.f32 %v1780, %v1781
      %v1783 = vsel %vm1604, %v1729, 0.0
      %v1784 = vadd.f32 %v1782, %v1783
      %v1785 = vsel %vm1604, %v1730, 0.0
      %v1786 = vadd.f32 %v1784, %v1785
      %v1787 = vsel %vm1604, %v1731, 0.0
      %v1788 = vadd.f32 %v1786, %v1787
      %v1789 = vsel %vm1604, %v1732, 0.0
      %v1790 = vadd.f32 %v1788, %v1789
      %v1791 = vsel %vm1604, %v1733, 0.0
      %v1792 = vadd.f32 %v1790, %v1791
      %v1793 = vsel %vm1604, %v1734, 0.0
      %v1794 = vadd.f32 %v1792, %v1793
      %v1795 = vsel %vm1604, %v1735, 0.0
      %v1796 = vadd.f32 %v1794, %v1795
      %v1797 = vsel %vm1604, %v1736, 0.0
      %v1798 = vadd.f32 %v1796, %v1797
      %v1799 = vsel %vm1604, %v1737, 0.0
      %v1800 = vadd.f32 %v1798, %v1799
      %v1801 = vrot.slane %v1800, 4
      %v1802 = vadd.f32 %v1800, %v1801
      %v1803 = vrot.slane %v1802, 2
      %v1804 = vadd.f32 %v1802, %v1803
      %v1805 = vrot.slane %v1804, 1
      %v1806 = vadd.f32 %v1804, %v1805
      %v1807 = vsel %vm420, %v1705, %v1806
      %vm1808 = vcmask 58368
      %1809 = vst.msk [vmem:[%s284] sm:$0x3] %vm1808, %v1807
      %p1810 = scmp.lt.s32.totalorder %s18, 1
      %s1811 = scalar_select %p1810, %s18, 1
      %s1812 = smul.addr %s1811, 32
      %s1813 = smul.addr %s1812, 8
      %s1814 = scalar_lea.vmem %s3, %s1813
      %p1815 = scmp.lt.s32.totalorder %s18, 1
      %s1816 = scalar_select %p1815, %s18, 1
      %s1817 = smul.addr %s1816, 2
      %s1818 = scalar_lea.vmem %s4, %s1817
      %p1819 = scmp.lt.s32.totalorder %s18, 1
      %s1820 = scalar_select %p1819, %s18, 1
      %s1821 = smul.addr %s1820, 32
      %s1822 = smul.addr %s1821, 8
      %s1823 = scalar_lea.vmem %s5, %s1822
      %p1824 = scmp.lt.s32.totalorder %s18, 1
      %s1825 = scalar_select %p1824, %s18, 1
      %s1826 = smul.addr %s1825, 2
      %s1827 = scalar_lea.vmem %s6, %s1826
      // Predicated region
      $region33: #{_forward.7} parent=31 // pred_check
        %p1828 = pneg %p104
      $region34: #{_forward.7} parent=31 // pred_check_branch
        %1830 = sbr.rel (%p1828) target = $region36
      $region35: #{_forward.7} parent=31 // pred_region
        _
      $region36: #{_forward.7} parent=31 // pred_fallthru
        _
      // Predicated region
      $region37: #{_forward.7} parent=31 // pred_check
        %p1831 = pneg %p130
      $region38: #{_forward.7} parent=31 // pred_check_branch
        %1833 = sbr.rel (%p1831) target = $region40
      $region39: #{_forward.7} parent=31 // pred_region
        _
      $region40: #{_forward.7} parent=31 // pred_fallthru
        _
      // Predicated region
      $region41: #{_forward.7} parent=31 // pred_check
        %p1834 = pneg %p156
      $region42: #{_forward.7} parent=31 // pred_check_branch
        %1836 = sbr.rel (%p1834) target = $region44
      $region43: #{_forward.7} parent=31 // pred_region
        _
      $region44: #{_forward.7} parent=31 // pred_fallthru
        _
      // Predicated region
      $region45: #{_forward.7} parent=31 // pred_check
        %p1837 = pneg %p182
      $region46: #{_forward.7} parent=31 // pred_check_branch
        %1839 = sbr.rel (%p1837) target = $region48
      $region47: #{_forward.7} parent=31 // pred_region
        _
      $region48: #{_forward.7} parent=31 // pred_fallthru
        _
    $region32: #{_forward.7} parent=5 // pred_fallthru
      _
    %p1840 = scmp.le.s32.totalorder 2, %s13
    // Predicated region
    $region49: #{_forward.7} parent=5 // pred_check
      %p1841 = pneg %p1840
    $region50: #{_forward.7} parent=5 // pred_check_branch
      %1843 = sbr.rel (%p1841) target = $region52
    $region51: #{_forward.7} parent=5 // pred_region
      %s1844 = ssub.s32 %s13, 2
      // Predicated region
      $region53: #{_forward.7} parent=51 // pred_check
        %p1845 = pneg %p110
      $region54: #{_forward.7} parent=51 // pred_check_branch
        %1847 = sbr.rel (%p1845) target = $region56
      $region55: #{_forward.7} parent=51 // pred_region
        %p1848 = scmp.lt.s32.totalorder %s19, 1
        %s1849 = scalar_select %p1848, %s19, 1
        %s1850 = smul.addr %s1849, 32
        %s1851 = smul.addr %s1850, 8
        %s1852 = scalar_lea.vmem %s3, %s1851
      $region56: #{_forward.7} parent=51 // pred_fallthru
        _
      // Predicated region
      $region57: #{_forward.7} parent=51 // pred_check
        %p1853 = pneg %p136
      $region58: #{_forward.7} parent=51 // pred_check_branch
        %1855 = sbr.rel (%p1853) target = $region60
      $region59: #{_forward.7} parent=51 // pred_region
        %p1856 = scmp.lt.s32.totalorder %s19, 1
        %s1857 = scalar_select %p1856, %s19, 1
        %s1858 = smul.addr %s1857, 2
        %s1859 = scalar_lea.vmem %s4, %s1858
      $region60: #{_forward.7} parent=51 // pred_fallthru
        _
      // Predicated region
      $region61: #{_forward.7} parent=51 // pred_check
        %p1860 = pneg %p162
      $region62: #{_forward.7} parent=51 // pred_check_branch
        %1862 = sbr.rel (%p1860) target = $region64
      $region63: #{_forward.7} parent=51 // pred_region
        %p1863 = scmp.lt.s32.totalorder %s19, 1
        %s1864 = scalar_select %p1863, %s19, 1
        %s1865 = smul.addr %s1864, 32
        %s1866 = smul.addr %s1865, 8
        %s1867 = scalar_lea.vmem %s5, %s1866
      $region64: #{_forward.7} parent=51 // pred_fallthru
        _
      // Predicated region
      $region65: #{_forward.7} parent=51 // pred_check
        %p1868 = pneg %p188
      $region66: #{_forward.7} parent=51 // pred_check_branch
        %1870 = sbr.rel (%p1868) target = $region68
      $region67: #{_forward.7} parent=51 // pred_region
        %p1871 = scmp.lt.s32.totalorder %s19, 1
        %s1872 = scalar_select %p1871, %s19, 1
        %s1873 = smul.addr %s1872, 2
        %s1874 = scalar_lea.vmem %s6, %s1873
      $region68: #{_forward.7} parent=51 // pred_fallthru
        _
    $region52: #{_forward.7} parent=5 // pred_fallthru
      _
  $region6: #{_forward.7} parent=0 // loop_footer
    %s17 = sadd.s32 1, %s13
  $region7: #{_forward.7} parent=0 // loop_footer_branch
    %12 = sbr.rel target = $region3
  $region8: #{_forward.7} parent=0 // loop_exit
    _

// kernel: _forward.9
$region0: #{_forward.9}
  #allocation0 [shape = 'u32[]', space=smem, size = 0x4, offset = 0x4, fixed_abs, tag = 'smem constant byte address 0x4 - core index']
  #allocation1 [shape = 'u32[144,128]{1,0:T(1,128)}', space=vmem, size = 0x12000, scoped, tag = 'internal scratch']
  %s0 = inlined_call_operand.vmem [shape: f32[2,16,16,8], index: 0, kind: input, shape index: {}]
  %s1 = inlined_call_operand.vmem [shape: f32[1,8], index: 1, kind: input, shape index: {}]
  %s2 = inlined_call_operand.vmem [shape: f32[1,8], index: 2, kind: input, shape index: {}]
  %s3 = inlined_call_operand.vmem [shape: f32[3,3,8], index: 3, kind: input, shape index: {}]
  %s4 = inlined_call_operand.vmem [shape: f32[2,16,16,8], index: 4, kind: output, shape index: {0}]
  %s5 = inlined_call_operand.vmem [shape: f32[2,2,8], index: 5, kind: output, shape index: {1}]
  %6 = xla_tuple %s4, %s5
  %s7 = sld [smem:[#allocation0]]
  $region57: #{_forward.9} parent=0
    _
  %s9 = ssub.s32 1, %s7
  %s10 = scalar_select 0, %s9, %s7
  loop: start=0, step=1, limit=4
  $region2: #{_forward.9} parent=0 // loop_pre_header
    _
  $region3: #{_forward.9} parent=0 // loop_header
    %s12 = sphi 0, %s16
    %p13 = scmp.ge.s32.totalorder %s12, 4
    %s22 = sphi 0, %s24
    %s25 = sphi 0, %s22
    %s26 = sphi 0, %s25
    %s42 = sphi 0, %s26
    %s46 = sphi 0, %s46
    %s48 = sphi 0, %s46
    %s49 = sphi 0, %s48
    %s63 = sphi 0, %s49
    %s67 = sphi 0, %s67
    %s69 = sphi 0, %s67
    %s70 = sphi 0, %s69
    %s84 = sphi 0, %s70
    %s88 = sphi 0, %s88
    %s90 = sphi 0, %s88
    %s91 = sphi 0, %s90
    %s105 = sphi 0, %s91
    %s111 = sphi 0, %s113
    %s114 = sphi 0, %s111
    %s115 = sphi 0, %s114
    %s131 = sphi 0, %s115
    %s137 = sphi 0, %s139
    %s140 = sphi 0, %s137
    %s141 = sphi 0, %s140
    %s157 = sphi 0, %s141
  $region4: #{_forward.9} parent=0 // loop_header_branch
    %15 = sbr.rel (%p13) target = $region8
  $region5: #{_forward.9} parent=0 // loop_body
    %s17 = ssub.s32 %s12, 1
    %s18 = ssub.s32 %s12, 2
    %s19 = sadd.s32 %s12, 1
    %s20 = ssub.s32 %s12, %s19
    %p21 = scmp.eq.s32.totalorder %s20, 0
    %s23 = sadd.s32 %s22, 1
    %s24 = scalar_select %p21, %s22, %s23
    %p27 = pneg %p21
    %p28 = scmp.eq.s32.totalorder %s12, 1
    %p29 = por %p27, %p28
    %p30 = scmp.ne.s32.totalorder %s22, %s25
    %p31 = scmp.eq.s32.totalorder %s12, 0
    %p32 = por %p30, %p31
    %p33 = scmp.ne.s32.totalorder %s22, %s25
    %p34 = scmp.eq.s32.totalorder %s17, 1
    %p35 = por %p33, %p34
    %p36 = scmp.ne.s32.totalorder %s25, %s26
    %p37 = scmp.eq.s32.totalorder %s17, 0
    %p38 = por %p36, %p37
    %p39 = scmp.ne.s32.totalorder %s25, %s26
    %p40 = scmp.eq.s32.totalorder %s18, 1
    %p41 = por %p39, %p40
    %p43 = scmp.ne.s32.totalorder %s26, %s42
    %p44 = scmp.eq.s32.totalorder %s18, 0
    %p45 = por %p43, %p44
    %s47 = sadd.s32 %s46, 1
    %p50 = scmp.eq.s32.totalorder %s12, 1
    %p51 = scmp.ne.s32.totalorder %s46, %s48
    %p52 = scmp.eq.s32.totalorder %s12, 0
    %p53 = por %p51, %p52
    %p54 = scmp.ne.s32.totalorder %s46, %s48
    %p55 = scmp.eq.s32.totalorder %s17, 1
    %p56 = por %p54, %p55
    %p57 = scmp.ne.s32.totalorder %s48, %s49
    %p58 = scmp.eq.s32.totalorder %s17, 0
    %p59 = por %p57, %p58
    %p60 = scmp.ne.s32.totalorder %s48, %s49
    %p61 = scmp.eq.s32.totalorder %s18, 1
    %p62 = por %p60, %p61
    %p64 = scmp.ne.s32.totalorder %s49, %s63
    %p65 = scmp.eq.s32.totalorder %s18, 0
    %p66 = por %p64, %p65
    %s68 = sadd.s32 %s67, 1
    %p71 = scmp.eq.s32.totalorder %s12, 1
    %p72 = scmp.ne.s32.totalorder %s67, %s69
    %p73 = scmp.eq.s32.totalorder %s12, 0
    %p74 = por %p72, %p73
    %p75 = scmp.ne.s32.totalorder %s67, %s69
    %p76 = scmp.eq.s32.totalorder %s17, 1
    %p77 = por %p75, %p76
    %p78 = scmp.ne.s32.totalorder %s69, %s70
    %p79 = scmp.eq.s32.totalorder %s17, 0
    %p80 = por %p78, %p79
    %p81 = scmp.ne.s32.totalorder %s69, %s70
    %p82 = scmp.eq.s32.totalorder %s18, 1
    %p83 = por %p81, %p82
    %p85 = scmp.ne.s32.totalorder %s70, %s84
    %p86 = scmp.eq.s32.totalorder %s18, 0
    %p87 = por %p85, %p86
    %s89 = sadd.s32 %s88, 1
    %p92 = scmp.eq.s32.totalorder %s12, 1
    %p93 = scmp.ne.s32.totalorder %s88, %s90
    %p94 = scmp.eq.s32.totalorder %s12, 0
    %p95 = por %p93, %p94
    %p96 = scmp.ne.s32.totalorder %s88, %s90
    %p97 = scmp.eq.s32.totalorder %s17, 1
    %p98 = por %p96, %p97
    %p99 = scmp.ne.s32.totalorder %s90, %s91
    %p100 = scmp.eq.s32.totalorder %s17, 0
    %p101 = por %p99, %p100
    %p102 = scmp.ne.s32.totalorder %s90, %s91
    %p103 = scmp.eq.s32.totalorder %s18, 1
    %p104 = por %p102, %p103
    %p106 = scmp.ne.s32.totalorder %s91, %s105
    %p107 = scmp.eq.s32.totalorder %s18, 0
    %p108 = por %p106, %p107
    %s109 = ssub.s32 %s12, %s19
    %p110 = scmp.eq.s32.totalorder %s109, 0
    %s112 = sadd.s32 %s111, 1
    %s113 = scalar_select %p110, %s111, %s112
    %p116 = pneg %p110
    %p117 = scmp.eq.s32.totalorder %s12, 1
    %p118 = por %p116, %p117
    %p119 = scmp.ne.s32.totalorder %s111, %s114
    %p120 = scmp.eq.s32.totalorder %s12, 0
    %p121 = por %p119, %p120
    %p122 = scmp.ne.s32.totalorder %s111, %s114
    %p123 = scmp.eq.s32.totalorder %s17, 1
    %p124 = por %p122, %p123
    %p125 = scmp.ne.s32.totalorder %s114, %s115
    %p126 = scmp.eq.s32.totalorder %s17, 0
    %p127 = por %p125, %p126
    %p128 = scmp.ne.s32.totalorder %s114, %s115
    %p129 = scmp.eq.s32.totalorder %s18, 1
    %p130 = por %p128, %p129
    %p132 = scmp.ne.s32.totalorder %s115, %s131
    %p133 = scmp.eq.s32.totalorder %s18, 0
    %p134 = por %p132, %p133
    %s135 = ssub.s32 %s12, %s19
    %p136 = scmp.eq.s32.totalorder %s135, 0
    %s138 = sadd.s32 %s137, 1
    %s139 = scalar_select %p136, %s137, %s138
    %p142 = pneg %p136
    %p143 = scmp.eq.s32.totalorder %s12, 1
    %p144 = por %p142, %p143
    %p145 = scmp.ne.s32.totalorder %s137, %s140
    %p146 = scmp.eq.s32.totalorder %s12, 0
    %p147 = por %p145, %p146
    %p148 = scmp.ne.s32.totalorder %s137, %s140
    %p149 = scmp.eq.s32.totalorder %s17, 1
    %p150 = por %p148, %p149
    %p151 = scmp.ne.s32.totalorder %s140, %s141
    %p152 = scmp.eq.s32.totalorder %s17, 0
    %p153 = por %p151, %p152
    %p154 = scmp.ne.s32.totalorder %s140, %s141
    %p155 = scmp.eq.s32.totalorder %s18, 1
    %p156 = por %p154, %p155
    %p158 = scmp.ne.s32.totalorder %s141, %s157
    %p159 = scmp.eq.s32.totalorder %s18, 0
    %p160 = por %p158, %p159
    %p161 = scmp.le.s32.totalorder 1, %s12
    %p162 = scmp.lt.s32.totalorder %s12, 3
    %p163 = pnand %p161, %p162
    %p164 = pneg %p163
    // Predicated region
    $region9: #{_forward.9} parent=5 // pred_check
      _
    $region10: #{_forward.9} parent=5 // pred_check_branch
      %166 = sbr.rel (%p163) target = $region12
    $region11: #{_forward.9} parent=5 // pred_region
      %s167 = ssub.s32 %s12, 1
      // Predicated region
      $region13: #{_forward.9} parent=11 // pred_check
        %p168 = pneg %p59
      $region14: #{_forward.9} parent=11 // pred_check_branch
        %170 = sbr.rel (%p168) target = $region16
      $region15: #{_forward.9} parent=11 // pred_region
        _
      $region16: #{_forward.9} parent=11 // pred_fallthru
        _
      // Predicated region
      $region17: #{_forward.9} parent=11 // pred_check
        %p171 = pneg %p80
      $region18: #{_forward.9} parent=11 // pred_check_branch
        %173 = sbr.rel (%p171) target = $region20
      $region19: #{_forward.9} parent=11 // pred_region
        _
      $region20: #{_forward.9} parent=11 // pred_fallthru
        _
      // Predicated region
      $region21: #{_forward.9} parent=11 // pred_check
        %p174 = pneg %p101
      $region22: #{_forward.9} parent=11 // pred_check_branch
        %176 = sbr.rel (%p174) target = $region24
      $region23: #{_forward.9} parent=11 // pred_region
        _
      $region24: #{_forward.9} parent=11 // pred_fallthru
        _
    $region12: #{_forward.9} parent=5 // pred_fallthru
      _
    %p177 = scmp.lt.s32.totalorder %s12, 2
    // Predicated region
    $region25: #{_forward.9} parent=5 // pred_check
      %p178 = pneg %p177
    $region26: #{_forward.9} parent=5 // pred_check_branch
      %180 = sbr.rel (%p178) target = $region28
    $region27: #{_forward.9} parent=5 // pred_region
      // Predicated region
      $region29: #{_forward.9} parent=27 // pred_check
        %p181 = pneg %p32
      $region30: #{_forward.9} parent=27 // pred_check_branch
        %183 = sbr.rel (%p181) target = $region32
      $region31: #{_forward.9} parent=27 // pred_region
        %p184 = scmp.lt.s32.totalorder %s12, 1
        %s185 = scalar_select %p184, %s12, 1
        %s186 = smul.addr %s185, 32
        %s187 = smul.addr %s186, 8
        %s188 = scalar_lea.vmem %s0, %s187
      $region32: #{_forward.9} parent=27 // pred_fallthru
        _
    $region28: #{_forward.9} parent=5 // pred_fallthru
      _
    %p189 = scmp.le.s32.totalorder 1, %s12
    %p190 = scmp.lt.s32.totalorder %s12, 3
    %p191 = pnand %p189, %p190
    %p192 = pneg %p191
    // Predicated region
    $region33: #{_forward.9} parent=5 // pred_check
      _
    $region34: #{_forward.9} parent=5 // pred_check_branch
      %194 = sbr.rel (%p191) target = $region36
    $region35: #{_forward.9} parent=5 // pred_region
      %s195 = ssub.s32 %s12, 1
      %p196 = scmp.lt.s32.totalorder %s17, 1
      %s197 = scalar_select %p196, %s17, 1
      %s198 = smul.addr %s197, 32
      %s199 = smul.addr %s198, 8
      %s200 = scalar_lea.vmem %s0, %s199
      %p201 = pneg %p38
      %p202 = pneg %p35
      %p203 = pneg %p59
      %p204 = pneg %p56
      %p205 = pneg %p80
      %p206 = pneg %p77
      %p207 = pneg %p101
      %p208 = pneg %p98
      %p209 = pneg %p127
      %p210 = pneg %p124
      %p211 = scmp.lt.s32.totalorder %s17, 1
      %s212 = scalar_select %p211, %s17, 1
      %s213 = smul.addr %s212, 32
      %s214 = smul.addr %s213, 8
      %s215 = scalar_lea.vmem %s4, %s214
      %p216 = pneg %p153
      %p217 = pneg %p150
      %p218 = scmp.lt.s32.totalorder %s17, 1
      %s219 = scalar_select %p218, %s17, 1
      %s220 = smul.addr %s219, 2
      %s221 = scalar_lea.vmem %s5, %s220
      %p222 = scmp.lt.s32.totalorder %s17, 1
      %s223 = scalar_select %p222, %s17, 1
      %s224 = smul.addr %s223, 32
      %s225 = smul.addr %s224, 8
      %s226 = scalar_lea.vmem %s0, %s225
      %p227 = scmp.lt.s32.totalorder %s17, 1
      %s228 = scalar_select %p227, %s17, 1
      %s229 = smul.addr %s228, 32
      %s230 = smul.addr %s229, 8
      %s231 = scalar_lea.vmem %s4, %s230
      %p232 = scmp.lt.s32.totalorder %s17, 1
      %s233 = scalar_select %p232, %s17, 1
      %s234 = smul.addr %s233, 2
      %s235 = scalar_lea.vmem %s5, %s234
      %v236 = vld [vmem:[%s226] sm:$0xff]
      %v237 = vld [vmem:[%s226 + $0x8] sm:$0xff]
      %v238 = vld [vmem:[%s226 + $0x10] sm:$0xff]
      %v239 = vld [vmem:[%s226 + $0x18] sm:$0xff]
      %v240 = vld [vmem:[%s226 + $0x20] sm:$0xff]
      %v241 = vld [vmem:[%s226 + $0x28] sm:$0xff]
      %v242 = vld [vmem:[%s226 + $0x30] sm:$0xff]
      %v243 = vld [vmem:[%s226 + $0x38] sm:$0xff]
      %v244 = vld [vmem:[%s226 + $0x40] sm:$0xff]
      %v245 = vld [vmem:[%s226 + $0x48] sm:$0xff]
      %v246 = vld [vmem:[%s226 + $0x50] sm:$0xff]
      %v247 = vld [vmem:[%s226 + $0x58] sm:$0xff]
      %v248 = vld [vmem:[%s226 + $0x60] sm:$0xff]
      %v249 = vld [vmem:[%s226 + $0x68] sm:$0xff]
      %v250 = vld [vmem:[%s226 + $0x70] sm:$0xff]
      %v251 = vld [vmem:[%s226 + $0x78] sm:$0xff]
      %v252 = vld [vmem:[%s226 + $0x80] sm:$0xff]
      %v253 = vld [vmem:[%s226 + $0x88] sm:$0xff]
      %v254 = vld [vmem:[%s226 + $0x90] sm:$0xff]
      %v255 = vld [vmem:[%s226 + $0x98] sm:$0xff]
      %v256 = vld [vmem:[%s226 + $0xa0] sm:$0xff]
      %v257 = vld [vmem:[%s226 + $0xa8] sm:$0xff]
      %v258 = vld [vmem:[%s226 + $0xb0] sm:$0xff]
      %v259 = vld [vmem:[%s226 + $0xb8] sm:$0xff]
      %v260 = vld [vmem:[%s226 + $0xc0] sm:$0xff]
      %v261 = vld [vmem:[%s226 + $0xc8] sm:$0xff]
      %v262 = vld [vmem:[%s226 + $0xd0] sm:$0xff]
      %v263 = vld [vmem:[%s226 + $0xd8] sm:$0xff]
      %v264 = vld [vmem:[%s226 + $0xe0] sm:$0xff]
      %v265 = vld [vmem:[%s226 + $0xe8] sm:$0xff]
      %v266 = vld [vmem:[%s226 + $0xf0] sm:$0xff]
      %v267 = vld [vmem:[%s226 + $0xf8] sm:$0xff]
      %v268 = vld [vmem:[%s1] sm:$0x1]
      %v270 = vlaneseq
      %v271 = vshrl.u32 %v270, 7
      %v272 = vsub.s32 0, %v271
      %v273 = vrot.slane %v268, %v272
      %v275 = vmul.f32 %v236, %v273
      %v276 = vmul.f32 %v237, %v273
      %v277 = vmul.f32 %v238, %v273
      %v278 = vmul.f32 %v239, %v273
      %v279 = vmul.f32 %v240, %v273
      %v280 = vmul.f32 %v241, %v273
      %v281 = vmul.f32 %v242, %v273
      %v282 = vmul.f32 %v243, %v273
      %v283 = vmul.f32 %v244, %v273
      %v284 = vmul.f32 %v245, %v273
      %v285 = vmul.f32 %v246, %v273
      %v286 = vmul.f32 %v247, %v273
      %v287 = vmul.f32 %v248, %v273
      %v288 = vmul.f32 %v249, %v273
      %v289 = vmul.f32 %v250, %v273
      %v290 = vmul.f32 %v251, %v273
      %v291 = vmul.f32 %v252, %v273
      %v292 = vmul.f32 %v253, %v273
      %v293 = vmul.f32 %v254, %v273
      %v294 = vmul.f32 %v255, %v273
      %v295 = vmul.f32 %v256, %v273
      %v296 = vmul.f32 %v257, %v273
      %v297 = vmul.f32 %v258, %v273
      %v298 = vmul.f32 %v259, %v273
      %v299 = vmul.f32 %v260, %v273
      %v300 = vmul.f32 %v261, %v273
      %v301 = vmul.f32 %v262, %v273
      %v302 = vmul.f32 %v263, %v273
      %v303 = vmul.f32 %v264, %v273
      %v304 = vmul.f32 %v265, %v273
      %v305 = vmul.f32 %v266, %v273
      %v306 = vmul.f32 %v267, %v273
      %v307 = vld [vmem:[%s2] sm:$0x1]
      %v309 = vlaneseq
      %v310 = vshrl.u32 %v309, 7
      %v311 = vsub.s32 0, %v310
      %v312 = vrot.slane %v307, %v311
      %v314 = vadd.f32 %v275, %v312
      %v315 = vadd.f32 %v276, %v312
      %v316 = vadd.f32 %v277, %v312
      %v317 = vadd.f32 %v278, %v312
      %v318 = vadd.f32 %v279, %v312
      %v319 = vadd.f32 %v280, %v312
      %v320 = vadd.f32 %v281, %v312
      %v321 = vadd.f32 %v282, %v312
      %v322 = vadd.f32 %v283, %v312
      %v323 = vadd.f32 %v284, %v312
      %v324 = vadd.f32 %v285, %v312
      %v325 = vadd.f32 %v286, %v312
      %v326 = vadd.f32 %v287, %v312
      %v327 = vadd.f32 %v288, %v312
      %v328 = vadd.f32 %v289, %v312
      %v329 = vadd.f32 %v290, %v312
      %v330 = vadd.f32 %v291, %v312
      %v331 = vadd.f32 %v292, %v312
      %v332 = vadd.f32 %v293, %v312
      %v333 = vadd.f32 %v294, %v312
      %v334 = vadd.f32 %v295, %v312
      %v335 = vadd.f32 %v296, %v312
      %v336 = vadd.f32 %v297, %v312
      %v337 = vadd.f32 %v298, %v312
      %v338 = vadd.f32 %v299, %v312
      %v339 = vadd.f32 %v300, %v312
      %v340 = vadd.f32 %v301, %v312
      %v341 = vadd.f32 %v302, %v312
      %v342 = vadd.f32 %v303, %v312
      %v343 = vadd.f32 %v304, %v312
      %v344 = vadd.f32 %v305, %v312
      %v345 = vadd.f32 %v306, %v312
      %v346 = vmax.f32 %v314, 0.0
      %v347 = vmax.f32 %v315, 0.0
      %v348 = vmax.f32 %v316, 0.0
      %v349 = vmax.f32 %v317, 0.0
      %v350 = vmax.f32 %v318, 0.0
      %v351 = vmax.f32 %v319, 0.0
      %v352 = vmax.f32 %v320, 0.0
      %v353 = vmax.f32 %v321, 0.0
      %v354 = vmax.f32 %v322, 0.0
      %v355 = vmax.f32 %v323, 0.0
      %v356 = vmax.f32 %v324, 0.0
      %v357 = vmax.f32 %v325, 0.0
      %v358 = vmax.f32 %v326, 0.0
      %v359 = vmax.f32 %v327, 0.0
      %v360 = vmax.f32 %v328, 0.0
      %v361 = vmax.f32 %v329, 0.0
      %v362 = vmax.f32 %v330, 0.0
      %v363 = vmax.f32 %v331, 0.0
      %v364 = vmax.f32 %v332, 0.0
      %v365 = vmax.f32 %v333, 0.0
      %v366 = vmax.f32 %v334, 0.0
      %v367 = vmax.f32 %v335, 0.0
      %v368 = vmax.f32 %v336, 0.0
      %v369 = vmax.f32 %v337, 0.0
      %v370 = vmax.f32 %v338, 0.0
      %v371 = vmax.f32 %v339, 0.0
      %v372 = vmax.f32 %v340, 0.0
      %v373 = vmax.f32 %v341, 0.0
      %v374 = vmax.f32 %v342, 0.0
      %v375 = vmax.f32 %v343, 0.0
      %v376 = vmax.f32 %v344, 0.0
      %v377 = vmax.f32 %v345, 0.0
      %v378 = vld [vmem:[%s3] sm:$0x7]
      %v379 = vld [vmem:[%s3 + $0x4] sm:$0x7]
      %v380 = vld [vmem:[%s3 + $0x8] sm:$0x7]
      %v381 = vlaneseq
      %v382 = vshrl.u32 %v381, 7
      %v383 = vsub.s32 1, %v382
      %v384 = vrot.slane %v379, %v383
      %v385 = vmul.f32 %v346, %v384
      %v386 = vmul.f32 %v347, %v384
      %v387 = vmul.f32 %v348, %v384
      %v388 = vmul.f32 %v349, %v384
      %v389 = vmul.f32 %v350, %v384
      %v390 = vmul.f32 %v351, %v384
      %v391 = vmul.f32 %v352, %v384
      %v392 = vmul.f32 %v353, %v384
      %v393 = vmul.f32 %v354, %v384
      %v394 = vmul.f32 %v355, %v384
      %v395 = vmul.f32 %v356, %v384
      %v396 = vmul.f32 %v357, %v384
      %v397 = vmul.f32 %v358, %v384
      %v398 = vmul.f32 %v359, %v384
      %v399 = vmul.f32 %v360, %v384
      %v400 = vmul.f32 %v361, %v384
      %v401 = vmul.f32 %v362, %v384
      %v402 = vmul.f32 %v363, %v384
      %v403 = vmul.f32 %v364, %v384
      %v404 = vmul.f32 %v365, %v384
      %v405 = vmul.f32 %v366, %v384
      %v406 = vmul.f32 %v367, %v384
      %v407 = vmul.f32 %v368, %v384
      %v408 = vmul.f32 %v369, %v384
      %v409 = vmul.f32 %v370, %v384
      %v410 = vmul.f32 %v371, %v384
      %v411 = vmul.f32 %v372, %v384
      %v412 = vmul.f32 %v373, %v384
      %v413 = vmul.f32 %v374, %v384
      %v414 = vmul.f32 %v375, %v384
      %v415 = vmul.f32 %v376, %v384
      %v416 = vmul.f32 %v377, %v384
      %vm448 = vcmask 1040384
      %v449 = vrot.slane 0.0, 7
      %v450 = vsel %vm448, %v449, %v449
      %v451 = vrot.slane %v346, 7
      %v452 = vrot.slane %v347, 7
      %v453 = vsel %vm448, %v451, %v452
      %v454 = vrot.slane %v348, 7
      %v455 = vrot.slane %v349, 7
      %v456 = vsel %vm448, %v454, %v455
      %v457 = vrot.slane %v350, 7
      %v458 = vrot.slane %v351, 7
      %v459 = vsel %vm448, %v457, %v458
      %v460 = vrot.slane %v352, 7
      %v461 = vrot.slane %v353, 7
      %v462 = vsel %vm448, %v460, %v461
      %v463 = vrot.slane %v354, 7
      %v464 = vrot.slane %v355, 7
      %v465 = vsel %vm448, %v463, %v464
      %v466 = vrot.slane %v356, 7
      %v467 = vrot.slane %v357, 7
      %v468 = vsel %vm448, %v466, %v467
      %v469 = vrot.slane %v358, 7
      %v470 = vrot.slane %v359, 7
      %v471 = vsel %vm448, %v469, %v470
      %v472 = vrot.slane %v360, 7
      %v473 = vrot.slane %v361, 7
      %v474 = vsel %vm448, %v472, %v473
      %v475 = vrot.slane %v362, 7
      %v476 = vrot.slane %v363, 7
      %v477 = vsel %vm448, %v475, %v476
      %v478 = vrot.slane %v364, 7
      %v479 = vrot.slane %v365, 7
      %v480 = vsel %vm448, %v478, %v479
      %v481 = vrot.slane %v366, 7
      %v482 = vrot.slane %v367, 7
      %v483 = vsel %vm448, %v481, %v482
      %v484 = vrot.slane %v368, 7
      %v485 = vrot.slane %v369, 7
      %v486 = vsel %vm448, %v484, %v485
      %v487 = vrot.slane %v370, 7
      %v488 = vrot.slane %v371, 7
      %v489 = vsel %vm448, %v487, %v488
      %v490 = vrot.slane %v372, 7
      %v491 = vrot.slane %v373, 7
      %v492 = vsel %vm448, %v490, %v491
      %v493 = vrot.slane %v374, 7
      %v494 = vrot.slane %v375, 7
      %v495 = vsel %vm448, %v493, %v494
      %v528 = vsel %vm448, 0.0, %v449
      %v529 = vsel %vm448, 0.0, %v451
      %v530 = vsel %vm448, 0.0, %v454
      %v531 = vsel %vm448, 0.0, %v457
      %v532 = vsel %vm448, 0.0, %v460
      %v533 = vsel %vm448, 0.0, %v463
      %v534 = vsel %vm448, 0.0, %v466
      %v535 = vsel %vm448, 0.0, %v469
      %v536 = vsel %vm448, 0.0, %v472
      %v537 = vsel %vm448, 0.0, %v475
      %v538 = vsel %vm448, 0.0, %v478
      %v539 = vsel %vm448, 0.0, %v481
      %v540 = vsel %vm448, 0.0, %v484
      %v541 = vsel %vm448, 0.0, %v487
      %v542 = vsel %vm448, 0.0, %v490
      %v543 = vsel %vm448, 0.0, %v493
      %v544 = vlaneseq
      %v545 = vshrl.u32 %v544, 7
      %v546 = vsub.s32 0, %v545
      %v547 = vrot.slane %v378, %v546
      %v548 = vmul.f32 %v528, %v547
      %v549 = vmul.f32 %v450, %v547
      %v550 = vmul.f32 %v529, %v547
      %v551 = vmul.f32 %v453, %v547
      %v552 = vmul.f32 %v530, %v547
      %v553 = vmul.f32 %v456, %v547
      %v554 = vmul.f32 %v531, %v547
      %v555 = vmul.f32 %v459, %v547
      %v556 = vmul.f32 %v532, %v547
      %v557 = vmul.f32 %v462, %v547
      %v558 = vmul.f32 %v533, %v547
      %v559 = vmul.f32 %v465, %v547
      %v560 = vmul.f32 %v534, %v547
      %v561 = vmul.f32 %v468, %v547
      %v562 = vmul.f32 %v535, %v547
      %v563 = vmul.f32 %v471, %v547
      %v564 = vmul.f32 %v536, %v547
      %v565 = vmul.f32 %v474, %v547
      %v566 = vmul.f32 %v537, %v547
      %v567 = vmul.f32 %v477, %v547
      %v568 = vmul.f32 %v538, %v547
      %v569 = vmul.f32 %v480, %v547
      %v570 = vmul.f32 %v539, %v547
      %v571 = vmul.f32 %v483, %v547
      %v572 = vmul.f32 %v540, %v547
      %v573 = vmul.f32 %v486, %v547
      %v574 = vmul.f32 %v541, %v547
      %v575 = vmul.f32 %v489, %v547
      %v576 = vmul.f32 %v542, %v547
      %v577 = vmul.f32 %v492, %v547
      %v578 = vmul.f32 %v543, %v547
      %v579 = vmul.f32 %v495, %v547
      %v580 = vadd.f32 %v385, %v548
      %v581 = vadd.f32 %v386, %v549
      %v582 = vadd.f32 %v387, %v550
      %v583 = vadd.f32 %v388, %v551
      %v584 = vadd.f32 %v389, %v552
      %v585 = vadd.f32 %v390, %v553
      %v586 = vadd.f32 %v391, %v554
      %v587 = vadd.f32 %v392, %v555
      %v588 = vadd.f32 %v393, %v556
      %v589 = vadd.f32 %v394, %v557
      %v590 = vadd.f32 %v395, %v558
      %v591 = vadd.f32 %v396, %v559
      %v592 = vadd.f32 %v397, %v560
      %v593 = vadd.f32 %v398, %v561
      %v594 = vadd.f32 %v399, %v562
      %v595 = vadd.f32 %v400, %v563
      %v596 = vadd.f32 %v401, %v564
      %v597 = vadd.f32 %v402, %v565
      %v598 = vadd.f32 %v403, %v566
      %v599 = vadd.f32 %v404, %v567
      %v600 = vadd.f32 %v405, %v568
      %v601 = vadd.f32 %v406, %v569
      %v602 = vadd.f32 %v407, %v570
      %v603 = vadd.f32 %v408, %v571
      %v604 = vadd.f32 %v409, %v572
      %v605 = vadd.f32 %v410, %v573
      %v606 = vadd.f32 %v411, %v574
      %v607 = vadd.f32 %v412, %v575
      %v608 = vadd.f32 %v413, %v576
      %v609 = vadd.f32 %v414, %v577
      %v610 = vadd.f32 %v415, %v578
      %v611 = vadd.f32 %v416, %v579
      %v612 = vlaneseq
      %v613 = vshrl.u32 %v612, 7
      %v614 = vsub.s32 1, %v613
      %v615 = vrot.slane %v378, %v614
      %v616 = vmul.f32 %v615, 0.0
      %v617 = vmul.f32 %v346, %v615
      %v618 = vmul.f32 %v347, %v615
      %v619 = vmul.f32 %v348, %v615
      %v620 = vmul.f32 %v349, %v615
      %v621 = vmul.f32 %v350, %v615
      %v622 = vmul.f32 %v351, %v615
      %v623 = vmul.f32 %v352, %v615
      %v624 = vmul.f32 %v353, %v615
      %v625 = vmul.f32 %v354, %v615
      %v626 = vmul.f32 %v355, %v615
      %v627 = vmul.f32 %v356, %v615
      %v628 = vmul.f32 %v357, %v615
      %v629 = vmul.f32 %v358, %v615
      %v630 = vmul.f32 %v359, %v615
      %v631 = vmul.f32 %v360, %v615
      %v632 = vmul.f32 %v361, %v615
      %v633 = vmul.f32 %v362, %v615
      %v634 = vmul.f32 %v363, %v615
      %v635 = vmul.f32 %v364, %v615
      %v636 = vmul.f32 %v365, %v615
      %v637 = vmul.f32 %v366, %v615
      %v638 = vmul.f32 %v367, %v615
      %v639 = vmul.f32 %v368, %v615
      %v640 = vmul.f32 %v369, %v615
      %v641 = vmul.f32 %v370, %v615
      %v642 = vmul.f32 %v371, %v615
      %v643 = vmul.f32 %v372, %v615
      %v644 = vmul.f32 %v373, %v615
      %v645 = vmul.f32 %v374, %v615
      %v646 = vmul.f32 %v375, %v615
      %v647 = vadd.f32 %v580, %v616
      %v648 = vadd.f32 %v581, %v616
      %v649 = vadd.f32 %v582, %v617
      %v650 = vadd.f32 %v583, %v618
      %v651 = vadd.f32 %v584, %v619
      %v652 = vadd.f32 %v585, %v620
      %v653 = vadd.f32 %v586, %v621
      %v654 = vadd.f32 %v587, %v622
      %v655 = vadd.f32 %v588, %v623
      %v656 = vadd.f32 %v589, %v624
      %v657 = vadd.f32 %v590, %v625
      %v658 = vadd.f32 %v591, %v626
      %v659 = vadd.f32 %v592, %v627
      %v660 = vadd.f32 %v593, %v628
      %v661 = vadd.f32 %v594, %v629
      %v662 = vadd.f32 %v595, %v630
      %v663 = vadd.f32 %v596, %v631
      %v664 = vadd.f32 %v597, %v632
      %v665 = vadd.f32 %v598, %v633
      %v666 = vadd.f32 %v599, %v634
      %v667 = vadd.f32 %v600, %v635
      %v668 = vadd.f32 %v601, %v636
      %v669 = vadd.f32 %v602, %v637
      %v670 = vadd.f32 %v603, %v638
      %v671 = vadd.f32 %v604, %v639
      %v672 = vadd.f32 %v605, %v640
      %v673 = vadd.f32 %v606, %v641
      %v674 = vadd.f32 %v607, %v642
      %v675 = vadd.f32 %v608, %v643
      %v676 = vadd.f32 %v609, %v644
      %v677 = vadd.f32 %v610, %v645
      %v678 = vadd.f32 %v611, %v646
      %vm679 = vcmask 1046528
      %v680 = vrot.slane 0.0, 1
      %v681 = vsel %vm679, %v680, %v680
      %v682 = vrot.slane %v346, 1
      %v683 = vrot.slane %v347, 1
      %v684 = vsel %vm679, %v682, %v683
      %v685 = vrot.slane %v348, 1
      %v686 = vrot.slane %v349, 1
      %v687 = vsel %vm679, %v685, %v686
      %v688 = vrot.slane %v350, 1
      %v689 = vrot.slane %v351, 1
      %v690 = vsel %vm679, %v688, %v689
      %v691 = vrot.slane %v352, 1
      %v692 = vrot.slane %v353, 1
      %v693 = vsel %vm679, %v691, %v692
      %v694 = vrot.slane %v354, 1
      %v695 = vrot.slane %v355, 1
      %v696 = vsel %vm679, %v694, %v695
      %v697 = vrot.slane %v356, 1
      %v698 = vrot.slane %v357, 1
      %v699 = vsel %vm679, %v697, %v698
      %v700 = vrot.slane %v358, 1
      %v701 = vrot.slane %v359, 1
      %v702 = vsel %vm679, %v700, %v701
      %v703 = vrot.slane %v360, 1
      %v704 = vrot.slane %v361, 1
      %v705 = vsel %vm679, %v703, %v704
      %v706 = vrot.slane %v362, 1
      %v707 = vrot.slane %v363, 1
      %v708 = vsel %vm679, %v706, %v707
      %v709 = vrot.slane %v364, 1
      %v710 = vrot.slane %v365, 1
      %v711 = vsel %vm679, %v709, %v710
      %v712 = vrot.slane %v366, 1
      %v713 = vrot.slane %v367, 1
      %v714 = vsel %vm679, %v712, %v713
      %v715 = vrot.slane %v368, 1
      %v716 = vrot.slane %v369, 1
      %v717 = vsel %vm679, %v715, %v716
      %v718 = vrot.slane %v370, 1
      %v719 = vrot.slane %v371, 1
      %v720 = vsel %vm679, %v718, %v719
      %v721 = vrot.slane %v372, 1
      %v722 = vrot.slane %v373, 1
      %v723 = vsel %vm679, %v721, %v722
      %v724 = vrot.slane %v374, 1
      %v725 = vrot.slane %v375, 1
      %v726 = vsel %vm679, %v724, %v725
      %v759 = vsel %vm679, %v680, 0.0
      %v760 = vsel %vm679, %v683, 0.0
      %v761 = vsel %vm679, %v686, 0.0
      %v762 = vsel %vm679, %v689, 0.0
      %v763 = vsel %vm679, %v692, 0.0
      %v764 = vsel %vm679, %v695, 0.0
      %v765 = vsel %vm679, %v698, 0.0
      %v766 = vsel %vm679, %v701, 0.0
      %v767 = vsel %vm679, %v704, 0.0
      %v768 = vsel %vm679, %v707, 0.0
      %v769 = vsel %vm679, %v710, 0.0
      %v770 = vsel %vm679, %v713, 0.0
      %v771 = vsel %vm679, %v716, 0.0
      %v772 = vsel %vm679, %v719, 0.0
      %v773 = vsel %vm679, %v722, 0.0
      %v774 = vsel %vm679, %v725, 0.0
      %v775 = vlaneseq
      %v776 = vshrl.u32 %v775, 7
      %v777 = vsub.s32 2, %v776
      %v778 = vrot.slane %v378, %v777
      %v779 = vmul.f32 %v681, %v778
      %v780 = vmul.f32 %v759, %v778
      %v781 = vmul.f32 %v684, %v778
      %v782 = vmul.f32 %v760, %v778
      %v783 = vmul.f32 %v687, %v778
      %v784 = vmul.f32 %v761, %v778
      %v785 = vmul.f32 %v690, %v778
      %v786 = vmul.f32 %v762, %v778
      %v787 = vmul.f32 %v693, %v778
      %v788 = vmul.f32 %v763, %v778
      %v789 = vmul.f32 %v696, %v778
      %v790 = vmul.f32 %v764, %v778
      %v791 = vmul.f32 %v699, %v778
      %v792 = vmul.f32 %v765, %v778
      %v793 = vmul.f32 %v702, %v778
      %v794 = vmul.f32 %v766, %v778
      %v795 = vmul.f32 %v705, %v778
      %v796 = vmul.f32 %v767, %v778
      %v797 = vmul.f32 %v708, %v778
      %v798 = vmul.f32 %v768, %v778
      %v799 = vmul.f32 %v711, %v778
      %v800 = vmul.f32 %v769, %v778
      %v801 = vmul.f32 %v714, %v778
      %v802 = vmul.f32 %v770, %v778
      %v803 = vmul.f32 %v717, %v778
      %v804 = vmul.f32 %v771, %v778
      %v805 = vmul.f32 %v720, %v778
      %v806 = vmul.f32 %v772, %v778
      %v807 = vmul.f32 %v723, %v778
      %v808 = vmul.f32 %v773, %v778
      %v809 = vmul.f32 %v726, %v778
      %v810 = vmul.f32 %v774, %v778
      %v811 = vadd.f32 %v647, %v779
      %v812 = vadd.f32 %v648, %v780
      %v813 = vadd.f32 %v649, %v781
      %v814 = vadd.f32 %v650, %v782
      %v815 = vadd.f32 %v651, %v783
      %v816 = vadd.f32 %v652, %v784
      %v817 = vadd.f32 %v653, %v785
      %v818 = vadd.f32 %v654, %v786
      %v819 = vadd.f32 %v655, %v787
      %v820 = vadd.f32 %v656, %v788
      %v821 = vadd.f32 %v657, %v789
      %v822 = vadd.f32 %v658, %v790
      %v823 = vadd.f32 %v659, %v791
      %v824 = vadd.f32 %v660, %v792
      %v825 = vadd.f32 %v661, %v793
      %v826 = vadd.f32 %v662, %v794
      %v827 = vadd.f32 %v663, %v795
      %v828 = vadd.f32 %v664, %v796
      %v829 = vadd.f32 %v665, %v797
      %v830 = vadd.f32 %v666, %v798
      %v831 = vadd.f32 %v667, %v799
      %v832 = vadd.f32 %v668, %v800
      %v833 = vadd.f32 %v669, %v801
      %v834 = vadd.f32 %v670, %v802
      %v835 = vadd.f32 %v671, %v803
      %v836 = vadd.f32 %v672, %v804
      %v837 = vadd.f32 %v673, %v805
      %v838 = vadd.f32 %v674, %v806
      %v839 = vadd.f32 %v675, %v807
      %v840 = vadd.f32 %v676, %v808
      %v841 = vadd.f32 %v677, %v809
      %v842 = vadd.f32 %v678, %v810
      %v845 = vrot.slane %v376, 7
      %v846 = vrot.slane %v377, 7
      %v847 = vsel %vm448, %v845, %v846
      %v850 = vsel %vm448, 0.0, %v845
      %v851 = vlaneseq
      %v852 = vshrl.u32 %v851, 7
      %v853 = vsub.s32 0, %v852
      %v854 = vrot.slane %v379, %v853
      %v855 = vmul.f32 %v529, %v854
      %v856 = vmul.f32 %v453, %v854
      %v857 = vmul.f32 %v530, %v854
      %v858 = vmul.f32 %v456, %v854
      %v859 = vmul.f32 %v531, %v854
      %v860 = vmul.f32 %v459, %v854
      %v861 = vmul.f32 %v532, %v854
      %v862 = vmul.f32 %v462, %v854
      %v863 = vmul.f32 %v533, %v854
      %v864 = vmul.f32 %v465, %v854
      %v865 = vmul.f32 %v534, %v854
      %v866 = vmul.f32 %v468, %v854
      %v867 = vmul.f32 %v535, %v854
      %v868 = vmul.f32 %v471, %v854
      %v869 = vmul.f32 %v536, %v854
      %v870 = vmul.f32 %v474, %v854
      %v871 = vmul.f32 %v537, %v854
      %v872 = vmul.f32 %v477, %v854
      %v873 = vmul.f32 %v538, %v854
      %v874 = vmul.f32 %v480, %v854
      %v875 = vmul.f32 %v539, %v854
      %v876 = vmul.f32 %v483, %v854
      %v877 = vmul.f32 %v540, %v854
      %v878 = vmul.f32 %v486, %v854
      %v879 = vmul.f32 %v541, %v854
      %v880 = vmul.f32 %v489, %v854
      %v881 = vmul.f32 %v542, %v854
      %v882 = vmul.f32 %v492, %v854
      %v883 = vmul.f32 %v543, %v854
      %v884 = vmul.f32 %v495, %v854
      %v885 = vmul.f32 %v850, %v854
      %v886 = vmul.f32 %v847, %v854
      %v887 = vadd.f32 %v811, %v855
      %v888 = vadd.f32 %v812, %v856
      %v889 = vadd.f32 %v813, %v857
      %v890 = vadd.f32 %v814, %v858
      %v891 = vadd.f32 %v815, %v859
      %v892 = vadd.f32 %v816, %v860
      %v893 = vadd.f32 %v817, %v861
      %v894 = vadd.f32 %v818, %v862
      %v895 = vadd.f32 %v819, %v863
      %v896 = vadd.f32 %v820, %v864
      %v897 = vadd.f32 %v821, %v865
      %v898 = vadd.f32 %v822, %v866
      %v899 = vadd.f32 %v823, %v867
      %v900 = vadd.f32 %v824, %v868
      %v901 = vadd.f32 %v825, %v869
      %v902 = vadd.f32 %v826, %v870
      %v903 = vadd.f32 %v827, %v871
      %v904 = vadd.f32 %v828, %v872
      %v905 = vadd.f32 %v829, %v873
      %v906 = vadd.f32 %v830, %v874
      %v907 = vadd.f32 %v831, %v875
      %v908 = vadd.f32 %v832, %v876
      %v909 = vadd.f32 %v833, %v877
      %v910 = vadd.f32 %v834, %v878
      %v911 = vadd.f32 %v835, %v879
      %v912 = vadd.f32 %v836, %v880
      %v913 = vadd.f32 %v837, %v881
      %v914 = vadd.f32 %v838, %v882
      %v915 = vadd.f32 %v839, %v883
      %v916 = vadd.f32 %v840, %v884
      %v917 = vadd.f32 %v841, %v885
      %v918 = vadd.f32 %v842, %v886
      %v919 = vrot.slane %v376, 1
      %v920 = vrot.slane %v377, 1
      %v921 = vsel %vm679, %v919, %v920
      %v924 = vsel %vm679, %v920, 0.0
      %v925 = vlaneseq
      %v926 = vshrl.u32 %v925, 7
      %v927 = vsub.s32 2, %v926
      %v928 = vrot.slane %v379, %v927
      %v929 = vmul.f32 %v684, %v928
      %v930 = vmul.f32 %v760, %v928
      %v931 = vmul.f32 %v687, %v928
      %v932 = vmul.f32 %v761, %v928
      %v933 = vmul.f32 %v690, %v928
      %v934 = vmul.f32 %v762, %v928
      %v935 = vmul.f32 %v693, %v928
      %v936 = vmul.f32 %v763, %v928
      %v937 = vmul.f32 %v696, %v928
      %v938 = vmul.f32 %v764, %v928
      %v939 = vmul.f32 %v699, %v928
      %v940 = vmul.f32 %v765, %v928
      %v941 = vmul.f32 %v702, %v928
      %v942 = vmul.f32 %v766, %v928
      %v943 = vmul.f32 %v705, %v928
      %v944 = vmul.f32 %v767, %v928
      %v945 = vmul.f32 %v708, %v928
      %v946 = vmul.f32 %v768, %v928
      %v947 = vmul.f32 %v711, %v928
      %v948 = vmul.f32 %v769, %v928
      %v949 = vmul.f32 %v714, %v928
      %v950 = vmul.f32 %v770, %v928
      %v951 = vmul.f32 %v717, %v928
      %v952 = vmul.f32 %v771, %v928
      %v953 = vmul.f32 %v720, %v928
      %v954 = vmul.f32 %v772, %v928
      %v955 = vmul.f32 %v723, %v928
      %v956 = vmul.f32 %v773, %v928
      %v957 = vmul.f32 %v726, %v928
      %v958 = vmul.f32 %v774, %v928
      %v959 = vmul.f32 %v921, %v928
      %v960 = vmul.f32 %v924, %v928
      %v961 = vadd.f32 %v887, %v929
      %v962 = vadd.f32 %v888, %v930
      %v963 = vadd.f32 %v889, %v931
      %v964 = vadd.f32 %v890, %v932
      %v965 = vadd.f32 %v891, %v933
      %v966 = vadd.f32 %v892, %v934
      %v967 = vadd.f32 %v893, %v935
      %v968 = vadd.f32 %v894, %v936
      %v969 = vadd.f32 %v895, %v937
      %v970 = vadd.f32 %v896, %v938
      %v971 = vadd.f32 %v897, %v939
      %v972 = vadd.f32 %v898, %v940
      %v973 = vadd.f32 %v899, %v941
      %v974 = vadd.f32 %v900, %v942
      %v975 = vadd.f32 %v901, %v943
      %v976 = vadd.f32 %v902, %v944
      %v977 = vadd.f32 %v903, %v945
      %v978 = vadd.f32 %v904, %v946
      %v979 = vadd.f32 %v905, %v947
      %v980 = vadd.f32 %v906, %v948
      %v981 = vadd.f32 %v907, %v949
      %v982 = vadd.f32 %v908, %v950
      %v983 = vadd.f32 %v909, %v951
      %v984 = vadd.f32 %v910, %v952
      %v985 = vadd.f32 %v911, %v953
      %v986 = vadd.f32 %v912, %v954
      %v987 = vadd.f32 %v913, %v955
      %v988 = vadd.f32 %v914, %v956
      %v989 = vadd.f32 %v915, %v957
      %v990 = vadd.f32 %v916, %v958
      %v991 = vadd.f32 %v917, %v959
      %v992 = vadd.f32 %v918, %v960
      %v993 = vlaneseq
      %v994 = vshrl.u32 %v993, 7
      %v995 = vsub.s32 0, %v994
      %v996 = vrot.slane %v380, %v995
      %v997 = vmul.f32 %v530, %v996
      %v998 = vmul.f32 %v456, %v996
      %v999 = vmul.f32 %v531, %v996
      %v1000 = vmul.f32 %v459, %v996
      %v1001 = vmul.f32 %v532, %v996
      %v1002 = vmul.f32 %v462, %v996
      %v1003 = vmul.f32 %v533, %v996
      %v1004 = vmul.f32 %v465, %v996
      %v1005 = vmul.f32 %v534, %v996
      %v1006 = vmul.f32 %v468, %v996
      %v1007 = vmul.f32 %v535, %v996
      %v1008 = vmul.f32 %v471, %v996
      %v1009 = vmul.f32 %v536, %v996
      %v1010 = vmul.f32 %v474, %v996
      %v1011 = vmul.f32 %v537, %v996
      %v1012 = vmul.f32 %v477, %v996
      %v1013 = vmul.f32 %v538, %v996
      %v1014 = vmul.f32 %v480, %v996
      %v1015 = vmul.f32 %v539, %v996
      %v1016 = vmul.f32 %v483, %v996
      %v1017 = vmul.f32 %v540, %v996
      %v1018 = vmul.f32 %v486, %v996
      %v1019 = vmul.f32 %v541, %v996
      %v1020 = vmul.f32 %v489, %v996
      %v1021 = vmul.f32 %v542, %v996
      %v1022 = vmul.f32 %v492, %v996
      %v1023 = vmul.f32 %v543, %v996
      %v1024 = vmul.f32 %v495, %v996
      %v1025 = vmul.f32 %v850, %v996
      %v1026 = vmul.f32 %v847, %v996
      %v1027 = vmul.f32 %v528, %v996
      %v1028 = vmul.f32 %v450, %v996
      %v1029 = vadd.f32 %v961, %v997
      %v1030 = vadd.f32 %v962, %v998
      %v1031 = vadd.f32 %v963, %v999
      %v1032 = vadd.f32 %v964, %v1000
      %v1033 = vadd.f32 %v965, %v1001
      %v1034 = vadd.f32 %v966, %v1002
      %v1035 = vadd.f32 %v967, %v1003
      %v1036 = vadd.f32 %v968, %v1004
      %v1037 = vadd.f32 %v969, %v1005
      %v1038 = vadd.f32 %v970, %v1006
      %v1039 = vadd.f32 %v971, %v1007
      %v1040 = vadd.f32 %v972, %v1008
      %v1041 = vadd.f32 %v973, %v1009
      %v1042 = vadd.f32 %v974, %v1010
      %v1043 = vadd.f32 %v975, %v1011
      %v1044 = vadd.f32 %v976, %v1012
      %v1045 = vadd.f32 %v977, %v1013
      %v1046 = vadd.f32 %v978, %v1014
      %v1047 = vadd.f32 %v979, %v1015
      %v1048 = vadd.f32 %v980, %v1016
      %v1049 = vadd.f32 %v981, %v1017
      %v1050 = vadd.f32 %v982, %v1018
      %v1051 = vadd.f32 %v983, %v1019
      %v1052 = vadd.f32 %v984, %v1020
      %v1053 = vadd.f32 %v985, %v1021
      %v1054 = vadd.f32 %v986, %v1022
      %v1055 = vadd.f32 %v987, %v1023
      %v1056 = vadd.f32 %v988, %v1024
      %v1057 = vadd.f32 %v989, %v1025
      %v1058 = vadd.f32 %v990, %v1026
      %v1059 = vadd.f32 %v991, %v1027
      %v1060 = vadd.f32 %v992, %v1028
      %v1061 = vlaneseq
      %v1062 = vshrl.u32 %v1061, 7
      %v1063 = vsub.s32 1, %v1062
      %v1064 = vrot.slane %v380, %v1063
      %v1065 = vmul.f32 %v348, %v1064
      %v1066 = vmul.f32 %v349, %v1064
      %v1067 = vmul.f32 %v350, %v1064
      %v1068 = vmul.f32 %v351, %v1064
      %v1069 = vmul.f32 %v352, %v1064
      %v1070 = vmul.f32 %v353, %v1064
      %v1071 = vmul.f32 %v354, %v1064
      %v1072 = vmul.f32 %v355, %v1064
      %v1073 = vmul.f32 %v356, %v1064
      %v1074 = vmul.f32 %v357, %v1064
      %v1075 = vmul.f32 %v358, %v1064
      %v1076 = vmul.f32 %v359, %v1064
      %v1077 = vmul.f32 %v360, %v1064
      %v1078 = vmul.f32 %v361, %v1064
      %v1079 = vmul.f32 %v362, %v1064
      %v1080 = vmul.f32 %v363, %v1064
      %v1081 = vmul.f32 %v364, %v1064
      %v1082 = vmul.f32 %v365, %v1064
      %v1083 = vmul.f32 %v366, %v1064
      %v1084 = vmul.f32 %v367, %v1064
      %v1085 = vmul.f32 %v368, %v1064
      %v1086 = vmul.f32 %v369, %v1064
      %v1087 = vmul.f32 %v370, %v1064
      %v1088 = vmul.f32 %v371, %v1064
      %v1089 = vmul.f32 %v372, %v1064
      %v1090 = vmul.f32 %v373, %v1064
      %v1091 = vmul.f32 %v374, %v1064
      %v1092 = vmul.f32 %v375, %v1064
      %v1093 = vmul.f32 %v376, %v1064
      %v1094 = vmul.f32 %v377, %v1064
      %v1095 = vmul.f32 %v1064, 0.0
      %v1096 = vadd.f32 %v1029, %v1065
      %v1097 = vadd.f32 %v1030, %v1066
      %v1098 = vadd.f32 %v1031, %v1067
      %v1099 = vadd.f32 %v1032, %v1068
      %v1100 = vadd.f32 %v1033, %v1069
      %v1101 = vadd.f32 %v1034, %v1070
      %v1102 = vadd.f32 %v1035, %v1071
      %v1103 = vadd.f32 %v1036, %v1072
      %v1104 = vadd.f32 %v1037, %v1073
      %v1105 = vadd.f32 %v1038, %v1074
      %v1106 = vadd.f32 %v1039, %v1075
      %v1107 = vadd.f32 %v1040, %v1076
      %v1108 = vadd.f32 %v1041, %v1077
      %v1109 = vadd.f32 %v1042, %v1078
      %v1110 = vadd.f32 %v1043, %v1079
      %v1111 = vadd.f32 %v1044, %v1080
      %v1112 = vadd.f32 %v1045, %v1081
      %v1113 = vadd.f32 %v1046, %v1082
      %v1114 = vadd.f32 %v1047, %v1083
      %v1115 = vadd.f32 %v1048, %v1084
      %v1116 = vadd.f32 %v1049, %v1085
      %v1117 = vadd.f32 %v1050, %v1086
      %v1118 = vadd.f32 %v1051, %v1087
      %v1119 = vadd.f32 %v1052, %v1088
      %v1120 = vadd.f32 %v1053, %v1089
      %v1121 = vadd.f32 %v1054, %v1090
      %v1122 = vadd.f32 %v1055, %v1091
      %v1123 = vadd.f32 %v1056, %v1092
      %v1124 = vadd.f32 %v1057, %v1093
      %v1125 = vadd.f32 %v1058, %v1094
      %v1126 = vadd.f32 %v1059, %v1095
      %v1127 = vadd.f32 %v1060, %v1095
      %v1128 = vlaneseq
      %v1129 = vshrl.u32 %v1128, 7
      %v1130 = vsub.s32 2, %v1129
      %v1131 = vrot.slane %v380, %v1130
      %v1132 = vmul.f32 %v687, %v1131
      %v1133 = vmul.f32 %v761, %v1131
      %v1134 = vmul.f32 %v690, %v1131
      %v1135 = vmul.f32 %v762, %v1131
      %v1136 = vmul.f32 %v693, %v1131
      %v1137 = vmul.f32 %v763, %v1131
      %v1138 = vmul.f32 %v696, %v1131
      %v1139 = vmul.f32 %v764, %v1131
      %v1140 = vmul.f32 %v699, %v1131
      %v1141 = vmul.f32 %v765, %v1131
      %v1142 = vmul.f32 %v702, %v1131
      %v1143 = vmul.f32 %v766, %v1131
      %v1144 = vmul.f32 %v705, %v1131
      %v1145 = vmul.f32 %v767, %v1131
      %v1146 = vmul.f32 %v708, %v1131
      %v1147 = vmul.f32 %v768, %v1131
      %v1148 = vmul.f32 %v711, %v1131
      %v1149 = vmul.f32 %v769, %v1131
      %v1150 = vmul.f32 %v714, %v1131
      %v1151 = vmul.f32 %v770, %v1131
      %v1152 = vmul.f32 %v717, %v1131
      %v1153 = vmul.f32 %v771, %v1131
      %v1154 = vmul.f32 %v720, %v1131
      %v1155 = vmul.f32 %v772, %v1131
      %v1156 = vmul.f32 %v723, %v1131
      %v1157 = vmul.f32 %v773, %v1131
      %v1158 = vmul.f32 %v726, %v1131
      %v1159 = vmul.f32 %v774, %v1131
      %v1160 = vmul.f32 %v921, %v1131
      %v1161 = vmul.f32 %v924, %v1131
      %v1162 = vmul.f32 %v681, %v1131
      %v1163 = vmul.f32 %v759, %v1131
      %v1164 = vadd.f32 %v1096, %v1132
      %v1165 = vadd.f32 %v1097, %v1133
      %v1166 = vadd.f32 %v1098, %v1134
      %v1167 = vadd.f32 %v1099, %v1135
      %v1168 = vadd.f32 %v1100, %v1136
      %v1169 = vadd.f32 %v1101, %v1137
      %v1170 = vadd.f32 %v1102, %v1138
      %v1171 = vadd.f32 %v1103, %v1139
      %v1172 = vadd.f32 %v1104, %v1140
      %v1173 = vadd.f32 %v1105, %v1141
      %v1174 = vadd.f32 %v1106, %v1142
      %v1175 = vadd.f32 %v1107, %v1143
      %v1176 = vadd.f32 %v1108, %v1144
      %v1177 = vadd.f32 %v1109, %v1145
      %v1178 = vadd.f32 %v1110, %v1146
      %v1179 = vadd.f32 %v1111, %v1147
      %v1180 = vadd.f32 %v1112, %v1148
      %v1181 = vadd.f32 %v1113, %v1149
      %v1182 = vadd.f32 %v1114, %v1150
      %v1183 = vadd.f32 %v1115, %v1151
      %v1184 = vadd.f32 %v1116, %v1152
      %v1185 = vadd.f32 %v1117, %v1153
      %v1186 = vadd.f32 %v1118, %v1154
      %v1187 = vadd.f32 %v1119, %v1155
      %v1188 = vadd.f32 %v1120, %v1156
      %v1189 = vadd.f32 %v1121, %v1157
      %v1190 = vadd.f32 %v1122, %v1158
      %v1191 = vadd.f32 %v1123, %v1159
      %v1192 = vadd.f32 %v1124, %v1160
      %v1193 = vadd.f32 %v1125, %v1161
      %v1194 = vadd.f32 %v1126, %v1162
      %v1195 = vadd.f32 %v1127, %v1163
      %vm1196 = vcmask 64512
      %1197 = vst.msk [vmem:[%s231] sm:$0xff] %vm1196, %v1164
      %1198 = vst.msk [vmem:[%s231 + $0x8] sm:$0xff] %vm1196, %v1165
      %1199 = vst.msk [vmem:[%s231 + $0x10] sm:$0xff] %vm1196, %v1166
      %1200 = vst.msk [vmem:[%s231 + $0x18] sm:$0xff] %vm1196, %v1167
      %1201 = vst.msk [vmem:[%s231 + $0x20] sm:$0xff] %vm1196, %v1168
      %1202 = vst.msk [vmem:[%s231 + $0x28] sm:$0xff] %vm1196, %v1169
      %1203 = vst.msk [vmem:[%s231 + $0x30] sm:$0xff] %vm1196, %v1170
      %1204 = vst.msk [vmem:[%s231 + $0x38] sm:$0xff] %vm1196, %v1171
      %1205 = vst.msk [vmem:[%s231 + $0x40] sm:$0xff] %vm1196, %v1172
      %1206 = vst.msk [vmem:[%s231 + $0x48] sm:$0xff] %vm1196, %v1173
      %1207 = vst.msk [vmem:[%s231 + $0x50] sm:$0xff] %vm1196, %v1174
      %1208 = vst.msk [vmem:[%s231 + $0x58] sm:$0xff] %vm1196, %v1175
      %1209 = vst.msk [vmem:[%s231 + $0x60] sm:$0xff] %vm1196, %v1176
      %1210 = vst.msk [vmem:[%s231 + $0x68] sm:$0xff] %vm1196, %v1177
      %1211 = vst.msk [vmem:[%s231 + $0x70] sm:$0xff] %vm1196, %v1178
      %1212 = vst.msk [vmem:[%s231 + $0x78] sm:$0xff] %vm1196, %v1179
      %1213 = vst.msk [vmem:[%s231 + $0x80] sm:$0xff] %vm1196, %v1180
      %1214 = vst.msk [vmem:[%s231 + $0x88] sm:$0xff] %vm1196, %v1181
      %1215 = vst.msk [vmem:[%s231 + $0x90] sm:$0xff] %vm1196, %v1182
      %1216 = vst.msk [vmem:[%s231 + $0x98] sm:$0xff] %vm1196, %v1183
      %1217 = vst.msk [vmem:[%s231 + $0xa0] sm:$0xff] %vm1196, %v1184
      %1218 = vst.msk [vmem:[%s231 + $0xa8] sm:$0xff] %vm1196, %v1185
      %1219 = vst.msk [vmem:[%s231 + $0xb0] sm:$0xff] %vm1196, %v1186
      %1220 = vst.msk [vmem:[%s231 + $0xb8] sm:$0xff] %vm1196, %v1187
      %1221 = vst.msk [vmem:[%s231 + $0xc0] sm:$0xff] %vm1196, %v1188
      %1222 = vst.msk [vmem:[%s231 + $0xc8] sm:$0xff] %vm1196, %v1189
      %1223 = vst.msk [vmem:[%s231 + $0xd0] sm:$0xff] %vm1196, %v1190
      %1224 = vst.msk [vmem:[%s231 + $0xd8] sm:$0xff] %vm1196, %v1191
      %1225 = vst.msk [vmem:[%s231 + $0xe0] sm:$0xff] %vm1196, %v1192
      %1226 = vst.msk [vmem:[%s231 + $0xe8] sm:$0xff] %vm1196, %v1193
      %1227 = vst.msk [vmem:[%s231 + $0xf0] sm:$0xff] %vm1196, %v1194
      %1228 = vst.msk [vmem:[%s231 + $0xf8] sm:$0xff] %vm1196, %v1195
      %v1229 = vsel %vm1196, %v1164, 0.0
      %v1230 = vsel %vm1196, %v1165, 0.0
      %v1231 = vadd.f32 %v1229, %v1230
      %v1232 = vsel %vm1196, %v1166, 0.0
      %v1233 = vadd.f32 %v1231, %v1232
      %v1234 = vsel %vm1196, %v1167, 0.0
      %v1235 = vadd.f32 %v1233, %v1234
      %v1236 = vsel %vm1196, %v1168, 0.0
      %v1237 = vadd.f32 %v1235, %v1236
      %v1238 = vsel %vm1196, %v1169, 0.0
      %v1239 = vadd.f32 %v1237, %v1238
      %v1240 = vsel %vm1196, %v1170, 0.0
      %v1241 = vadd.f32 %v1239, %v1240
      %v1242 = vsel %vm1196, %v1171, 0.0
      %v1243 = vadd.f32 %v1241, %v1242
      %v1244 = vsel %vm1196, %v1172, 0.0
      %v1245 = vadd.f32 %v1243, %v1244
      %v1246 = vsel %vm1196, %v1173, 0.0
      %v1247 = vadd.f32 %v1245, %v1246
      %v1248 = vsel %vm1196, %v1174, 0.0
      %v1249 = vadd.f32 %v1247, %v1248
      %v1250 = vsel %vm1196, %v1175, 0.0
      %v1251 = vadd.f32 %v1249, %v1250
      %v1252 = vsel %vm1196, %v1176, 0.0
      %v1253 = vadd.f32 %v1251, %v1252
      %v1254 = vsel %vm1196, %v1177, 0.0
      %v1255 = vadd.f32 %v1253, %v1254
      %v1256 = vsel %vm1196, %v1178, 0.0
      %v1257 = vadd.f32 %v1255, %v1256
      %v1258 = vsel %vm1196, %v1179, 0.0
      %v1259 = vadd.f32 %v1257, %v1258
      %v1260 = vsel %vm1196, %v1180, 0.0
      %v1261 = vadd.f32 %v1259, %v1260
      %v1262 = vsel %vm1196, %v1181, 0.0
      %v1263 = vadd.f32 %v1261, %v1262
      %v1264 = vsel %vm1196, %v1182, 0.0
      %v1265 = vadd.f32 %v1263, %v1264
      %v1266 = vsel %vm1196, %v1183, 0.0
      %v1267 = vadd.f32 %v1265, %v1266
      %v1268 = vsel %vm1196, %v1184, 0.0
      %v1269 = vadd.f32 %v1267, %v1268
      %v1270 = vsel %vm1196, %v1185, 0.0
      %v1271 = vadd.f32 %v1269, %v1270
      %v1272 = vsel %vm1196, %v1186, 0.0
      %v1273 = vadd.f32 %v1271, %v1272
      %v1274 = vsel %vm1196, %v1187, 0.0
      %v1275 = vadd.f32 %v1273, %v1274
      %v1276 = vsel %vm1196, %v1188, 0.0
      %v1277 = vadd.f32 %v1275, %v1276
      %v1278 = vsel %vm1196, %v1189, 0.0
      %v1279 = vadd.f32 %v1277, %v1278
      %v1280 = vsel %vm1196, %v1190, 0.0
      %v1281 = vadd.f32 %v1279, %v1280
      %v1282 = vsel %vm1196, %v1191, 0.0
      %v1283 = vadd.f32 %v1281, %v1282
      %v1284 = vsel %vm1196, %v1192, 0.0
      %v1285 = vadd.f32 %v1283, %v1284
      %v1286 = vsel %vm1196, %v1193, 0.0
      %v1287 = vadd.f32 %v1285, %v1286
      %v1288 = vsel %vm1196, %v1194, 0.0
      %v1289 = vadd.f32 %v1287, %v1288
      %v1290 = vsel %vm1196, %v1195, 0.0
      %v1291 = vadd.f32 %v1289, %v1290
      %v1292 = vrot.slane %v1291, 4
      %v1293 = vadd.f32 %v1291, %v1292
      %v1294 = vrot.slane %v1293, 2
      %v1295 = vadd.f32 %v1293, %v1294
      %v1296 = vrot.slane %v1295, 1
      %v1297 = vadd.f32 %v1295, %v1296
      %v1298 = vmul.f32 %v1164, %v1164
      %v1299 = vmul.f32 %v1165, %v1165
      %v1300 = vmul.f32 %v1166, %v1166
      %v1301 = vmul.f32 %v1167, %v1167
      %v1302 = vmul.f32 %v1168, %v1168
      %v1303 = vmul.f32 %v1169, %v1169
      %v1304 = vmul.f32 %v1170, %v1170
      %v1305 = vmul.f32 %v1171, %v1171
      %v1306 = vmul.f32 %v1172, %v1172
      %v1307 = vmul.f32 %v1173, %v1173
      %v1308 = vmul.f32 %v1174, %v1174
      %v1309 = vmul.f32 %v1175, %v1175
      %v1310 = vmul.f32 %v1176, %v1176
      %v1311 = vmul.f32 %v1177, %v1177
      %v1312 = vmul.f32 %v1178, %v1178
      %v1313 = vmul.f32 %v1179, %v1179
      %v1314 = vmul.f32 %v1180, %v1180
      %v1315 = vmul.f32 %v1181, %v1181
      %v1316 = vmul.f32 %v1182, %v1182
      %v1317 = vmul.f32 %v1183, %v1183
      %v1318 = vmul.f32 %v1184, %v1184
      %v1319 = vmul.f32 %v1185, %v1185
      %v1320 = vmul.f32 %v1186, %v1186
      %v1321 = vmul.f32 %v1187, %v1187
      %v1322 = vmul.f32 %v1188, %v1188
      %v1323 = vmul.f32 %v1189, %v1189
      %v1324 = vmul.f32 %v1190, %v1190
      %v1325 = vmul.f32 %v1191, %v1191
      %v1326 = vmul.f32 %v1192, %v1192
      %v1327 = vmul.f32 %v1193, %v1193
      %v1328 = vmul.f32 %v1194, %v1194
      %v1329 = vmul.f32 %v1195, %v1195
      %v1330 = vsel %vm1196, %v1298, 0.0
      %v1331 = vsel %vm1196, %v1299, 0.0
      %v1332 = vadd.f32 %v1330, %v1331
      %v1333 = vsel %vm1196, %v1300, 0.0
      %v1334 = vadd.f32 %v1332, %v1333
      %v1335 = vsel %vm1196, %v1301, 0.0
      %v1336 = vadd.f32 %v1334, %v1335
      %v1337 = vsel %vm1196, %v1302, 0.0
      %v1338 = vadd.f32 %v1336, %v1337
      %v1339 = vsel %vm1196, %v1303, 0.0
      %v1340 = vadd.f32 %v1338, %v1339
      %v1341 = vsel %vm1196, %v1304, 0.0
      %v1342 = vadd.f32 %v1340, %v1341
      %v1343 = vsel %vm1196, %v1305, 0.0
      %v1344 = vadd.f32 %v1342, %v1343
      %v1345 = vsel %vm1196, %v1306, 0.0
      %v1346 = vadd.f32 %v1344, %v1345
      %v1347 = vsel %vm1196, %v1307, 0.0
      %v1348 = vadd.f32 %v1346, %v1347
      %v1349 = vsel %vm1196, %v1308, 0.0
      %v1350 = vadd.f32 %v1348, %v1349
      %v1351 = vsel %vm1196, %v1309, 0.0
      %v1352 = vadd.f32 %v1350, %v1351
      %v1353 = vsel %vm1196, %v1310, 0.0
      %v1354 = vadd.f32 %v1352, %v1353
      %v1355 = vsel %vm1196, %v1311, 0.0
      %v1356 = vadd.f32 %v1354, %v1355
      %v1357 = vsel %vm1196, %v1312, 0.0
      %v1358 = vadd.f32 %v1356, %v1357
      %v1359 = vsel %vm1196, %v1313, 0.0
      %v1360 = vadd.f32 %v1358, %v1359
      %v1361 = vsel %vm1196, %v1314, 0.0
      %v1362 = vadd.f32 %v1360, %v1361
      %v1363 = vsel %vm1196, %v1315, 0.0
      %v1364 = vadd.f32 %v1362, %v1363
      %v1365 = vsel %vm1196, %v1316, 0.0
      %v1366 = vadd.f32 %v1364, %v1365
      %v1367 = vsel %vm1196, %v1317, 0.0
      %v1368 = vadd.f32 %v1366, %v1367
      %v1369 = vsel %vm1196, %v1318, 0.0
      %v1370 = vadd.f32 %v1368, %v1369
      %v1371 = vsel %vm1196, %v1319, 0.0
      %v1372 = vadd.f32 %v1370, %v1371
      %v1373 = vsel %vm1196, %v1320, 0.0
      %v1374 = vadd.f32 %v1372, %v1373
      %v1375 = vsel %vm1196, %v1321, 0.0
      %v1376 = vadd.f32 %v1374, %v1375
      %v1377 = vsel %vm1196, %v1322, 0.0
      %v1378 = vadd.f32 %v1376, %v1377
      %v1379 = vsel %vm1196, %v1323, 0.0
      %v1380 = vadd.f32 %v1378, %v1379
      %v1381 = vsel %vm1196, %v1324, 0.0
      %v1382 = vadd.f32 %v1380, %v1381
      %v1383 = vsel %vm1196, %v1325, 0.0
      %v1384 = vadd.f32 %v1382, %v1383
      %v1385 = vsel %vm1196, %v1326, 0.0
      %v1386 = vadd.f32 %v1384, %v1385
      %v1387 = vsel %vm1196, %v1327, 0.0
      %v1388 = vadd.f32 %v1386, %v1387
      %v1389 = vsel %vm1196, %v1328, 0.0
      %v1390 = vadd.f32 %v1388, %v1389
      %v1391 = vsel %vm1196, %v1329, 0.0
      %v1392 = vadd.f32 %v1390, %v1391
      %v1393 = vrot.slane %v1392, 4
      %v1394 = vadd.f32 %v1392, %v1393
      %v1395 = vrot.slane %v1394, 2
      %v1396 = vadd.f32 %v1394, %v1395
      %v1397 = vrot.slane %v1396, 1
      %v1398 = vadd.f32 %v1396, %v1397
      %v1399 = vsel %vm448, %v1297, %v1398
      %vm1400 = vcmask 58368
      %1401 = vst.msk [vmem:[%s235] sm:$0x3] %vm1400, %v1399
      %p1402 = scmp.lt.s32.totalorder %s17, 1
      %s1403 = scalar_select %p1402, %s17, 1
      %s1404 = smul.addr %s1403, 32
      %s1405 = smul.addr %s1404, 8
      %s1406 = scalar_lea.vmem %s4, %s1405
      %p1407 = scmp.lt.s32.totalorder %s17, 1
      %s1408 = scalar_select %p1407, %s17, 1
      %s1409 = smul.addr %s1408, 2
      %s1410 = scalar_lea.vmem %s5, %s1409
      // Predicated region
      $region37: #{_forward.9} parent=35 // pred_check
        %p1411 = pneg %p124
      $region38: #{_forward.9} parent=35 // pred_check_branch
        %1413 = sbr.rel (%p1411) target = $region40
      $region39: #{_forward.9} parent=35 // pred_region
        _
      $region40: #{_forward.9} parent=35 // pred_fallthru
        _
      // Predicated region
      $region41: #{_forward.9} parent=35 // pred_check
        %p1414 = pneg %p150
      $region42: #{_forward.9} parent=35 // pred_check_branch
        %1416 = sbr.rel (%p1414) target = $region44
      $region43: #{_forward.9} parent=35 // pred_region
        _
      $region44: #{_forward.9} parent=35 // pred_fallthru
        _
    $region36: #{_forward.9} parent=5 // pred_fallthru
      _
    %p1417 = scmp.le.s32.totalorder 2, %s12
    // Predicated region
    $region45: #{_forward.9} parent=5 // pred_check
      %p1418 = pneg %p1417
    $region46: #{_forward.9} parent=5 // pred_check_branch
      %1420 = sbr.rel (%p1418) target = $region48
    $region47: #{_forward.9} parent=5 // pred_region
      %s1421 = ssub.s32 %s12, 2
      // Predicated region
      $region49: #{_forward.9} parent=47 // pred_check
        %p1422 = pneg %p130
      $region50: #{_forward.9} parent=47 // pred_check_branch
        %1424 = sbr.rel (%p1422) target = $region52
      $region51: #{_forward.9} parent=47 // pred_region
        %p1425 = scmp.lt.s32.totalorder %s18, 1
        %s1426 = scalar_select %p1425, %s18, 1
        %s1427 = smul.addr %s1426, 32
        %s1428 = smul.addr %s1427, 8
        %s1429 = scalar_lea.vmem %s4, %s1428
      $region52: #{_forward.9} parent=47 // pred_fallthru
        _
      // Predicated region
      $region53: #{_forward.9} parent=47 // pred_check
        %p1430 = pneg %p156
      $region54: #{_forward.9} parent=47 // pred_check_branch
        %1432 = sbr.rel (%p1430) target = $region56
      $region55: #{_forward.9} parent=47 // pred_region
        %p1433 = scmp.lt.s32.totalorder %s18, 1
        %s1434 = scalar_select %p1433, %s18, 1
        %s1435 = smul.addr %s1434, 2
        %s1436 = scalar_lea.vmem %s5, %s1435
      $region56: #{_forward.9} parent=47 // pred_fallthru
        _
    $region48: #{_forward.9} parent=5 // pred_fallthru
      _
  $region6: #{_forward.9} parent=0 // loop_footer
    %s16 = sadd.s32 1, %s12
  $region7: #{_forward.9} parent=0 // loop_footer_branch
    %11 = sbr.rel target = $region3
  $region8: #{_forward.9} parent=0 // loop_exit
    _

// kernel: _forward.13
$region0: #{_forward.13}
  #allocation0 [shape = 'u32[]', space=smem, size = 0x4, offset = 0x4, fixed_abs, tag = 'smem constant byte address 0x4 - core index']
  #allocation1 [shape = 'u32[144,128]{1,0:T(1,128)}', space=vmem, size = 0x12000, scoped, tag = 'internal scratch']
  %s0 = inlined_call_operand.vmem [shape: f32[2,16,16,8], index: 0, kind: input, shape index: {}]
  %s1 = inlined_call_operand.vmem [shape: f32[2,16,16,8], index: 1, kind: input, shape index: {}]
  %s2 = inlined_call_operand.vmem [shape: f32[1,8], index: 2, kind: input, shape index: {}]
  %s3 = inlined_call_operand.vmem [shape: f32[1,8], index: 3, kind: input, shape index: {}]
  %s4 = inlined_call_operand.vmem [shape: f32[1,8], index: 4, kind: input, shape index: {}]
  %s5 = inlined_call_operand.vmem [shape: f32[1,8], index: 5, kind: input, shape index: {}]
  %s6 = inlined_call_operand.vmem [shape: f32[2,16,16,8], index: 6, kind: output, shape index: {}]
  %s7 = sld [smem:[#allocation0]]
  $region57: #{_forward.13} parent=0
    _
  %s9 = ssub.s32 1, %s7
  %s10 = scalar_select 0, %s9, %s7
  loop: start=0, step=1, limit=4
  $region2: #{_forward.13} parent=0 // loop_pre_header
    _
  $region3: #{_forward.13} parent=0 // loop_header
    %s12 = sphi 0, %s16
    %p13 = scmp.ge.s32.totalorder %s12, 4
    %s22 = sphi 0, %s24
    %s25 = sphi 0, %s22
    %s26 = sphi 0, %s25
    %s42 = sphi 0, %s26
    %s48 = sphi 0, %s50
    %s51 = sphi 0, %s48
    %s52 = sphi 0, %s51
    %s68 = sphi 0, %s52
    %s72 = sphi 0, %s72
    %s74 = sphi 0, %s72
    %s75 = sphi 0, %s74
    %s89 = sphi 0, %s75
    %s93 = sphi 0, %s93
    %s95 = sphi 0, %s93
    %s96 = sphi 0, %s95
    %s110 = sphi 0, %s96
    %s114 = sphi 0, %s114
    %s116 = sphi 0, %s114
    %s117 = sphi 0, %s116
    %s131 = sphi 0, %s117
    %s135 = sphi 0, %s135
    %s137 = sphi 0, %s135
    %s138 = sphi 0, %s137
    %s152 = sphi 0, %s138
    %s158 = sphi 0, %s160
    %s161 = sphi 0, %s158
    %s162 = sphi 0, %s161
    %s178 = sphi 0, %s162
  $region4: #{_forward.13} parent=0 // loop_header_branch
    %15 = sbr.rel (%p13) target = $region8
  $region5: #{_forward.13} parent=0 // loop_body
    %s17 = ssub.s32 %s12, 1
    %s18 = ssub.s32 %s12, 2
    %s19 = sadd.s32 %s12, 1
    %s20 = ssub.s32 %s12, %s19
    %p21 = scmp.eq.s32.totalorder %s20, 0
    %s23 = sadd.s32 %s22, 1
    %s24 = scalar_select %p21, %s22, %s23
    %p27 = pneg %p21
    %p28 = scmp.eq.s32.totalorder %s12, 1
    %p29 = por %p27, %p28
    %p30 = scmp.ne.s32.totalorder %s22, %s25
    %p31 = scmp.eq.s32.totalorder %s12, 0
    %p32 = por %p30, %p31
    %p33 = scmp.ne.s32.totalorder %s22, %s25
    %p34 = scmp.eq.s32.totalorder %s17, 1
    %p35 = por %p33, %p34
    %p36 = scmp.ne.s32.totalorder %s25, %s26
    %p37 = scmp.eq.s32.totalorder %s17, 0
    %p38 = por %p36, %p37
    %p39 = scmp.ne.s32.totalorder %s25, %s26
    %p40 = scmp.eq.s32.totalorder %s18, 1
    %p41 = por %p39, %p40
    %p43 = scmp.ne.s32.totalorder %s26, %s42
    %p44 = scmp.eq.s32.totalorder %s18, 0
    %p45 = por %p43, %p44
    %s46 = ssub.s32 %s12, %s19
    %p47 = scmp.eq.s32.totalorder %s46, 0
    %s49 = sadd.s32 %s48, 1
    %s50 = scalar_select %p47, %s48, %s49
    %p53 = pneg %p47
    %p54 = scmp.eq.s32.totalorder %s12, 1
    %p55 = por %p53, %p54
    %p56 = scmp.ne.s32.totalorder %s48, %s51
    %p57 = scmp.eq.s32.totalorder %s12, 0
    %p58 = por %p56, %p57
    %p59 = scmp.ne.s32.totalorder %s48, %s51
    %p60 = scmp.eq.s32.totalorder %s17, 1
    %p61 = por %p59, %p60
    %p62 = scmp.ne.s32.totalorder %s51, %s52
    %p63 = scmp.eq.s32.totalorder %s17, 0
    %p64 = por %p62, %p63
    %p65 = scmp.ne.s32.totalorder %s51, %s52
    %p66 = scmp.eq.s32.totalorder %s18, 1
    %p67 = por %p65, %p66
    %p69 = scmp.ne.s32.totalorder %s52, %s68
    %p70 = scmp.eq.s32.totalorder %s18, 0
    %p71 = por %p69, %p70
    %s73 = sadd.s32 %s72, 1
    %p76 = scmp.eq.s32.totalorder %s12, 1
    %p77 = scmp.ne.s32.totalorder %s72, %s74
    %p78 = scmp.eq.s32.totalorder %s12, 0
    %p79 = por %p77, %p78
    %p80 = scmp.ne.s32.totalorder %s72, %s74
    %p81 = scmp.eq.s32.totalorder %s17, 1
    %p82 = por %p80, %p81
    %p83 = scmp.ne.s32.totalorder %s74, %s75
    %p84 = scmp.eq.s32.totalorder %s17, 0
    %p85 = por %p83, %p84
    %p86 = scmp.ne.s32.totalorder %s74, %s75
    %p87 = scmp.eq.s32.totalorder %s18, 1
    %p88 = por %p86, %p87
    %p90 = scmp.ne.s32.totalorder %s75, %s89
    %p91 = scmp.eq.s32.totalorder %s18, 0
    %p92 = por %p90, %p91
    %s94 = sadd.s32 %s93, 1
    %p97 = scmp.eq.s32.totalorder %s12, 1
    %p98 = scmp.ne.s32.totalorder %s93, %s95
    %p99 = scmp.eq.s32.totalorder %s12, 0
    %p100 = por %p98, %p99
    %p101 = scmp.ne.s32.totalorder %s93, %s95
    %p102 = scmp.eq.s32.totalorder %s17, 1
    %p103 = por %p101, %p102
    %p104 = scmp.ne.s32.totalorder %s95, %s96
    %p105 = scmp.eq.s32.totalorder %s17, 0
    %p106 = por %p104, %p105
    %p107 = scmp.ne.s32.totalorder %s95, %s96
    %p108 = scmp.eq.s32.totalorder %s18, 1
    %p109 = por %p107, %p108
    %p111 = scmp.ne.s32.totalorder %s96, %s110
    %p112 = scmp.eq.s32.totalorder %s18, 0
    %p113 = por %p111, %p112
    %s115 = sadd.s32 %s114, 1
    %p118 = scmp.eq.s32.totalorder %s12, 1
    %p119 = scmp.ne.s32.totalorder %s114, %s116
    %p120 = scmp.eq.s32.totalorder %s12, 0
    %p121 = por %p119, %p120
    %p122 = scmp.ne.s32.totalorder %s114, %s116
    %p123 = scmp.eq.s32.totalorder %s17, 1
    %p124 = por %p122, %p123
    %p125 = scmp.ne.s32.totalorder %s116, %s117
    %p126 = scmp.eq.s32.totalorder %s17, 0
    %p127 = por %p125, %p126
    %p128 = scmp.ne.s32.totalorder %s116, %s117
    %p129 = scmp.eq.s32.totalorder %s18, 1
    %p130 = por %p128, %p129
    %p132 = scmp.ne.s32.totalorder %s117, %s131
    %p133 = scmp.eq.s32.totalorder %s18, 0
    %p134 = por %p132, %p133
    %s136 = sadd.s32 %s135, 1
    %p139 = scmp.eq.s32.totalorder %s12, 1
    %p140 = scmp.ne.s32.totalorder %s135, %s137
    %p141 = scmp.eq.s32.totalorder %s12, 0
    %p142 = por %p140, %p141
    %p143 = scmp.ne.s32.totalorder %s135, %s137
    %p144 = scmp.eq.s32.totalorder %s17, 1
    %p145 = por %p143, %p144
    %p146 = scmp.ne.s32.totalorder %s137, %s138
    %p147 = scmp.eq.s32.totalorder %s17, 0
    %p148 = por %p146, %p147
    %p149 = scmp.ne.s32.totalorder %s137, %s138
    %p150 = scmp.eq.s32.totalorder %s18, 1
    %p151 = por %p149, %p150
    %p153 = scmp.ne.s32.totalorder %s138, %s152
    %p154 = scmp.eq.s32.totalorder %s18, 0
    %p155 = por %p153, %p154
    %s156 = ssub.s32 %s12, %s19
    %p157 = scmp.eq.s32.totalorder %s156, 0
    %s159 = sadd.s32 %s158, 1
    %s160 = scalar_select %p157, %s158, %s159
    %p163 = pneg %p157
    %p164 = scmp.eq.s32.totalorder %s12, 1
    %p165 = por %p163, %p164
    %p166 = scmp.ne.s32.totalorder %s158, %s161
    %p167 = scmp.eq.s32.totalorder %s12, 0
    %p168 = por %p166, %p167
    %p169 = scmp.ne.s32.totalorder %s158, %s161
    %p170 = scmp.eq.s32.totalorder %s17, 1
    %p171 = por %p169, %p170
    %p172 = scmp.ne.s32.totalorder %s161, %s162
    %p173 = scmp.eq.s32.totalorder %s17, 0
    %p174 = por %p172, %p173
    %p175 = scmp.ne.s32.totalorder %s161, %s162
    %p176 = scmp.eq.s32.totalorder %s18, 1
    %p177 = por %p175, %p176
    %p179 = scmp.ne.s32.totalorder %s162, %s178
    %p180 = scmp.eq.s32.totalorder %s18, 0
    %p181 = por %p179, %p180
    %p182 = scmp.le.s32.totalorder 1, %s12
    %p183 = scmp.lt.s32.totalorder %s12, 3
    %p184 = pnand %p182, %p183
    %p185 = pneg %p184
    // Predicated region
    $region9: #{_forward.13} parent=5 // pred_check
      _
    $region10: #{_forward.13} parent=5 // pred_check_branch
      %187 = sbr.rel (%p184) target = $region12
    $region11: #{_forward.13} parent=5 // pred_region
      %s188 = ssub.s32 %s12, 1
      // Predicated region
      $region13: #{_forward.13} parent=11 // pred_check
        %p189 = pneg %p85
      $region14: #{_forward.13} parent=11 // pred_check_branch
        %191 = sbr.rel (%p189) target = $region16
      $region15: #{_forward.13} parent=11 // pred_region
        _
      $region16: #{_forward.13} parent=11 // pred_fallthru
        _
      // Predicated region
      $region17: #{_forward.13} parent=11 // pred_check
        %p192 = pneg %p106
      $region18: #{_forward.13} parent=11 // pred_check_branch
        %194 = sbr.rel (%p192) target = $region20
      $region19: #{_forward.13} parent=11 // pred_region
        _
      $region20: #{_forward.13} parent=11 // pred_fallthru
        _
      // Predicated region
      $region21: #{_forward.13} parent=11 // pred_check
        %p195 = pneg %p127
      $region22: #{_forward.13} parent=11 // pred_check_branch
        %197 = sbr.rel (%p195) target = $region24
      $region23: #{_forward.13} parent=11 // pred_region
        _
      $region24: #{_forward.13} parent=11 // pred_fallthru
        _
      // Predicated region
      $region25: #{_forward.13} parent=11 // pred_check
        %p198 = pneg %p148
      $region26: #{_forward.13} parent=11 // pred_check_branch
        %200 = sbr.rel (%p198) target = $region28
      $region27: #{_forward.13} parent=11 // pred_region
        _
      $region28: #{_forward.13} parent=11 // pred_fallthru
        _
    $region12: #{_forward.13} parent=5 // pred_fallthru
      _
    %p201 = scmp.lt.s32.totalorder %s12, 2
    // Predicated region
    $region29: #{_forward.13} parent=5 // pred_check
      %p202 = pneg %p201
    $region30: #{_forward.13} parent=5 // pred_check_branch
      %204 = sbr.rel (%p202) target = $region32
    $region31: #{_forward.13} parent=5 // pred_region
      // Predicated region
      $region33: #{_forward.13} parent=31 // pred_check
        %p205 = pneg %p32
      $region34: #{_forward.13} parent=31 // pred_check_branch
        %207 = sbr.rel (%p205) target = $region36
      $region35: #{_forward.13} parent=31 // pred_region
        %p208 = scmp.lt.s32.totalorder %s12, 1
        %s209 = scalar_select %p208, %s12, 1
        %s210 = smul.addr %s209, 32
        %s211 = smul.addr %s210, 8
        %s212 = scalar_lea.vmem %s0, %s211
      $region36: #{_forward.13} parent=31 // pred_fallthru
        _
      // Predicated region
      $region37: #{_forward.13} parent=31 // pred_check
        %p213 = pneg %p58
      $region38: #{_forward.13} parent=31 // pred_check_branch
        %215 = sbr.rel (%p213) target = $region40
      $region39: #{_forward.13} parent=31 // pred_region
        %p216 = scmp.lt.s32.totalorder %s12, 1
        %s217 = scalar_select %p216, %s12, 1
        %s218 = smul.addr %s217, 32
        %s219 = smul.addr %s218, 8
        %s220 = scalar_lea.vmem %s1, %s219
      $region40: #{_forward.13} parent=31 // pred_fallthru
        _
    $region32: #{_forward.13} parent=5 // pred_fallthru
      _
    %p221 = scmp.le.s32.totalorder 1, %s12
    %p222 = scmp.lt.s32.totalorder %s12, 3
    %p223 = pnand %p221, %p222
    %p224 = pneg %p223
    // Predicated region
    $region41: #{_forward.13} parent=5 // pred_check
      _
    $region42: #{_forward.13} parent=5 // pred_check_branch
      %226 = sbr.rel (%p223) target = $region44
    $region43: #{_forward.13} parent=5 // pred_region
      %s227 = ssub.s32 %s12, 1
      %p228 = scmp.lt.s32.totalorder %s17, 1
      %s229 = scalar_select %p228, %s17, 1
      %s230 = smul.addr %s229, 32
      %s231 = smul.addr %s230, 8
      %s232 = scalar_lea.vmem %s0, %s231
      %p233 = pneg %p38
      %p234 = pneg %p35
      %p235 = scmp.lt.s32.totalorder %s17, 1
      %s236 = scalar_select %p235, %s17, 1
      %s237 = smul.addr %s236, 32
      %s238 = smul.addr %s237, 8
      %s239 = scalar_lea.vmem %s1, %s238
      %p240 = pneg %p64
      %p241 = pneg %p61
      %p242 = pneg %p85
      %p243 = pneg %p82
      %p244 = pneg %p106
      %p245 = pneg %p103
      %p246 = pneg %p127
      %p247 = pneg %p124
      %p248 = pneg %p148
      %p249 = pneg %p145
      %p250 = pneg %p174
      %p251 = pneg %p171
      %p252 = scmp.lt.s32.totalorder %s17, 1
      %s253 = scalar_select %p252, %s17, 1
      %s254 = smul.addr %s253, 32
      %s255 = smul.addr %s254, 8
      %s256 = scalar_lea.vmem %s6, %s255
      %p257 = scmp.lt.s32.totalorder %s17, 1
      %s258 = scalar_select %p257, %s17, 1
      %s259 = smul.addr %s258, 32
      %s260 = smul.addr %s259, 8
      %s261 = scalar_lea.vmem %s0, %s260
      %p262 = scmp.lt.s32.totalorder %s17, 1
      %s263 = scalar_select %p262, %s17, 1
      %s264 = smul.addr %s263, 32
      %s265 = smul.addr %s264, 8
      %s266 = scalar_lea.vmem %s1, %s265
      %p267 = scmp.lt.s32.totalorder %s17, 1
      %s268 = scalar_select %p267, %s17, 1
      %s269 = smul.addr %s268, 32
      %s270 = smul.addr %s269, 8
      %s271 = scalar_lea.vmem %s6, %s270
      %v272 = vld [vmem:[%s261] sm:$0xff]
      %v273 = vld [vmem:[%s261 + $0x8] sm:$0xff]
      %v274 = vld [vmem:[%s261 + $0x10] sm:$0xff]
      %v275 = vld [vmem:[%s261 + $0x18] sm:$0xff]
      %v276 = vld [vmem:[%s261 + $0x20] sm:$0xff]
      %v277 = vld [vmem:[%s261 + $0x28] sm:$0xff]
      %v278 = vld [vmem:[%s261 + $0x30] sm:$0xff]
      %v279 = vld [vmem:[%s261 + $0x38] sm:$0xff]
      %v280 = vld [vmem:[%s261 + $0x40] sm:$0xff]
      %v281 = vld [vmem:[%s261 + $0x48] sm:$0xff]
      %v282 = vld [vmem:[%s261 + $0x50] sm:$0xff]
      %v283 = vld [vmem:[%s261 + $0x58] sm:$0xff]
      %v284 = vld [vmem:[%s261 + $0x60] sm:$0xff]
      %v285 = vld [vmem:[%s261 + $0x68] sm:$0xff]
      %v286 = vld [vmem:[%s261 + $0x70] sm:$0xff]
      %v287 = vld [vmem:[%s261 + $0x78] sm:$0xff]
      %v288 = vld [vmem:[%s261 + $0x80] sm:$0xff]
      %v289 = vld [vmem:[%s261 + $0x88] sm:$0xff]
      %v290 = vld [vmem:[%s261 + $0x90] sm:$0xff]
      %v291 = vld [vmem:[%s261 + $0x98] sm:$0xff]
      %v292 = vld [vmem:[%s261 + $0xa0] sm:$0xff]
      %v293 = vld [vmem:[%s261 + $0xa8] sm:$0xff]
      %v294 = vld [vmem:[%s261 + $0xb0] sm:$0xff]
      %v295 = vld [vmem:[%s261 + $0xb8] sm:$0xff]
      %v296 = vld [vmem:[%s261 + $0xc0] sm:$0xff]
      %v297 = vld [vmem:[%s261 + $0xc8] sm:$0xff]
      %v298 = vld [vmem:[%s261 + $0xd0] sm:$0xff]
      %v299 = vld [vmem:[%s261 + $0xd8] sm:$0xff]
      %v300 = vld [vmem:[%s261 + $0xe0] sm:$0xff]
      %v301 = vld [vmem:[%s261 + $0xe8] sm:$0xff]
      %v302 = vld [vmem:[%s261 + $0xf0] sm:$0xff]
      %v303 = vld [vmem:[%s261 + $0xf8] sm:$0xff]
      %v304 = vld [vmem:[%s2] sm:$0x1]
      %v306 = vlaneseq
      %v307 = vshrl.u32 %v306, 7
      %v308 = vsub.s32 0, %v307
      %v309 = vrot.slane %v304, %v308
      %v311 = vmul.f32 %v272, %v309
      %v312 = vmul.f32 %v273, %v309
      %v313 = vmul.f32 %v274, %v309
      %v314 = vmul.f32 %v275, %v309
      %v315 = vmul.f32 %v276, %v309
      %v316 = vmul.f32 %v277, %v309
      %v317 = vmul.f32 %v278, %v309
      %v318 = vmul.f32 %v279, %v309
      %v319 = vmul.f32 %v280, %v309
      %v320 = vmul.f32 %v281, %v309
      %v321 = vmul.f32 %v282, %v309
      %v322 = vmul.f32 %v283, %v309
      %v323 = vmul.f32 %v284, %v309
      %v324 = vmul.f32 %v285, %v309
      %v325 = vmul.f32 %v286, %v309
      %v326 = vmul.f32 %v287, %v309
      %v327 = vmul.f32 %v288, %v309
      %v328 = vmul.f32 %v289, %v309
      %v329 = vmul.f32 %v290, %v309
      %v330 = vmul.f32 %v291, %v309
      %v331 = vmul.f32 %v292, %v309
      %v332 = vmul.f32 %v293, %v309
      %v333 = vmul.f32 %v294, %v309
      %v334 = vmul.f32 %v295, %v309
      %v335 = vmul.f32 %v296, %v309
      %v336 = vmul.f32 %v297, %v309
      %v337 = vmul.f32 %v298, %v309
      %v338 = vmul.f32 %v299, %v309
      %v339 = vmul.f32 %v300, %v309
      %v340 = vmul.f32 %v301, %v309
      %v341 = vmul.f32 %v302, %v309
      %v342 = vmul.f32 %v303, %v309
      %v343 = vld [vmem:[%s3] sm:$0x1]
      %v345 = vlaneseq
      %v346 = vshrl.u32 %v345, 7
      %v347 = vsub.s32 0, %v346
      %v348 = vrot.slane %v343, %v347
      %v350 = vadd.f32 %v311, %v348
      %v351 = vadd.f32 %v312, %v348
      %v352 = vadd.f32 %v313, %v348
      %v353 = vadd.f32 %v314, %v348
      %v354 = vadd.f32 %v315, %v348
      %v355 = vadd.f32 %v316, %v348
      %v356 = vadd.f32 %v317, %v348
      %v357 = vadd.f32 %v318, %v348
      %v358 = vadd.f32 %v319, %v348
      %v359 = vadd.f32 %v320, %v348
      %v360 = vadd.f32 %v321, %v348
      %v361 = vadd.f32 %v322, %v348
      %v362 = vadd.f32 %v323, %v348
      %v363 = vadd.f32 %v324, %v348
      %v364 = vadd.f32 %v325, %v348
      %v365 = vadd.f32 %v326, %v348
      %v366 = vadd.f32 %v327, %v348
      %v367 = vadd.f32 %v328, %v348
      %v368 = vadd.f32 %v329, %v348
      %v369 = vadd.f32 %v330, %v348
      %v370 = vadd.f32 %v331, %v348
      %v371 = vadd.f32 %v332, %v348
      %v372 = vadd.f32 %v333, %v348
      %v373 = vadd.f32 %v334, %v348
      %v374 = vadd.f32 %v335, %v348
      %v375 = vadd.f32 %v336, %v348
      %v376 = vadd.f32 %v337, %v348
      %v377 = vadd.f32 %v338, %v348
      %v378 = vadd.f32 %v339, %v348
      %v379 = vadd.f32 %v340, %v348
      %v380 = vadd.f32 %v341, %v348
      %v381 = vadd.f32 %v342, %v348
      %v382 = vld [vmem:[%s266] sm:$0xff]
      %v383 = vld [vmem:[%s266 + $0x8] sm:$0xff]
      %v384 = vld [vmem:[%s266 + $0x10] sm:$0xff]
      %v385 = vld [vmem:[%s266 + $0x18] sm:$0xff]
      %v386 = vld [vmem:[%s266 + $0x20] sm:$0xff]
      %v387 = vld [vmem:[%s266 + $0x28] sm:$0xff]
      %v388 = vld [vmem:[%s266 + $0x30] sm:$0xff]
      %v389 = vld [vmem:[%s266 + $0x38] sm:$0xff]
      %v390 = vld [vmem:[%s266 + $0x40] sm:$0xff]
      %v391 = vld [vmem:[%s266 + $0x48] sm:$0xff]
      %v392 = vld [vmem:[%s266 + $0x50] sm:$0xff]
      %v393 = vld [vmem:[%s266 + $0x58] sm:$0xff]
      %v394 = vld [vmem:[%s266 + $0x60] sm:$0xff]
      %v395 = vld [vmem:[%s266 + $0x68] sm:$0xff]
      %v396 = vld [vmem:[%s266 + $0x70] sm:$0xff]
      %v397 = vld [vmem:[%s266 + $0x78] sm:$0xff]
      %v398 = vld [vmem:[%s266 + $0x80] sm:$0xff]
      %v399 = vld [vmem:[%s266 + $0x88] sm:$0xff]
      %v400 = vld [vmem:[%s266 + $0x90] sm:$0xff]
      %v401 = vld [vmem:[%s266 + $0x98] sm:$0xff]
      %v402 = vld [vmem:[%s266 + $0xa0] sm:$0xff]
      %v403 = vld [vmem:[%s266 + $0xa8] sm:$0xff]
      %v404 = vld [vmem:[%s266 + $0xb0] sm:$0xff]
      %v405 = vld [vmem:[%s266 + $0xb8] sm:$0xff]
      %v406 = vld [vmem:[%s266 + $0xc0] sm:$0xff]
      %v407 = vld [vmem:[%s266 + $0xc8] sm:$0xff]
      %v408 = vld [vmem:[%s266 + $0xd0] sm:$0xff]
      %v409 = vld [vmem:[%s266 + $0xd8] sm:$0xff]
      %v410 = vld [vmem:[%s266 + $0xe0] sm:$0xff]
      %v411 = vld [vmem:[%s266 + $0xe8] sm:$0xff]
      %v412 = vld [vmem:[%s266 + $0xf0] sm:$0xff]
      %v413 = vld [vmem:[%s266 + $0xf8] sm:$0xff]
      %v414 = vld [vmem:[%s4] sm:$0x1]
      %v416 = vlaneseq
      %v417 = vshrl.u32 %v416, 7
      %v418 = vsub.s32 0, %v417
      %v419 = vrot.slane %v414, %v418
      %v421 = vmul.f32 %v382, %v419
      %v422 = vmul.f32 %v383, %v419
      %v423 = vmul.f32 %v384, %v419
      %v424 = vmul.f32 %v385, %v419
      %v425 = vmul.f32 %v386, %v419
      %v426 = vmul.f32 %v387, %v419
      %v427 = vmul.f32 %v388, %v419
      %v428 = vmul.f32 %v389, %v419
      %v429 = vmul.f32 %v390, %v419
      %v430 = vmul.f32 %v391, %v419
      %v431 = vmul.f32 %v392, %v419
      %v432 = vmul.f32 %v393, %v419
      %v433 = vmul.f32 %v394, %v419
      %v434 = vmul.f32 %v395, %v419
      %v435 = vmul.f32 %v396, %v419
      %v436 = vmul.f32 %v397, %v419
      %v437 = vmul.f32 %v398, %v419
      %v438 = vmul.f32 %v399, %v419
      %v439 = vmul.f32 %v400, %v419
      %v440 = vmul.f32 %v401, %v419
      %v441 = vmul.f32 %v402, %v419
      %v442 = vmul.f32 %v403, %v419
      %v443 = vmul.f32 %v404, %v419
      %v444 = vmul.f32 %v405, %v419
      %v445 = vmul.f32 %v406, %v419
      %v446 = vmul.f32 %v407, %v419
      %v447 = vmul.f32 %v408, %v419
      %v448 = vmul.f32 %v409, %v419
      %v449 = vmul.f32 %v410, %v419
      %v450 = vmul.f32 %v411, %v419
      %v451 = vmul.f32 %v412, %v419
      %v452 = vmul.f32 %v413, %v419
      %v453 = vadd.f32 %v350, %v421
      %v454 = vadd.f32 %v351, %v422
      %v455 = vadd.f32 %v352, %v423
      %v456 = vadd.f32 %v353, %v424
      %v457 = vadd.f32 %v354, %v425
      %v458 = vadd.f32 %v355, %v426
      %v459 = vadd.f32 %v356, %v427
      %v460 = vadd.f32 %v357, %v428
      %v461 = vadd.f32 %v358, %v429
      %v462 = vadd.f32 %v359, %v430
      %v463 = vadd.f32 %v360, %v431
      %v464 = vadd.f32 %v361, %v432
      %v465 = vadd.f32 %v362, %v433
      %v466 = vadd.f32 %v363, %v434
      %v467 = vadd.f32 %v364, %v435
      %v468 = vadd.f32 %v365, %v436
      %v469 = vadd.f32 %v366, %v437
      %v470 = vadd.f32 %v367, %v438
      %v471 = vadd.f32 %v368, %v439
      %v472 = vadd.f32 %v369, %v440
      %v473 = vadd.f32 %v370, %v441
      %v474 = vadd.f32 %v371, %v442
      %v475 = vadd.f32 %v372, %v443
      %v476 = vadd.f32 %v373, %v444
      %v477 = vadd.f32 %v374, %v445
      %v478 = vadd.f32 %v375, %v446
      %v479 = vadd.f32 %v376, %v447
      %v480 = vadd.f32 %v377, %v448
      %v481 = vadd.f32 %v378, %v449
      %v482 = vadd.f32 %v379, %v450
      %v483 = vadd.f32 %v380, %v451
      %v484 = vadd.f32 %v381, %v452
      %v485 = vld [vmem:[%s5] sm:$0x1]
      %v487 = vlaneseq
      %v488 = vshrl.u32 %v487, 7
      %v489 = vsub.s32 0, %v488
      %v490 = vrot.slane %v485, %v489
      %v492 = vadd.f32 %v453, %v490
      %v493 = vadd.f32 %v454, %v490
      %v494 = vadd.f32 %v455, %v490
      %v495 = vadd.f32 %v456, %v490
      %v496 = vadd.f32 %v457, %v490
      %v497 = vadd.f32 %v458, %v490
      %v498 = vadd.f32 %v459, %v490
      %v499 = vadd.f32 %v460, %v490
      %v500 = vadd.f32 %v461, %v490
      %v501 = vadd.f32 %v462, %v490
      %v502 = vadd.f32 %v463, %v490
      %v503 = vadd.f32 %v464, %v490
      %v504 = vadd.f32 %v465, %v490
      %v505 = vadd.f32 %v466, %v490
      %v506 = vadd.f32 %v467, %v490
      %v507 = vadd.f32 %v468, %v490
      %v508 = vadd.f32 %v469, %v490
      %v509 = vadd.f32 %v470, %v490
      %v510 = vadd.f32 %v471, %v490
      %v511 = vadd.f32 %v472, %v490
      %v512 = vadd.f32 %v473, %v490
      %v513 = vadd.f32 %v474, %v490
      %v514 = vadd.f32 %v475, %v490
      %v515 = vadd.f32 %v476, %v490
      %v516 = vadd.f32 %v477, %v490
      %v517 = vadd.f32 %v478, %v490
      %v518 = vadd.f32 %v479, %v490
      %v519 = vadd.f32 %v480, %v490
      %v520 = vadd.f32 %v481, %v490
      %v521 = vadd.f32 %v482, %v490
      %v522 = vadd.f32 %v483, %v490
      %v523 = vadd.f32 %v484, %v490
      %vm524 = vcmask 64512
      %525 = vst.msk [vmem:[%s271] sm:$0xff] %vm524, %v492
      %526 = vst.msk [vmem:[%s271 + $0x8] sm:$0xff] %vm524, %v493
      %527 = vst.msk [vmem:[%s271 + $0x10] sm:$0xff] %vm524, %v494
      %528 = vst.msk [vmem:[%s271 + $0x18] sm:$0xff] %vm524, %v495
      %529 = vst.msk [vmem:[%s271 + $0x20] sm:$0xff] %vm524, %v496
      %530 = vst.msk [vmem:[%s271 + $0x28] sm:$0xff] %vm524, %v497
      %531 = vst.msk [vmem:[%s271 + $0x30] sm:$0xff] %vm524, %v498
      %532 = vst.msk [vmem:[%s271 + $0x38] sm:$0xff] %vm524, %v499
      %533 = vst.msk [vmem:[%s271 + $0x40] sm:$0xff] %vm524, %v500
      %534 = vst.msk [vmem:[%s271 + $0x48] sm:$0xff] %vm524, %v501
      %535 = vst.msk [vmem:[%s271 + $0x50] sm:$0xff] %vm524, %v502
      %536 = vst.msk [vmem:[%s271 + $0x58] sm:$0xff] %vm524, %v503
      %537 = vst.msk [vmem:[%s271 + $0x60] sm:$0xff] %vm524, %v504
      %538 = vst.msk [vmem:[%s271 + $0x68] sm:$0xff] %vm524, %v505
      %539 = vst.msk [vmem:[%s271 + $0x70] sm:$0xff] %vm524, %v506
      %540 = vst.msk [vmem:[%s271 + $0x78] sm:$0xff] %vm524, %v507
      %541 = vst.msk [vmem:[%s271 + $0x80] sm:$0xff] %vm524, %v508
      %542 = vst.msk [vmem:[%s271 + $0x88] sm:$0xff] %vm524, %v509
      %543 = vst.msk [vmem:[%s271 + $0x90] sm:$0xff] %vm524, %v510
      %544 = vst.msk [vmem:[%s271 + $0x98] sm:$0xff] %vm524, %v511
      %545 = vst.msk [vmem:[%s271 + $0xa0] sm:$0xff] %vm524, %v512
      %546 = vst.msk [vmem:[%s271 + $0xa8] sm:$0xff] %vm524, %v513
      %547 = vst.msk [vmem:[%s271 + $0xb0] sm:$0xff] %vm524, %v514
      %548 = vst.msk [vmem:[%s271 + $0xb8] sm:$0xff] %vm524, %v515
      %549 = vst.msk [vmem:[%s271 + $0xc0] sm:$0xff] %vm524, %v516
      %550 = vst.msk [vmem:[%s271 + $0xc8] sm:$0xff] %vm524, %v517
      %551 = vst.msk [vmem:[%s271 + $0xd0] sm:$0xff] %vm524, %v518
      %552 = vst.msk [vmem:[%s271 + $0xd8] sm:$0xff] %vm524, %v519
      %553 = vst.msk [vmem:[%s271 + $0xe0] sm:$0xff] %vm524, %v520
      %554 = vst.msk [vmem:[%s271 + $0xe8] sm:$0xff] %vm524, %v521
      %555 = vst.msk [vmem:[%s271 + $0xf0] sm:$0xff] %vm524, %v522
      %556 = vst.msk [vmem:[%s271 + $0xf8] sm:$0xff] %vm524, %v523
      %p557 = scmp.lt.s32.totalorder %s17, 1
      %s558 = scalar_select %p557, %s17, 1
      %s559 = smul.addr %s558, 32
      %s560 = smul.addr %s559, 8
      %s561 = scalar_lea.vmem %s6, %s560
      // Predicated region
      $region45: #{_forward.13} parent=43 // pred_check
        %p562 = pneg %p171
      $region46: #{_forward.13} parent=43 // pred_check_branch
        %564 = sbr.rel (%p562) target = $region48
      $region47: #{_forward.13} parent=43 // pred_region
        _
      $region48: #{_forward.13} parent=43 // pred_fallthru
        _
    $region44: #{_forward.13} parent=5 // pred_fallthru
      _
    %p565 = scmp.le.s32.totalorder 2, %s12
    // Predicated region
    $region49: #{_forward.13} parent=5 // pred_check
      %p566 = pneg %p565
    $region50: #{_forward.13} parent=5 // pred_check_branch
      %568 = sbr.rel (%p566) target = $region52
    $region51: #{_forward.13} parent=5 // pred_region
      %s569 = ssub.s32 %s12, 2
      // Predicated region
      $region53: #{_forward.13} parent=51 // pred_check
        %p570 = pneg %p177
      $region54: #{_forward.13} parent=51 // pred_check_branch
        %572 = sbr.rel (%p570) target = $region56
      $region55: #{_forward.13} parent=51 // pred_region
        %p573 = scmp.lt.s32.totalorder %s18, 1
        %s574 = scalar_select %p573, %s18, 1
        %s575 = smul.addr %s574, 32
        %s576 = smul.addr %s575, 8
        %s577 = scalar_lea.vmem %s6, %s576
      $region56: #{_forward.13} parent=51 // pred_fallthru
        _
    $region52: #{_forward.13} parent=5 // pred_fallthru
      _
  $region6: #{_forward.13} parent=0 // loop_footer
    %s16 = sadd.s32 1, %s12
  $region7: #{_forward.13} parent=0 // loop_footer_branch
    %11 = sbr.rel target = $region3
  $region8: #{_forward.13} parent=0 // loop_exit
    _

</llo_original>
